<compile_context>
chip_gen: v5e
topology: v5e:2x2
jax: 0.10.0
libtpu: 0.0.40
codegen_flags: <defaults>
</compile_context>

<pallas_src>
import functools

import jax
import jax.numpy as jnp
from jax.experimental import pallas as pl
from jax.experimental.pallas import tpu as pltpu


def _fused_kernel(scal_ref, gpad_ref, spad_ref, cie_ref, ferr_ref,
                  alpha_ref, beta_ref, img_ref, loss_ref, *, radius, eps):
    r = radius
    C, Hp, Wp = gpad_ref.shape
    H = Hp - 2 * r
    W = Wp - 2 * r

    ed_scale = scal_ref[0]       # 4 ** (4 - curr_layer)
    smooth_w = scal_ref[1]
    m = scal_ref[2]              # momentum

    g = gpad_ref[...]
    s = spad_ref[...]

    # ---------------- separable 5x5 box sums (zero-padded inputs) ----------
    def box_sum(a):                      # a: (C, Hp, Wp) zero-padded
        av = a[:, 0:H, :]                # vertical (sublane) pass -> (C, H, Wp)
        for dy in range(1, 2 * r + 1):
            av = av + a[:, dy:dy + H, :]
        ah = av[:, :, 0:W]               # horizontal (lane) pass -> (C, H, W)
        for dx in range(1, 2 * r + 1):
            ah = ah + av[:, :, dx:dx + W]
        return ah

    sum_g = box_sum(g)
    sum_gsq = box_sum(g * g)
    sum_s = box_sum(s)
    sum_ssq = box_sum(s * s)

    # Edge-truncation valid-tap count is separable: cnt = cv(y) * ch(x).
    yy = jax.lax.broadcasted_iota(jnp.int32, (1, H, W), 1)
    xx = jax.lax.broadcasted_iota(jnp.int32, (1, H, W), 2)
    cv = jnp.minimum(yy, r) + jnp.minimum(H - 1 - yy, r) + 1
    ch = jnp.minimum(xx, r) + jnp.minimum(W - 1 - xx, r) + 1
    cnt = (cv * ch).astype(jnp.float32)
    inv_cnt = pl.reciprocal(cnt, approx=True)
    inv_cnt_m1 = pl.reciprocal(cnt - 1.0, approx=True)   # unbiased (N-1) std

    mean_g = sum_g * inv_cnt
    mean_s = sum_s * inv_cnt
    var_g = jnp.maximum(sum_gsq - cnt * mean_g * mean_g, 0.0) * inv_cnt_m1
    var_s = jnp.maximum(sum_ssq - cnt * mean_s * mean_s, 0.0) * inv_cnt_m1
    std_g = jnp.sqrt(var_g)
    std_s = jnp.sqrt(var_s)

    alpha = std_g * pl.reciprocal(std_s + eps, approx=True)
    beta = mean_g - alpha * mean_s
    alpha_ref[...] = alpha
    beta_ref[...] = beta

    # ---------------- closure() loss (forward) ------------------------------
    dataA = s[:, r:r + H, r:r + W]       # interior of the padded slabs
    guid = g[:, r:r + H, r:r + W]
    # feature_error is 1-D; PyTorch broadcasting applies it along the last
    # (W) axis of the (3, H, W) squared error -- reproduced here as (1,1,W).
    w_feat = (1.0 - ferr_ref[...])[None]

    diff = dataA * alpha + beta - guid
    e_d_elem = w_feat * diff * diff

    d0 = dataA[0]                        # (H, W), Lab channel 0

    def smooth_dir(p_axis, i_axis):
        ea = ((alpha - jnp.roll(alpha, -1, axis=p_axis)) ** 2 +
              (beta - jnp.roll(beta, -1, axis=p_axis)) ** 2)
        d = jnp.abs(d0 - jnp.roll(d0, -1, axis=i_axis))
        d12 = jnp.exp(1.2 * jnp.log(d + 1e-30))          # |d| ** 1.2 (EUP)
        w = pl.reciprocal(d12 + 1e-4, approx=True)
        return ea * w[None]

    # torch.roll is circular, so e_down / e_right are exact rolled copies of
    # e_up / e_left: same mean. Compute up/left once, weight by 2 (exact).
    e_l_elem = smooth_dir(1, 0) + smooth_dir(2, 1)

    n_inv = 1.0 / float(C * H * W)
    loss_ref[0, 0] = (jnp.sum(ed_scale * e_d_elem +
                              (2.0 * smooth_w) * e_l_elem) * n_inv)

    # ---------------- momentum blend + per-channel Lab clipping -------------
    cie = cie_ref[...]
    v = (cie * (1.0 - m + m * alpha) + m * beta) * 255.0
    img_ref[0] = jnp.clip(v[0], 0.0, 255.0)      # L
    img_ref[1] = jnp.clip(v[1], 42.0, 226.0)     # a  (HWC [:, :, 1] clip)
    img_ref[2] = jnp.clip(v[2], 20.0, 223.0)     # b  (HWC [:, :, 2] clip)


def progressive_transfer_level(cie_guidance, cie_dataA, cie_intermidiate,
                               feature_error, curr_layer=0,
                               smooth_weight=0.5, momentum=0.6,
                               patch_size=5, eps=0.0002):
    """One fused 'level': init_input stats, closure() loss, momentum blend.

    TODO(synk): the SGD optimization of alpha/beta (closure backward + steps)
    is not translated; the init_input alpha/beta are used directly, and
    alpha/beta are assumed to already be at cie_intermidiate's resolution
    (the F.interpolate upsample is not translated).
    """
    C, H, W = cie_dataA.shape
    r = patch_size // 2
    g_pad = jnp.pad(cie_guidance.astype(jnp.float32), ((0, 0), (r, r), (r, r)))
    s_pad = jnp.pad(cie_dataA.astype(jnp.float32), ((0, 0), (r, r), (r, r)))
    scalars = jnp.array([float(4 ** (4 - curr_layer)), smooth_weight, momentum],
                        jnp.float32)
    ferr2d = feature_error.reshape(1, W).astype(jnp.float32)
    cie = cie_intermidiate.astype(jnp.float32)

    kernel = functools.partial(_fused_kernel, radius=r, eps=eps)
    alpha, beta, next_img, loss = pl.pallas_call(
        kernel,
        out_shape=(jax.ShapeDtypeStruct((C, H, W), jnp.float32),   # alpha
                   jax.ShapeDtypeStruct((C, H, W), jnp.float32),   # beta
                   jax.ShapeDtypeStruct((C, H, W), jnp.float32),   # next image
                   jax.ShapeDtypeStruct((1, 1), jnp.float32)),     # loss
        in_specs=[pl.BlockSpec(memory_space=pltpu.MemorySpace.SMEM)] +
                 [pl.BlockSpec(memory_space=pltpu.MemorySpace.VMEM)] * 4,
        out_specs=(pl.BlockSpec(memory_space=pltpu.MemorySpace.VMEM),
                   pl.BlockSpec(memory_space=pltpu.MemorySpace.VMEM),
                   pl.BlockSpec(memory_space=pltpu.MemorySpace.VMEM),
                   pl.BlockSpec(memory_space=pltpu.MemorySpace.SMEM)),
        compiler_params=pltpu.CompilerParams(
            vmem_limit_bytes=48 * 1024 * 1024),
    )(scalars, g_pad, s_pad, cie, ferr2d)
    return alpha, beta, loss[0, 0], next_img


if __name__ == "__main__":
    key = jax.random.PRNGKey(0)
    C, H, W = 3, 32, 128          # lane-dense last dim (W = 128)
    k1, k2, k3, k4 = jax.random.split(key, 4)
    # Lab images scaled to [0, 1], as in the module (cvtColor(...) / 255).
    cie_guidance = jax.random.uniform(k1, (C, H, W), jnp.float32)
    cie_dataA = jax.random.uniform(k2, (C, H, W), jnp.float32)
    cie_intermidiate = jax.random.uniform(k3, (C, H, W), jnp.float32)
    # TODO(synk): feature_error normally comes from BidirectNNF features +
    # `normalize`; here it is a deterministic synthetic 1-D vector in [0, 1).
    feature_error = jax.random.uniform(k4, (W,), jnp.float32)

    alpha, beta, loss, next_img = progressive_transfer_level(
        cie_guidance, cie_dataA, cie_intermidiate, feature_error,
        curr_layer=0, smooth_weight=0.5, momentum=0.6)

    jax.block_until_ready((alpha, beta, loss, next_img))
    print("KERNEL_OK")
</pallas_src>

<mosaic_0001>
module attributes {stable_mosaic.version = 11 : i64} {
  func.func @_fused_kernel(%arg0: memref<3xf32, #tpu.memory_space<smem>>, %arg1: memref<3x36x132xf32, #tpu.memory_space<vmem>>, %arg2: memref<3x36x132xf32, #tpu.memory_space<vmem>>, %arg3: memref<3x32x128xf32, #tpu.memory_space<vmem>>, %arg4: memref<1x128xf32, #tpu.memory_space<vmem>>, %arg5: memref<3x32x128xf32, #tpu.memory_space<vmem>>, %arg6: memref<3x32x128xf32, #tpu.memory_space<vmem>>, %arg7: memref<3x32x128xf32, #tpu.memory_space<vmem>>, %arg8: memref<1x1xf32, #tpu.memory_space<smem>>) attributes {dimension_semantics = [], scalar_prefetch = 0 : i64, scratch_operands = 0 : i64, tpu.core_type = #tpu.core_type<tc>} {
    %c0 = arith.constant 0 : index
    %0 = memref.load %arg0[%c0] : memref<3xf32, #tpu.memory_space<smem>>
    %c1 = arith.constant 1 : index
    %1 = memref.load %arg0[%c1] : memref<3xf32, #tpu.memory_space<smem>>
    %c2 = arith.constant 2 : index
    %2 = memref.load %arg0[%c2] : memref<3xf32, #tpu.memory_space<smem>>
    %c0_0 = arith.constant 0 : index
    %c0_1 = arith.constant 0 : index
    %c0_2 = arith.constant 0 : index
    %3 = vector.load %arg1[%c0_0, %c0_1, %c0_2] : memref<3x36x132xf32, #tpu.memory_space<vmem>>, vector<3x36x132xf32>
    %c0_3 = arith.constant 0 : index
    %c0_4 = arith.constant 0 : index
    %c0_5 = arith.constant 0 : index
    %4 = vector.load %arg2[%c0_3, %c0_4, %c0_5] : memref<3x36x132xf32, #tpu.memory_space<vmem>>, vector<3x36x132xf32>
    %5 = vector.extract_strided_slice %3 {offsets = [0, 0, 0], sizes = [3, 32, 132], strides = [1, 1, 1]} : vector<3x36x132xf32> to vector<3x32x132xf32>
    %6 = vector.extract_strided_slice %3 {offsets = [0, 1, 0], sizes = [3, 32, 132], strides = [1, 1, 1]} : vector<3x36x132xf32> to vector<3x32x132xf32>
    %7 = arith.addf %5, %6 : vector<3x32x132xf32>
    %8 = vector.extract_strided_slice %3 {offsets = [0, 2, 0], sizes = [3, 32, 132], strides = [1, 1, 1]} : vector<3x36x132xf32> to vector<3x32x132xf32>
    %9 = arith.addf %7, %8 : vector<3x32x132xf32>
    %10 = vector.extract_strided_slice %3 {offsets = [0, 3, 0], sizes = [3, 32, 132], strides = [1, 1, 1]} : vector<3x36x132xf32> to vector<3x32x132xf32>
    %11 = arith.addf %9, %10 : vector<3x32x132xf32>
    %12 = vector.extract_strided_slice %3 {offsets = [0, 4, 0], sizes = [3, 32, 132], strides = [1, 1, 1]} : vector<3x36x132xf32> to vector<3x32x132xf32>
    %13 = arith.addf %11, %12 : vector<3x32x132xf32>
    %14 = vector.extract_strided_slice %13 {offsets = [0, 0, 0], sizes = [3, 32, 128], strides = [1, 1, 1]} : vector<3x32x132xf32> to vector<3x32x128xf32>
    %15 = vector.extract_strided_slice %13 {offsets = [0, 0, 1], sizes = [3, 32, 128], strides = [1, 1, 1]} : vector<3x32x132xf32> to vector<3x32x128xf32>
    %16 = arith.addf %14, %15 : vector<3x32x128xf32>
    %17 = vector.extract_strided_slice %13 {offsets = [0, 0, 2], sizes = [3, 32, 128], strides = [1, 1, 1]} : vector<3x32x132xf32> to vector<3x32x128xf32>
    %18 = arith.addf %16, %17 : vector<3x32x128xf32>
    %19 = vector.extract_strided_slice %13 {offsets = [0, 0, 3], sizes = [3, 32, 128], strides = [1, 1, 1]} : vector<3x32x132xf32> to vector<3x32x128xf32>
    %20 = arith.addf %18, %19 : vector<3x32x128xf32>
    %21 = vector.extract_strided_slice %13 {offsets = [0, 0, 4], sizes = [3, 32, 128], strides = [1, 1, 1]} : vector<3x32x132xf32> to vector<3x32x128xf32>
    %22 = arith.addf %20, %21 : vector<3x32x128xf32>
    %23 = arith.mulf %3, %3 : vector<3x36x132xf32>
    %24 = vector.extract_strided_slice %23 {offsets = [0, 0, 0], sizes = [3, 32, 132], strides = [1, 1, 1]} : vector<3x36x132xf32> to vector<3x32x132xf32>
    %25 = vector.extract_strided_slice %23 {offsets = [0, 1, 0], sizes = [3, 32, 132], strides = [1, 1, 1]} : vector<3x36x132xf32> to vector<3x32x132xf32>
    %26 = arith.addf %24, %25 : vector<3x32x132xf32>
    %27 = vector.extract_strided_slice %23 {offsets = [0, 2, 0], sizes = [3, 32, 132], strides = [1, 1, 1]} : vector<3x36x132xf32> to vector<3x32x132xf32>
    %28 = arith.addf %26, %27 : vector<3x32x132xf32>
    %29 = vector.extract_strided_slice %23 {offsets = [0, 3, 0], sizes = [3, 32, 132], strides = [1, 1, 1]} : vector<3x36x132xf32> to vector<3x32x132xf32>
    %30 = arith.addf %28, %29 : vector<3x32x132xf32>
    %31 = vector.extract_strided_slice %23 {offsets = [0, 4, 0], sizes = [3, 32, 132], strides = [1, 1, 1]} : vector<3x36x132xf32> to vector<3x32x132xf32>
    %32 = arith.addf %30, %31 : vector<3x32x132xf32>
    %33 = vector.extract_strided_slice %32 {offsets = [0, 0, 0], sizes = [3, 32, 128], strides = [1, 1, 1]} : vector<3x32x132xf32> to vector<3x32x128xf32>
    %34 = vector.extract_strided_slice %32 {offsets = [0, 0, 1], sizes = [3, 32, 128], strides = [1, 1, 1]} : vector<3x32x132xf32> to vector<3x32x128xf32>
    %35 = arith.addf %33, %34 : vector<3x32x128xf32>
    %36 = vector.extract_strided_slice %32 {offsets = [0, 0, 2], sizes = [3, 32, 128], strides = [1, 1, 1]} : vector<3x32x132xf32> to vector<3x32x128xf32>
    %37 = arith.addf %35, %36 : vector<3x32x128xf32>
    %38 = vector.extract_strided_slice %32 {offsets = [0, 0, 3], sizes = [3, 32, 128], strides = [1, 1, 1]} : vector<3x32x132xf32> to vector<3x32x128xf32>
    %39 = arith.addf %37, %38 : vector<3x32x128xf32>
    %40 = vector.extract_strided_slice %32 {offsets = [0, 0, 4], sizes = [3, 32, 128], strides = [1, 1, 1]} : vector<3x32x132xf32> to vector<3x32x128xf32>
    %41 = arith.addf %39, %40 : vector<3x32x128xf32>
    %42 = vector.extract_strided_slice %4 {offsets = [0, 0, 0], sizes = [3, 32, 132], strides = [1, 1, 1]} : vector<3x36x132xf32> to vector<3x32x132xf32>
    %43 = vector.extract_strided_slice %4 {offsets = [0, 1, 0], sizes = [3, 32, 132], strides = [1, 1, 1]} : vector<3x36x132xf32> to vector<3x32x132xf32>
    %44 = arith.addf %42, %43 : vector<3x32x132xf32>
    %45 = vector.extract_strided_slice %4 {offsets = [0, 2, 0], sizes = [3, 32, 132], strides = [1, 1, 1]} : vector<3x36x132xf32> to vector<3x32x132xf32>
    %46 = arith.addf %44, %45 : vector<3x32x132xf32>
    %47 = vector.extract_strided_slice %4 {offsets = [0, 3, 0], sizes = [3, 32, 132], strides = [1, 1, 1]} : vector<3x36x132xf32> to vector<3x32x132xf32>
    %48 = arith.addf %46, %47 : vector<3x32x132xf32>
    %49 = vector.extract_strided_slice %4 {offsets = [0, 4, 0], sizes = [3, 32, 132], strides = [1, 1, 1]} : vector<3x36x132xf32> to vector<3x32x132xf32>
    %50 = arith.addf %48, %49 : vector<3x32x132xf32>
    %51 = vector.extract_strided_slice %50 {offsets = [0, 0, 0], sizes = [3, 32, 128], strides = [1, 1, 1]} : vector<3x32x132xf32> to vector<3x32x128xf32>
    %52 = vector.extract_strided_slice %50 {offsets = [0, 0, 1], sizes = [3, 32, 128], strides = [1, 1, 1]} : vector<3x32x132xf32> to vector<3x32x128xf32>
    %53 = arith.addf %51, %52 : vector<3x32x128xf32>
    %54 = vector.extract_strided_slice %50 {offsets = [0, 0, 2], sizes = [3, 32, 128], strides = [1, 1, 1]} : vector<3x32x132xf32> to vector<3x32x128xf32>
    %55 = arith.addf %53, %54 : vector<3x32x128xf32>
    %56 = vector.extract_strided_slice %50 {offsets = [0, 0, 3], sizes = [3, 32, 128], strides = [1, 1, 1]} : vector<3x32x132xf32> to vector<3x32x128xf32>
    %57 = arith.addf %55, %56 : vector<3x32x128xf32>
    %58 = vector.extract_strided_slice %50 {offsets = [0, 0, 4], sizes = [3, 32, 128], strides = [1, 1, 1]} : vector<3x32x132xf32> to vector<3x32x128xf32>
    %59 = arith.addf %57, %58 : vector<3x32x128xf32>
    %60 = arith.mulf %4, %4 : vector<3x36x132xf32>
    %61 = vector.extract_strided_slice %60 {offsets = [0, 0, 0], sizes = [3, 32, 132], strides = [1, 1, 1]} : vector<3x36x132xf32> to vector<3x32x132xf32>
    %62 = vector.extract_strided_slice %60 {offsets = [0, 1, 0], sizes = [3, 32, 132], strides = [1, 1, 1]} : vector<3x36x132xf32> to vector<3x32x132xf32>
    %63 = arith.addf %61, %62 : vector<3x32x132xf32>
    %64 = vector.extract_strided_slice %60 {offsets = [0, 2, 0], sizes = [3, 32, 132], strides = [1, 1, 1]} : vector<3x36x132xf32> to vector<3x32x132xf32>
    %65 = arith.addf %63, %64 : vector<3x32x132xf32>
    %66 = vector.extract_strided_slice %60 {offsets = [0, 3, 0], sizes = [3, 32, 132], strides = [1, 1, 1]} : vector<3x36x132xf32> to vector<3x32x132xf32>
    %67 = arith.addf %65, %66 : vector<3x32x132xf32>
    %68 = vector.extract_strided_slice %60 {offsets = [0, 4, 0], sizes = [3, 32, 132], strides = [1, 1, 1]} : vector<3x36x132xf32> to vector<3x32x132xf32>
    %69 = arith.addf %67, %68 : vector<3x32x132xf32>
    %70 = vector.extract_strided_slice %69 {offsets = [0, 0, 0], sizes = [3, 32, 128], strides = [1, 1, 1]} : vector<3x32x132xf32> to vector<3x32x128xf32>
    %71 = vector.extract_strided_slice %69 {offsets = [0, 0, 1], sizes = [3, 32, 128], strides = [1, 1, 1]} : vector<3x32x132xf32> to vector<3x32x128xf32>
    %72 = arith.addf %70, %71 : vector<3x32x128xf32>
    %73 = vector.extract_strided_slice %69 {offsets = [0, 0, 2], sizes = [3, 32, 128], strides = [1, 1, 1]} : vector<3x32x132xf32> to vector<3x32x128xf32>
    %74 = arith.addf %72, %73 : vector<3x32x128xf32>
    %75 = vector.extract_strided_slice %69 {offsets = [0, 0, 3], sizes = [3, 32, 128], strides = [1, 1, 1]} : vector<3x32x132xf32> to vector<3x32x128xf32>
    %76 = arith.addf %74, %75 : vector<3x32x128xf32>
    %77 = vector.extract_strided_slice %69 {offsets = [0, 0, 4], sizes = [3, 32, 128], strides = [1, 1, 1]} : vector<3x32x132xf32> to vector<3x32x128xf32>
    %78 = arith.addf %76, %77 : vector<3x32x128xf32>
    %79 = tpu.iota {dimensions = array<i32: 1>} : vector<1x32x128xi32>
    %80 = tpu.iota {dimensions = array<i32: 2>} : vector<1x32x128xi32>
    %c2_i32 = arith.constant 2 : i32
    %81 = vector.broadcast %c2_i32 : i32 to vector<1x32x128xi32>
    %82 = arith.minsi %79, %81 : vector<1x32x128xi32>
    %c31_i32 = arith.constant 31 : i32
    %83 = vector.broadcast %c31_i32 : i32 to vector<1x32x128xi32>
    %84 = arith.subi %83, %79 : vector<1x32x128xi32>
    %c2_i32_6 = arith.constant 2 : i32
    %85 = vector.broadcast %c2_i32_6 : i32 to vector<1x32x128xi32>
    %86 = arith.minsi %84, %85 : vector<1x32x128xi32>
    %87 = arith.addi %82, %86 : vector<1x32x128xi32>
    %c1_i32 = arith.constant 1 : i32
    %88 = vector.broadcast %c1_i32 : i32 to vector<1x32x128xi32>
    %89 = arith.addi %87, %88 : vector<1x32x128xi32>
    %c2_i32_7 = arith.constant 2 : i32
    %90 = vector.broadcast %c2_i32_7 : i32 to vector<1x32x128xi32>
    %91 = arith.minsi %80, %90 : vector<1x32x128xi32>
    %c127_i32 = arith.constant 127 : i32
    %92 = vector.broadcast %c127_i32 : i32 to vector<1x32x128xi32>
    %93 = arith.subi %92, %80 : vector<1x32x128xi32>
    %c2_i32_8 = arith.constant 2 : i32
    %94 = vector.broadcast %c2_i32_8 : i32 to vector<1x32x128xi32>
    %95 = arith.minsi %93, %94 : vector<1x32x128xi32>
    %96 = arith.addi %91, %95 : vector<1x32x128xi32>
    %c1_i32_9 = arith.constant 1 : i32
    %97 = vector.broadcast %c1_i32_9 : i32 to vector<1x32x128xi32>
    %98 = arith.addi %96, %97 : vector<1x32x128xi32>
    %99 = arith.muli %89, %98 : vector<1x32x128xi32>
    %100 = arith.sitofp %99 : vector<1x32x128xi32> to vector<1x32x128xf32>
    %101 = tpu.reciprocal %100 {approx = true} : vector<1x32x128xf32> -> vector<1x32x128xf32>
    %cst = arith.constant 1.000000e+00 : f32
    %102 = vector.broadcast %cst : f32 to vector<1x32x128xf32>
    %103 = arith.subf %100, %102 : vector<1x32x128xf32>
    %104 = tpu.reciprocal %103 {approx = true} : vector<1x32x128xf32> -> vector<1x32x128xf32>
    %105 = vector.broadcast %101 : vector<1x32x128xf32> to vector<3x32x128xf32>
    %106 = arith.mulf %22, %105 : vector<3x32x128xf32>
    %107 = vector.broadcast %101 : vector<1x32x128xf32> to vector<3x32x128xf32>
    %108 = arith.mulf %59, %107 : vector<3x32x128xf32>
    %109 = vector.broadcast %100 : vector<1x32x128xf32> to vector<3x32x128xf32>
    %110 = arith.mulf %109, %106 : vector<3x32x128xf32>
    %111 = arith.mulf %110, %106 : vector<3x32x128xf32>
    %112 = arith.subf %41, %111 : vector<3x32x128xf32>
    %cst_10 = arith.constant 0.000000e+00 : f32
    %113 = vector.broadcast %cst_10 : f32 to vector<3x32x128xf32>
    %114 = arith.maximumf %112, %113 : vector<3x32x128xf32>
    %115 = vector.broadcast %104 : vector<1x32x128xf32> to vector<3x32x128xf32>
    %116 = arith.mulf %114, %115 : vector<3x32x128xf32>
    %117 = vector.broadcast %100 : vector<1x32x128xf32> to vector<3x32x128xf32>
    %118 = arith.mulf %117, %108 : vector<3x32x128xf32>
    %119 = arith.mulf %118, %108 : vector<3x32x128xf32>
    %120 = arith.subf %78, %119 : vector<3x32x128xf32>
    %cst_11 = arith.constant 0.000000e+00 : f32
    %121 = vector.broadcast %cst_11 : f32 to vector<3x32x128xf32>
    %122 = arith.maximumf %120, %121 : vector<3x32x128xf32>
    %123 = vector.broadcast %104 : vector<1x32x128xf32> to vector<3x32x128xf32>
    %124 = arith.mulf %122, %123 : vector<3x32x128xf32>
    %125 = math.sqrt %116 : vector<3x32x128xf32>
    %126 = math.sqrt %124 : vector<3x32x128xf32>
    %cst_12 = arith.constant 2.000000e-04 : f32
    %127 = vector.broadcast %cst_12 : f32 to vector<3x32x128xf32>
    %128 = arith.addf %126, %127 : vector<3x32x128xf32>
    %129 = tpu.reciprocal %128 {approx = true} : vector<3x32x128xf32> -> vector<3x32x128xf32>
    %130 = arith.mulf %125, %129 : vector<3x32x128xf32>
    %131 = arith.mulf %130, %108 : vector<3x32x128xf32>
    %132 = arith.subf %106, %131 : vector<3x32x128xf32>
    %c0_13 = arith.constant 0 : index
    %c0_14 = arith.constant 0 : index
    %c0_15 = arith.constant 0 : index
    %133 = vector.load %arg5[%c0_13, %c0_14, %c0_15] : memref<3x32x128xf32, #tpu.memory_space<vmem>>, vector<3x32x128xf32>
    tpu.vector_store %arg5[%c0_13, %c0_14, %c0_15], %130 {strides = array<i32>} : memref<3x32x128xf32, #tpu.memory_space<vmem>>, vector<3x32x128xf32>,
    %c0_16 = arith.constant 0 : index
    %c0_17 = arith.constant 0 : index
    %c0_18 = arith.constant 0 : index
    %134 = vector.load %arg6[%c0_16, %c0_17, %c0_18] : memref<3x32x128xf32, #tpu.memory_space<vmem>>, vector<3x32x128xf32>
    tpu.vector_store %arg6[%c0_16, %c0_17, %c0_18], %132 {strides = array<i32>} : memref<3x32x128xf32, #tpu.memory_space<vmem>>, vector<3x32x128xf32>,
    %135 = vector.extract_strided_slice %4 {offsets = [0, 2, 2], sizes = [3, 32, 128], strides = [1, 1, 1]} : vector<3x36x132xf32> to vector<3x32x128xf32>
    %136 = vector.extract_strided_slice %3 {offsets = [0, 2, 2], sizes = [3, 32, 128], strides = [1, 1, 1]} : vector<3x36x132xf32> to vector<3x32x128xf32>
    %c0_19 = arith.constant 0 : index
    %c0_20 = arith.constant 0 : index
    %137 = vector.load %arg4[%c0_19, %c0_20] : memref<1x128xf32, #tpu.memory_space<vmem>>, vector<1x128xf32>
    %cst_21 = arith.constant 1.000000e+00 : f32
    %138 = vector.broadcast %cst_21 : f32 to vector<1x128xf32>
    %139 = arith.subf %138, %137 : vector<1x128xf32>
    %140 = vector.shape_cast %139 : vector<1x128xf32> to vector<1x1x128xf32>
    %141 = arith.mulf %135, %130 : vector<3x32x128xf32>
    %142 = arith.addf %141, %132 : vector<3x32x128xf32>
    %143 = arith.subf %142, %136 : vector<3x32x128xf32>
    %144 = vector.broadcast %140 : vector<1x1x128xf32> to vector<3x32x128xf32>
    %145 = arith.mulf %144, %143 : vector<3x32x128xf32>
    %146 = arith.mulf %145, %143 : vector<3x32x128xf32>
    %147 = vector.extract_strided_slice %135 {offsets = [0, 0, 0], sizes = [1, 32, 128], strides = [1, 1, 1]} : vector<3x32x128xf32> to vector<1x32x128xf32>
    %148 = vector.shape_cast %147 : vector<1x32x128xf32> to vector<32x128xf32>
    %149 = vector.extract_strided_slice %130 {offsets = [0, 1, 0], sizes = [3, 31, 128], strides = [1, 1, 1]} : vector<3x32x128xf32> to vector<3x31x128xf32>
    %150 = vector.extract_strided_slice %130 {offsets = [0, 0, 0], sizes = [3, 1, 128], strides = [1, 1, 1]} : vector<3x32x128xf32> to vector<3x1x128xf32>
    %151 = tpu.concatenate %149, %150 in 1 : vector<3x31x128xf32>, vector<3x1x128xf32> -> vector<3x32x128xf32>
    %152 = arith.subf %130, %151 : vector<3x32x128xf32>
    %153 = arith.mulf %152, %152 : vector<3x32x128xf32>
    %154 = vector.extract_strided_slice %132 {offsets = [0, 1, 0], sizes = [3, 31, 128], strides = [1, 1, 1]} : vector<3x32x128xf32> to vector<3x31x128xf32>
    %155 = vector.extract_strided_slice %132 {offsets = [0, 0, 0], sizes = [3, 1, 128], strides = [1, 1, 1]} : vector<3x32x128xf32> to vector<3x1x128xf32>
    %156 = tpu.concatenate %154, %155 in 1 : vector<3x31x128xf32>, vector<3x1x128xf32> -> vector<3x32x128xf32>
    %157 = arith.subf %132, %156 : vector<3x32x128xf32>
    %158 = arith.mulf %157, %157 : vector<3x32x128xf32>
    %159 = arith.addf %153, %158 : vector<3x32x128xf32>
    %160 = vector.extract_strided_slice %148 {offsets = [1, 0], sizes = [31, 128], strides = [1, 1]} : vector<32x128xf32> to vector<31x128xf32>
    %161 = vector.extract_strided_slice %148 {offsets = [0, 0], sizes = [1, 128], strides = [1, 1]} : vector<32x128xf32> to vector<1x128xf32>
    %162 = tpu.concatenate %160, %161 in 0 : vector<31x128xf32>, vector<1x128xf32> -> vector<32x128xf32>
    %163 = arith.subf %148, %162 : vector<32x128xf32>
    %164 = math.absf %163 : vector<32x128xf32>
    %cst_22 = arith.constant 1.000000e-30 : f32
    %165 = vector.broadcast %cst_22 : f32 to vector<32x128xf32>
    %166 = arith.addf %164, %165 : vector<32x128xf32>
    %167 = math.log %166 : vector<32x128xf32>
    %cst_23 = arith.constant 1.200000e+00 : f32
    %168 = vector.broadcast %cst_23 : f32 to vector<32x128xf32>
    %169 = arith.mulf %168, %167 : vector<32x128xf32>
    %170 = math.exp %169 : vector<32x128xf32>
    %cst_24 = arith.constant 9.99999974E-5 : f32
    %171 = vector.broadcast %cst_24 : f32 to vector<32x128xf32>
    %172 = arith.addf %170, %171 : vector<32x128xf32>
    %173 = tpu.reciprocal %172 {approx = true} : vector<32x128xf32> -> vector<32x128xf32>
    %174 = vector.shape_cast %173 : vector<32x128xf32> to vector<1x32x128xf32>
    %175 = vector.broadcast %174 : vector<1x32x128xf32> to vector<3x32x128xf32>
    %176 = arith.mulf %159, %175 : vector<3x32x128xf32>
    %177 = vector.extract_strided_slice %130 {offsets = [0, 0, 1], sizes = [3, 32, 127], strides = [1, 1, 1]} : vector<3x32x128xf32> to vector<3x32x127xf32>
    %178 = vector.extract_strided_slice %130 {offsets = [0, 0, 0], sizes = [3, 32, 1], strides = [1, 1, 1]} : vector<3x32x128xf32> to vector<3x32x1xf32>
    %179 = tpu.concatenate %177, %178 in 2 : vector<3x32x127xf32>, vector<3x32x1xf32> -> vector<3x32x128xf32>
    %180 = arith.subf %130, %179 : vector<3x32x128xf32>
    %181 = arith.mulf %180, %180 : vector<3x32x128xf32>
    %182 = vector.extract_strided_slice %132 {offsets = [0, 0, 1], sizes = [3, 32, 127], strides = [1, 1, 1]} : vector<3x32x128xf32> to vector<3x32x127xf32>
    %183 = vector.extract_strided_slice %132 {offsets = [0, 0, 0], sizes = [3, 32, 1], strides = [1, 1, 1]} : vector<3x32x128xf32> to vector<3x32x1xf32>
    %184 = tpu.concatenate %182, %183 in 2 : vector<3x32x127xf32>, vector<3x32x1xf32> -> vector<3x32x128xf32>
    %185 = arith.subf %132, %184 : vector<3x32x128xf32>
    %186 = arith.mulf %185, %185 : vector<3x32x128xf32>
    %187 = arith.addf %181, %186 : vector<3x32x128xf32>
    %188 = vector.extract_strided_slice %148 {offsets = [0, 1], sizes = [32, 127], strides = [1, 1]} : vector<32x128xf32> to vector<32x127xf32>
    %189 = vector.extract_strided_slice %148 {offsets = [0, 0], sizes = [32, 1], strides = [1, 1]} : vector<32x128xf32> to vector<32x1xf32>
    %190 = tpu.concatenate %188, %189 in 1 : vector<32x127xf32>, vector<32x1xf32> -> vector<32x128xf32>
    %191 = arith.subf %148, %190 : vector<32x128xf32>
    %192 = math.absf %191 : vector<32x128xf32>
    %cst_25 = arith.constant 1.000000e-30 : f32
    %193 = vector.broadcast %cst_25 : f32 to vector<32x128xf32>
    %194 = arith.addf %192, %193 : vector<32x128xf32>
    %195 = math.log %194 : vector<32x128xf32>
    %cst_26 = arith.constant 1.200000e+00 : f32
    %196 = vector.broadcast %cst_26 : f32 to vector<32x128xf32>
    %197 = arith.mulf %196, %195 : vector<32x128xf32>
    %198 = math.exp %197 : vector<32x128xf32>
    %cst_27 = arith.constant 9.99999974E-5 : f32
    %199 = vector.broadcast %cst_27 : f32 to vector<32x128xf32>
    %200 = arith.addf %198, %199 : vector<32x128xf32>
    %201 = tpu.reciprocal %200 {approx = true} : vector<32x128xf32> -> vector<32x128xf32>
    %202 = vector.shape_cast %201 : vector<32x128xf32> to vector<1x32x128xf32>
    %203 = vector.broadcast %202 : vector<1x32x128xf32> to vector<3x32x128xf32>
    %204 = arith.mulf %187, %203 : vector<3x32x128xf32>
    %205 = arith.addf %176, %204 : vector<3x32x128xf32>
    %206 = vector.broadcast %0 : f32 to vector<3x32x128xf32>
    %207 = arith.mulf %206, %146 : vector<3x32x128xf32>
    %cst_28 = arith.constant 2.000000e+00 : f32
    %208 = arith.mulf %cst_28, %1 : f32
    %209 = vector.broadcast %208 : f32 to vector<3x32x128xf32>
    %210 = arith.mulf %209, %205 : vector<3x32x128xf32>
    %211 = arith.addf %207, %210 : vector<3x32x128xf32>
    %212 = vector.shape_cast %211 : vector<3x32x128xf32> to vector<1x3x32x128xf32>
    %cst_29 = arith.constant dense<0.000000e+00> : vector<1xf32>
    %213 = vector.multi_reduction <add>, %212, %cst_29 [1, 2, 3] : vector<1x3x32x128xf32> to vector<1xf32>
    %214 = vector.shape_cast %213 : vector<1xf32> to vector<1x1x1x1xf32>
    %215 = vector.extract %214[0, 0, 0, 0] : f32 from vector<1x1x1x1xf32>
    %cst_30 = arith.constant 8.13802107E-5 : f32
    %216 = arith.mulf %215, %cst_30 : f32
    %c0_31 = arith.constant 0 : index
    %c0_32 = arith.constant 0 : index
    %217 = memref.load %arg8[%c0_31, %c0_32] : memref<1x1xf32, #tpu.memory_space<smem>>
    memref.store %216, %arg8[%c0_31, %c0_32] : memref<1x1xf32, #tpu.memory_space<smem>>
    %c0_33 = arith.constant 0 : index
    %c0_34 = arith.constant 0 : index
    %c0_35 = arith.constant 0 : index
    %218 = vector.load %arg3[%c0_33, %c0_34, %c0_35] : memref<3x32x128xf32, #tpu.memory_space<vmem>>, vector<3x32x128xf32>
    %cst_36 = arith.constant 1.000000e+00 : f32
    %219 = arith.subf %cst_36, %2 : f32
    %220 = vector.broadcast %2 : f32 to vector<3x32x128xf32>
    %221 = arith.mulf %220, %130 : vector<3x32x128xf32>
    %222 = vector.broadcast %219 : f32 to vector<3x32x128xf32>
    %223 = arith.addf %222, %221 : vector<3x32x128xf32>
    %224 = arith.mulf %218, %223 : vector<3x32x128xf32>
    %225 = vector.broadcast %2 : f32 to vector<3x32x128xf32>
    %226 = arith.mulf %225, %132 : vector<3x32x128xf32>
    %227 = arith.addf %224, %226 : vector<3x32x128xf32>
    %cst_37 = arith.constant 2.550000e+02 : f32
    %228 = vector.broadcast %cst_37 : f32 to vector<3x32x128xf32>
    %229 = arith.mulf %227, %228 : vector<3x32x128xf32>
    %230 = vector.extract_strided_slice %229 {offsets = [0, 0, 0], sizes = [1, 32, 128], strides = [1, 1, 1]} : vector<3x32x128xf32> to vector<1x32x128xf32>
    %231 = vector.shape_cast %230 : vector<1x32x128xf32> to vector<32x128xf32>
    %cst_38 = arith.constant 0.000000e+00 : f32
    %cst_39 = arith.constant 2.550000e+02 : f32
    %232 = vector.broadcast %cst_38 : f32 to vector<32x128xf32>
    %233 = arith.maximumf %232, %231 : vector<32x128xf32>
    %234 = vector.broadcast %cst_39 : f32 to vector<32x128xf32>
    %235 = arith.minimumf %234, %233 : vector<32x128xf32>
    %c0_40 = arith.constant 0 : index
    %c0_41 = arith.constant 0 : index
    %c0_42 = arith.constant 0 : index
    %236 = vector.load %arg7[%c0_40, %c0_41, %c0_42] : memref<3x32x128xf32, #tpu.memory_space<vmem>>, vector<1x32x128xf32>
    %237 = vector.shape_cast %236 : vector<1x32x128xf32> to vector<32x128xf32>
    %238 = vector.shape_cast %235 : vector<32x128xf32> to vector<1x32x128xf32>
    tpu.vector_store %arg7[%c0_40, %c0_41, %c0_42], %238 {strides = array<i32>} : memref<3x32x128xf32, #tpu.memory_space<vmem>>, vector<1x32x128xf32>,
    %239 = vector.extract_strided_slice %229 {offsets = [1, 0, 0], sizes = [1, 32, 128], strides = [1, 1, 1]} : vector<3x32x128xf32> to vector<1x32x128xf32>
    %240 = vector.shape_cast %239 : vector<1x32x128xf32> to vector<32x128xf32>
    %cst_43 = arith.constant 4.200000e+01 : f32
    %cst_44 = arith.constant 2.260000e+02 : f32
    %241 = vector.broadcast %cst_43 : f32 to vector<32x128xf32>
    %242 = arith.maximumf %241, %240 : vector<32x128xf32>
    %243 = vector.broadcast %cst_44 : f32 to vector<32x128xf32>
    %244 = arith.minimumf %243, %242 : vector<32x128xf32>
    %c1_45 = arith.constant 1 : index
    %c0_46 = arith.constant 0 : index
    %c0_47 = arith.constant 0 : index
    %245 = vector.load %arg7[%c1_45, %c0_46, %c0_47] : memref<3x32x128xf32, #tpu.memory_space<vmem>>, vector<1x32x128xf32>
    %246 = vector.shape_cast %245 : vector<1x32x128xf32> to vector<32x128xf32>
    %247 = vector.shape_cast %244 : vector<32x128xf32> to vector<1x32x128xf32>
    tpu.vector_store %arg7[%c1_45, %c0_46, %c0_47], %247 {strides = array<i32>} : memref<3x32x128xf32, #tpu.memory_space<vmem>>, vector<1x32x128xf32>,
    %248 = vector.extract_strided_slice %229 {offsets = [2, 0, 0], sizes = [1, 32, 128], strides = [1, 1, 1]} : vector<3x32x128xf32> to vector<1x32x128xf32>
    %249 = vector.shape_cast %248 : vector<1x32x128xf32> to vector<32x128xf32>
    %cst_48 = arith.constant 2.000000e+01 : f32
    %cst_49 = arith.constant 2.230000e+02 : f32
    %250 = vector.broadcast %cst_48 : f32 to vector<32x128xf32>
    %251 = arith.maximumf %250, %249 : vector<32x128xf32>
    %252 = vector.broadcast %cst_49 : f32 to vector<32x128xf32>
    %253 = arith.minimumf %252, %251 : vector<32x128xf32>
    %c2_50 = arith.constant 2 : index
    %c0_51 = arith.constant 0 : index
    %c0_52 = arith.constant 0 : index
    %254 = vector.load %arg7[%c2_50, %c0_51, %c0_52] : memref<3x32x128xf32, #tpu.memory_space<vmem>>, vector<1x32x128xf32>
    %255 = vector.shape_cast %254 : vector<1x32x128xf32> to vector<32x128xf32>
    %256 = vector.shape_cast %253 : vector<32x128xf32> to vector<1x32x128xf32>
    tpu.vector_store %arg7[%c2_50, %c0_51, %c0_52], %256 {strides = array<i32>} : memref<3x32x128xf32, #tpu.memory_space<vmem>>, vector<1x32x128xf32>,
    return
  }
}

</mosaic_0001>

<llo_original>
// kernel: tpu_custom_call.1
$region0: #{tpu_custom_call.1}
  #allocation0 [shape = 'u32[]', space=smem, size = 0x4, offset = 0x4, fixed_abs, tag = 'smem constant byte address 0x4 - core index']
  #allocation1 [shape = 'u32[72,128]{1,0:T(1,128)}', space=vmem, size = 0x9000, scoped, tag = 'internal scratch']
  %s0 = inlined_call_operand.hbm [shape: f32[3], index: 0, kind: input, shape index: {}]
  %s1 = inlined_call_operand.hbm [shape: f32[3,36,132], index: 1, kind: input, shape index: {}]
  %s2 = inlined_call_operand.hbm [shape: f32[3,36,132], index: 2, kind: input, shape index: {}]
  %s3 = inlined_call_operand.hbm [shape: f32[3,32,128], index: 3, kind: input, shape index: {}]
  %s4 = inlined_call_operand.vmem [shape: f32[1,128], index: 4, kind: input, shape index: {}]
  %s5 = inlined_call_operand.hbm [shape: f32[3,32,128], index: 5, kind: output, shape index: {0}]
  %s6 = inlined_call_operand.hbm [shape: f32[3,32,128], index: 6, kind: output, shape index: {1}]
  %s7 = inlined_call_operand.hbm [shape: f32[3,32,128], index: 7, kind: output, shape index: {2}]
  %s8 = inlined_call_operand.hbm [shape: f32[1,1], index: 8, kind: output, shape index: {3}]
  %9 = xla_tuple %s5, %s6, %s7, %s8
  %s10 = sld [smem:[#allocation0]]
  $region70: #{tpu_custom_call.1} parent=0
    _
  %s12 = ssub.s32 1, %s10
  %s13 = scalar_select 0, %s12, %s10
  $region1: #{tpu_custom_call.1} parent=0
    #allocation2 [shape = 'u8[512]{0}', space=smem, size = 0x200, scoped, tag = 'input window, operand 0, single buffered']
    #allocation3 [shape = 's32[1]{0}', space=sflag, size = 0x4, scoped, tag = 'scoped memory for tpu_custom_call.1']
    #allocation4 [shape = 's32[1]{0}', space=sflag, size = 0x4, scoped, tag = 'scoped memory for tpu_custom_call.1']
    #allocation5 [shape = 's32[1]{0}', space=sflag, size = 0x4, scoped, tag = 'scoped memory for tpu_custom_call.1']
    #allocation6 [shape = 's32[1]{0}', space=sflag, size = 0x4, scoped, tag = 'scoped memory for tpu_custom_call.1']
    #allocation7 [shape = 'u8[122880]{0}', space=vmem, size = 0x1e000, scoped, tag = 'input window, operand 1, single buffered']
    #allocation8 [shape = 'u8[122880]{0}', space=vmem, size = 0x1e000, scoped, tag = 'input window, operand 2, single buffered']
    #allocation9 [shape = 's32[1]{0}', space=sflag, size = 0x4, scoped, tag = 'scoped memory for tpu_custom_call.1']
    #allocation10 [shape = 'u8[49152]{0}', space=vmem, size = 0xc000, scoped, tag = 'input window, operand 3, single buffered']
    #allocation11 [shape = 'u8[49152]{0}', space=vmem, size = 0xc000, scoped, tag = 'output window, operand 0, single buffered']
    #allocation12 [shape = 'u8[49152]{0}', space=vmem, size = 0xc000, scoped, tag = 'output window, operand 1, single buffered']
    #allocation13 [shape = 's32[1]{0}', space=sflag, size = 0x4, scoped, tag = 'scoped memory for tpu_custom_call.1']
    #allocation14 [shape = 'u8[49152]{0}', space=vmem, size = 0xc000, scoped, tag = 'output window, operand 2, single buffered']
    #allocation15 [shape = 'u8[512]{0}', space=smem, size = 0x200, scoped, tag = 'output window, operand 3, single buffered']
    %14 = vsyncpa [#allocation5], 0
    %15 = vsyncpa [#allocation3], 0
    %16 = vsyncpa [#allocation9], 0
    %17 = vsyncpa [#allocation4], 0
    %18 = vsyncpa [#allocation13], 0
    %19 = vsyncpa [#allocation6], 0
    // Predicated region
    $region2: #{tpu_custom_call.1} parent=1 // pred_check
      _
    $region3: #{tpu_custom_call.1} parent=1 // pred_check_branch
      %21 = sbr.rel (0) target = $region5
    $region4: #{tpu_custom_call.1} parent=1 // pred_region
      %23 = vsyncadd [#allocation5], 0
      %s25 = sshll.u32 %s0, 4
      %s26 = int_to_ptr.hbm [resolvable:$true] %s25
      %28 = dma.hbm_to_smem %s26, 16, [#allocation2], [#allocation5]
    $region5: #{tpu_custom_call.1} parent=1 // pred_fallthru
      _
    // Predicated region
    $region6: #{tpu_custom_call.1} parent=1 // pred_check
      _
    $region7: #{tpu_custom_call.1} parent=1 // pred_check_branch
      %30 = sbr.rel (0) target = $region9
    $region8: #{tpu_custom_call.1} parent=1 // pred_region
      %32 = vsyncadd [#allocation3], 0
      %s33 = sshll.u32 %s1, 4
      %s34 = int_to_ptr.hbm [resolvable:$true] %s33
      %s35 = sshll.u32 [#allocation7], 4
      %s36 = int_to_ptr.vmem [resolvable:$true] %s35
      %41 = dma.hbm_to_vmem [thread:$0]  %s34, 3840, %s36, [#allocation3], 256, 256, 16
    $region9: #{tpu_custom_call.1} parent=1 // pred_fallthru
      _
    // Predicated region
    $region10: #{tpu_custom_call.1} parent=1 // pred_check
      _
    $region11: #{tpu_custom_call.1} parent=1 // pred_check_branch
      %43 = sbr.rel (0) target = $region13
    $region12: #{tpu_custom_call.1} parent=1 // pred_region
      %45 = vsyncadd [#allocation9], 0
      %s46 = sshll.u32 %s2, 4
      %s47 = int_to_ptr.hbm [resolvable:$true] %s46
      %s48 = sshll.u32 [#allocation8], 4
      %s49 = int_to_ptr.vmem [resolvable:$true] %s48
      %54 = dma.hbm_to_vmem [thread:$0]  %s47, 3840, %s49, [#allocation9], 256, 256, 16
    $region13: #{tpu_custom_call.1} parent=1 // pred_fallthru
      _
    // Predicated region
    $region14: #{tpu_custom_call.1} parent=1 // pred_check
      _
    $region15: #{tpu_custom_call.1} parent=1 // pred_check_branch
      %56 = sbr.rel (0) target = $region17
    $region16: #{tpu_custom_call.1} parent=1 // pred_region
      %58 = vsyncadd [#allocation9], 0
      %s59 = sshll.u32 %s3, 4
      %s60 = int_to_ptr.hbm [resolvable:$true] %s59
      %s61 = sshll.u32 [#allocation10], 4
      %s62 = int_to_ptr.vmem [resolvable:$true] %s61
      %67 = dma.hbm_to_vmem [thread:$0]  %s60, 1536, %s62, [#allocation9], 128, 128, 8
    $region17: #{tpu_custom_call.1} parent=1 // pred_fallthru
      _
    // Predicated region
    $region18: #{tpu_custom_call.1} parent=1 // pred_check
      _
    $region19: #{tpu_custom_call.1} parent=1 // pred_check_branch
      %69 = sbr.rel (0) target = $region21
    $region20: #{tpu_custom_call.1} parent=1 // pred_region
      _
    $region21: #{tpu_custom_call.1} parent=1 // pred_fallthru
      _
    // Predicated region
    $region22: #{tpu_custom_call.1} parent=1 // pred_check
      _
    $region23: #{tpu_custom_call.1} parent=1 // pred_check_branch
      %71 = sbr.rel (0) target = $region25
    $region24: #{tpu_custom_call.1} parent=1 // pred_region
      %73 = dma.done [#allocation5], 16
    $region25: #{tpu_custom_call.1} parent=1 // pred_fallthru
      _
    // Predicated region
    $region26: #{tpu_custom_call.1} parent=1 // pred_check
      _
    $region27: #{tpu_custom_call.1} parent=1 // pred_check_branch
      %75 = sbr.rel (0) target = $region29
    $region28: #{tpu_custom_call.1} parent=1 // pred_region
      %77 = dma.done [#allocation3], 3840
    $region29: #{tpu_custom_call.1} parent=1 // pred_fallthru
      _
    // Predicated region
    $region30: #{tpu_custom_call.1} parent=1 // pred_check
      _
    $region31: #{tpu_custom_call.1} parent=1 // pred_check_branch
      %79 = sbr.rel (0) target = $region33
    $region32: #{tpu_custom_call.1} parent=1 // pred_region
      %81 = dma.done [#allocation9], 3840
    $region33: #{tpu_custom_call.1} parent=1 // pred_fallthru
      _
    // Predicated region
    $region34: #{tpu_custom_call.1} parent=1 // pred_check
      _
    $region35: #{tpu_custom_call.1} parent=1 // pred_check_branch
      %83 = sbr.rel (0) target = $region37
    $region36: #{tpu_custom_call.1} parent=1 // pred_region
      %85 = dma.done [#allocation9], 1536
    $region37: #{tpu_custom_call.1} parent=1 // pred_fallthru
      _
    %86 = sfence
    %s87 = sld [smem:[#allocation2]]
    %s88 = sld [smem:[#allocation2 + $0x1]]
    %s89 = sld [smem:[#allocation2 + $0x2]]
    %v90 = vld [vmem:[#allocation7] sm:$0xff]
    %v91 = vld [vmem:[#allocation7 + $0x8] sm:$0xff]
    %v92 = vld [vmem:[#allocation7 + $0x10] sm:$0xff]
    %v93 = vld [vmem:[#allocation7 + $0x18] sm:$0xff]
    %v94 = vld [vmem:[#allocation7 + $0x20] sm:$0xff]
    %v95 = vld [vmem:[#allocation7 + $0x28] sm:$0xff]
    %v96 = vld [vmem:[#allocation7 + $0x30] sm:$0xff]
    %v97 = vld [vmem:[#allocation7 + $0x38] sm:$0xff]
    %v98 = vld [vmem:[#allocation7 + $0x40] sm:$0xf]
    %v99 = vld [vmem:[#allocation7 + $0x48] sm:$0xf]
    %v100 = vld [vmem:[#allocation7 + $0x50] sm:$0xff]
    %v101 = vld [vmem:[#allocation7 + $0x58] sm:$0xff]
    %v102 = vld [vmem:[#allocation7 + $0x60] sm:$0xff]
    %v103 = vld [vmem:[#allocation7 + $0x68] sm:$0xff]
    %v104 = vld [vmem:[#allocation7 + $0x70] sm:$0xff]
    %v105 = vld [vmem:[#allocation7 + $0x78] sm:$0xff]
    %v106 = vld [vmem:[#allocation7 + $0x80] sm:$0xff]
    %v107 = vld [vmem:[#allocation7 + $0x88] sm:$0xff]
    %v108 = vld [vmem:[#allocation7 + $0x90] sm:$0xf]
    %v109 = vld [vmem:[#allocation7 + $0x98] sm:$0xf]
    %v110 = vld [vmem:[#allocation7 + $0xa0] sm:$0xff]
    %v111 = vld [vmem:[#allocation7 + $0xa8] sm:$0xff]
    %v112 = vld [vmem:[#allocation7 + $0xb0] sm:$0xff]
    %v113 = vld [vmem:[#allocation7 + $0xb8] sm:$0xff]
    %v114 = vld [vmem:[#allocation7 + $0xc0] sm:$0xff]
    %v115 = vld [vmem:[#allocation7 + $0xc8] sm:$0xff]
    %v116 = vld [vmem:[#allocation7 + $0xd0] sm:$0xff]
    %v117 = vld [vmem:[#allocation7 + $0xd8] sm:$0xff]
    %v118 = vld [vmem:[#allocation7 + $0xe0] sm:$0xf]
    %v119 = vld [vmem:[#allocation7 + $0xe8] sm:$0xf]
    %v120 = vld [vmem:[#allocation8] sm:$0xff]
    %v121 = vld [vmem:[#allocation8 + $0x8] sm:$0xff]
    %v122 = vld [vmem:[#allocation8 + $0x10] sm:$0xff]
    %v123 = vld [vmem:[#allocation8 + $0x18] sm:$0xff]
    %v124 = vld [vmem:[#allocation8 + $0x20] sm:$0xff]
    %v125 = vld [vmem:[#allocation8 + $0x28] sm:$0xff]
    %v126 = vld [vmem:[#allocation8 + $0x30] sm:$0xff]
    %v127 = vld [vmem:[#allocation8 + $0x38] sm:$0xff]
    %v128 = vld [vmem:[#allocation8 + $0x40] sm:$0xf]
    %v129 = vld [vmem:[#allocation8 + $0x48] sm:$0xf]
    %v130 = vld [vmem:[#allocation8 + $0x50] sm:$0xff]
    %v131 = vld [vmem:[#allocation8 + $0x58] sm:$0xff]
    %v132 = vld [vmem:[#allocation8 + $0x60] sm:$0xff]
    %v133 = vld [vmem:[#allocation8 + $0x68] sm:$0xff]
    %v134 = vld [vmem:[#allocation8 + $0x70] sm:$0xff]
    %v135 = vld [vmem:[#allocation8 + $0x78] sm:$0xff]
    %v136 = vld [vmem:[#allocation8 + $0x80] sm:$0xff]
    %v137 = vld [vmem:[#allocation8 + $0x88] sm:$0xff]
    %v138 = vld [vmem:[#allocation8 + $0x90] sm:$0xf]
    %v139 = vld [vmem:[#allocation8 + $0x98] sm:$0xf]
    %v140 = vld [vmem:[#allocation8 + $0xa0] sm:$0xff]
    %v141 = vld [vmem:[#allocation8 + $0xa8] sm:$0xff]
    %v142 = vld [vmem:[#allocation8 + $0xb0] sm:$0xff]
    %v143 = vld [vmem:[#allocation8 + $0xb8] sm:$0xff]
    %v144 = vld [vmem:[#allocation8 + $0xc0] sm:$0xff]
    %v145 = vld [vmem:[#allocation8 + $0xc8] sm:$0xff]
    %v146 = vld [vmem:[#allocation8 + $0xd0] sm:$0xff]
    %v147 = vld [vmem:[#allocation8 + $0xd8] sm:$0xff]
    %v148 = vld [vmem:[#allocation8 + $0xe0] sm:$0xf]
    %v149 = vld [vmem:[#allocation8 + $0xe8] sm:$0xf]
    %vm180 = vcmask 1046528
    %v181 = vrot.slane %v90, 1
    %v182 = vrot.slane %v92, 1
    %v183 = vsel %vm180, %v181, %v182
    %v184 = vrot.slane %v91, 1
    %v185 = vrot.slane %v93, 1
    %v186 = vsel %vm180, %v184, %v185
    %v187 = vrot.slane %v94, 1
    %v188 = vsel %vm180, %v182, %v187
    %v189 = vrot.slane %v95, 1
    %v190 = vsel %vm180, %v185, %v189
    %v191 = vrot.slane %v96, 1
    %v192 = vsel %vm180, %v187, %v191
    %v193 = vrot.slane %v97, 1
    %v194 = vsel %vm180, %v189, %v193
    %v195 = vrot.slane %v98, 1
    %v196 = vsel %vm180, %v191, %v195
    %v197 = vrot.slane %v99, 1
    %v198 = vsel %vm180, %v193, %v197
    %v199 = vrot.slane %v100, 1
    %v200 = vrot.slane %v102, 1
    %v201 = vsel %vm180, %v199, %v200
    %v202 = vrot.slane %v101, 1
    %v203 = vrot.slane %v103, 1
    %v204 = vsel %vm180, %v202, %v203
    %v205 = vrot.slane %v104, 1
    %v206 = vsel %vm180, %v200, %v205
    %v207 = vrot.slane %v105, 1
    %v208 = vsel %vm180, %v203, %v207
    %v209 = vrot.slane %v106, 1
    %v210 = vsel %vm180, %v205, %v209
    %v211 = vrot.slane %v107, 1
    %v212 = vsel %vm180, %v207, %v211
    %v213 = vrot.slane %v108, 1
    %v214 = vsel %vm180, %v209, %v213
    %v215 = vrot.slane %v109, 1
    %v216 = vsel %vm180, %v211, %v215
    %v217 = vrot.slane %v110, 1
    %v218 = vrot.slane %v112, 1
    %v219 = vsel %vm180, %v217, %v218
    %v220 = vrot.slane %v111, 1
    %v221 = vrot.slane %v113, 1
    %v222 = vsel %vm180, %v220, %v221
    %v223 = vrot.slane %v114, 1
    %v224 = vsel %vm180, %v218, %v223
    %v225 = vrot.slane %v115, 1
    %v226 = vsel %vm180, %v221, %v225
    %v227 = vrot.slane %v116, 1
    %v228 = vsel %vm180, %v223, %v227
    %v229 = vrot.slane %v117, 1
    %v230 = vsel %vm180, %v225, %v229
    %v231 = vrot.slane %v118, 1
    %v232 = vsel %vm180, %v227, %v231
    %v233 = vrot.slane %v119, 1
    %v234 = vsel %vm180, %v229, %v233
    %v259 = vadd.f32 %v90, %v183
    %v260 = vadd.f32 %v91, %v186
    %v261 = vadd.f32 %v92, %v188
    %v262 = vadd.f32 %v93, %v190
    %v263 = vadd.f32 %v94, %v192
    %v264 = vadd.f32 %v95, %v194
    %v265 = vadd.f32 %v96, %v196
    %v266 = vadd.f32 %v97, %v198
    %v267 = vadd.f32 %v100, %v201
    %v268 = vadd.f32 %v101, %v204
    %v269 = vadd.f32 %v102, %v206
    %v270 = vadd.f32 %v103, %v208
    %v271 = vadd.f32 %v104, %v210
    %v272 = vadd.f32 %v105, %v212
    %v273 = vadd.f32 %v106, %v214
    %v274 = vadd.f32 %v107, %v216
    %v275 = vadd.f32 %v110, %v219
    %v276 = vadd.f32 %v111, %v222
    %v277 = vadd.f32 %v112, %v224
    %v278 = vadd.f32 %v113, %v226
    %v279 = vadd.f32 %v114, %v228
    %v280 = vadd.f32 %v115, %v230
    %v281 = vadd.f32 %v116, %v232
    %v282 = vadd.f32 %v117, %v234
    %vm283 = vcmask 1045504
    %v284 = vrot.slane %v90, 2
    %v285 = vrot.slane %v92, 2
    %v286 = vsel %vm283, %v284, %v285
    %v287 = vrot.slane %v91, 2
    %v288 = vrot.slane %v93, 2
    %v289 = vsel %vm283, %v287, %v288
    %v290 = vrot.slane %v94, 2
    %v291 = vsel %vm283, %v285, %v290
    %v292 = vrot.slane %v95, 2
    %v293 = vsel %vm283, %v288, %v292
    %v294 = vrot.slane %v96, 2
    %v295 = vsel %vm283, %v290, %v294
    %v296 = vrot.slane %v97, 2
    %v297 = vsel %vm283, %v292, %v296
    %v298 = vrot.slane %v98, 2
    %v299 = vsel %vm283, %v294, %v298
    %v300 = vrot.slane %v99, 2
    %v301 = vsel %vm283, %v296, %v300
    %v302 = vrot.slane %v100, 2
    %v303 = vrot.slane %v102, 2
    %v304 = vsel %vm283, %v302, %v303
    %v305 = vrot.slane %v101, 2
    %v306 = vrot.slane %v103, 2
    %v307 = vsel %vm283, %v305, %v306
    %v308 = vrot.slane %v104, 2
    %v309 = vsel %vm283, %v303, %v308
    %v310 = vrot.slane %v105, 2
    %v311 = vsel %vm283, %v306, %v310
    %v312 = vrot.slane %v106, 2
    %v313 = vsel %vm283, %v308, %v312
    %v314 = vrot.slane %v107, 2
    %v315 = vsel %vm283, %v310, %v314
    %v316 = vrot.slane %v108, 2
    %v317 = vsel %vm283, %v312, %v316
    %v318 = vrot.slane %v109, 2
    %v319 = vsel %vm283, %v314, %v318
    %v320 = vrot.slane %v110, 2
    %v321 = vrot.slane %v112, 2
    %v322 = vsel %vm283, %v320, %v321
    %v323 = vrot.slane %v111, 2
    %v324 = vrot.slane %v113, 2
    %v325 = vsel %vm283, %v323, %v324
    %v326 = vrot.slane %v114, 2
    %v327 = vsel %vm283, %v321, %v326
    %v328 = vrot.slane %v115, 2
    %v329 = vsel %vm283, %v324, %v328
    %v330 = vrot.slane %v116, 2
    %v331 = vsel %vm283, %v326, %v330
    %v332 = vrot.slane %v117, 2
    %v333 = vsel %vm283, %v328, %v332
    %v334 = vrot.slane %v118, 2
    %v335 = vsel %vm283, %v330, %v334
    %v336 = vrot.slane %v119, 2
    %v337 = vsel %vm283, %v332, %v336
    %v362 = vadd.f32 %v259, %v286
    %v363 = vadd.f32 %v260, %v289
    %v364 = vadd.f32 %v261, %v291
    %v365 = vadd.f32 %v262, %v293
    %v366 = vadd.f32 %v263, %v295
    %v367 = vadd.f32 %v264, %v297
    %v368 = vadd.f32 %v265, %v299
    %v369 = vadd.f32 %v266, %v301
    %v370 = vadd.f32 %v267, %v304
    %v371 = vadd.f32 %v268, %v307
    %v372 = vadd.f32 %v269, %v309
    %v373 = vadd.f32 %v270, %v311
    %v374 = vadd.f32 %v271, %v313
    %v375 = vadd.f32 %v272, %v315
    %v376 = vadd.f32 %v273, %v317
    %v377 = vadd.f32 %v274, %v319
    %v378 = vadd.f32 %v275, %v322
    %v379 = vadd.f32 %v276, %v325
    %v380 = vadd.f32 %v277, %v327
    %v381 = vadd.f32 %v278, %v329
    %v382 = vadd.f32 %v279, %v331
    %v383 = vadd.f32 %v280, %v333
    %v384 = vadd.f32 %v281, %v335
    %v385 = vadd.f32 %v282, %v337
    %vm386 = vcmask 1044480
    %v387 = vrot.slane %v90, 3
    %v388 = vrot.slane %v92, 3
    %v389 = vsel %vm386, %v387, %v388
    %v390 = vrot.slane %v91, 3
    %v391 = vrot.slane %v93, 3
    %v392 = vsel %vm386, %v390, %v391
    %v393 = vrot.slane %v94, 3
    %v394 = vsel %vm386, %v388, %v393
    %v395 = vrot.slane %v95, 3
    %v396 = vsel %vm386, %v391, %v395
    %v397 = vrot.slane %v96, 3
    %v398 = vsel %vm386, %v393, %v397
    %v399 = vrot.slane %v97, 3
    %v400 = vsel %vm386, %v395, %v399
    %v401 = vrot.slane %v98, 3
    %v402 = vsel %vm386, %v397, %v401
    %v403 = vrot.slane %v99, 3
    %v404 = vsel %vm386, %v399, %v403
    %v405 = vrot.slane %v100, 3
    %v406 = vrot.slane %v102, 3
    %v407 = vsel %vm386, %v405, %v406
    %v408 = vrot.slane %v101, 3
    %v409 = vrot.slane %v103, 3
    %v410 = vsel %vm386, %v408, %v409
    %v411 = vrot.slane %v104, 3
    %v412 = vsel %vm386, %v406, %v411
    %v413 = vrot.slane %v105, 3
    %v414 = vsel %vm386, %v409, %v413
    %v415 = vrot.slane %v106, 3
    %v416 = vsel %vm386, %v411, %v415
    %v417 = vrot.slane %v107, 3
    %v418 = vsel %vm386, %v413, %v417
    %v419 = vrot.slane %v108, 3
    %v420 = vsel %vm386, %v415, %v419
    %v421 = vrot.slane %v109, 3
    %v422 = vsel %vm386, %v417, %v421
    %v423 = vrot.slane %v110, 3
    %v424 = vrot.slane %v112, 3
    %v425 = vsel %vm386, %v423, %v424
    %v426 = vrot.slane %v111, 3
    %v427 = vrot.slane %v113, 3
    %v428 = vsel %vm386, %v426, %v427
    %v429 = vrot.slane %v114, 3
    %v430 = vsel %vm386, %v424, %v429
    %v431 = vrot.slane %v115, 3
    %v432 = vsel %vm386, %v427, %v431
    %v433 = vrot.slane %v116, 3
    %v434 = vsel %vm386, %v429, %v433
    %v435 = vrot.slane %v117, 3
    %v436 = vsel %vm386, %v431, %v435
    %v437 = vrot.slane %v118, 3
    %v438 = vsel %vm386, %v433, %v437
    %v439 = vrot.slane %v119, 3
    %v440 = vsel %vm386, %v435, %v439
    %v465 = vadd.f32 %v362, %v389
    %v466 = vadd.f32 %v363, %v392
    %v467 = vadd.f32 %v364, %v394
    %v468 = vadd.f32 %v365, %v396
    %v469 = vadd.f32 %v366, %v398
    %v470 = vadd.f32 %v367, %v400
    %v471 = vadd.f32 %v368, %v402
    %v472 = vadd.f32 %v369, %v404
    %v473 = vadd.f32 %v370, %v407
    %v474 = vadd.f32 %v371, %v410
    %v475 = vadd.f32 %v372, %v412
    %v476 = vadd.f32 %v373, %v414
    %v477 = vadd.f32 %v374, %v416
    %v478 = vadd.f32 %v375, %v418
    %v479 = vadd.f32 %v376, %v420
    %v480 = vadd.f32 %v377, %v422
    %v481 = vadd.f32 %v378, %v425
    %v482 = vadd.f32 %v379, %v428
    %v483 = vadd.f32 %v380, %v430
    %v484 = vadd.f32 %v381, %v432
    %v485 = vadd.f32 %v382, %v434
    %v486 = vadd.f32 %v383, %v436
    %v487 = vadd.f32 %v384, %v438
    %v488 = vadd.f32 %v385, %v440
    %vm489 = vcmask 1043456
    %v490 = vrot.slane %v90, 4
    %v491 = vrot.slane %v92, 4
    %v492 = vsel %vm489, %v490, %v491
    %v493 = vrot.slane %v91, 4
    %v494 = vrot.slane %v93, 4
    %v495 = vsel %vm489, %v493, %v494
    %v496 = vrot.slane %v94, 4
    %v497 = vsel %vm489, %v491, %v496
    %v498 = vrot.slane %v95, 4
    %v499 = vsel %vm489, %v494, %v498
    %v500 = vrot.slane %v96, 4
    %v501 = vsel %vm489, %v496, %v500
    %v502 = vrot.slane %v97, 4
    %v503 = vsel %vm489, %v498, %v502
    %v504 = vrot.slane %v98, 4
    %v505 = vsel %vm489, %v500, %v504
    %v506 = vrot.slane %v99, 4
    %v507 = vsel %vm489, %v502, %v506
    %v508 = vrot.slane %v100, 4
    %v509 = vrot.slane %v102, 4
    %v510 = vsel %vm489, %v508, %v509
    %v511 = vrot.slane %v101, 4
    %v512 = vrot.slane %v103, 4
    %v513 = vsel %vm489, %v511, %v512
    %v514 = vrot.slane %v104, 4
    %v515 = vsel %vm489, %v509, %v514
    %v516 = vrot.slane %v105, 4
    %v517 = vsel %vm489, %v512, %v516
    %v518 = vrot.slane %v106, 4
    %v519 = vsel %vm489, %v514, %v518
    %v520 = vrot.slane %v107, 4
    %v521 = vsel %vm489, %v516, %v520
    %v522 = vrot.slane %v108, 4
    %v523 = vsel %vm489, %v518, %v522
    %v524 = vrot.slane %v109, 4
    %v525 = vsel %vm489, %v520, %v524
    %v526 = vrot.slane %v110, 4
    %v527 = vrot.slane %v112, 4
    %v528 = vsel %vm489, %v526, %v527
    %v529 = vrot.slane %v111, 4
    %v530 = vrot.slane %v113, 4
    %v531 = vsel %vm489, %v529, %v530
    %v532 = vrot.slane %v114, 4
    %v533 = vsel %vm489, %v527, %v532
    %v534 = vrot.slane %v115, 4
    %v535 = vsel %vm489, %v530, %v534
    %v536 = vrot.slane %v116, 4
    %v537 = vsel %vm489, %v532, %v536
    %v538 = vrot.slane %v117, 4
    %v539 = vsel %vm489, %v534, %v538
    %v540 = vrot.slane %v118, 4
    %v541 = vsel %vm489, %v536, %v540
    %v542 = vrot.slane %v119, 4
    %v543 = vsel %vm489, %v538, %v542
    %v568 = vadd.f32 %v465, %v492
    %v569 = vadd.f32 %v466, %v495
    %v570 = vadd.f32 %v467, %v497
    %v571 = vadd.f32 %v468, %v499
    %v572 = vadd.f32 %v469, %v501
    %v573 = vadd.f32 %v470, %v503
    %v574 = vadd.f32 %v471, %v505
    %v575 = vadd.f32 %v472, %v507
    %v576 = vadd.f32 %v473, %v510
    %v577 = vadd.f32 %v474, %v513
    %v578 = vadd.f32 %v475, %v515
    %v579 = vadd.f32 %v476, %v517
    %v580 = vadd.f32 %v477, %v519
    %v581 = vadd.f32 %v478, %v521
    %v582 = vadd.f32 %v479, %v523
    %v583 = vadd.f32 %v480, %v525
    %v584 = vadd.f32 %v481, %v528
    %v585 = vadd.f32 %v482, %v531
    %v586 = vadd.f32 %v483, %v533
    %v587 = vadd.f32 %v484, %v535
    %v588 = vadd.f32 %v485, %v537
    %v589 = vadd.f32 %v486, %v539
    %v590 = vadd.f32 %v487, %v541
    %v591 = vadd.f32 %v488, %v543
    %616 = vrot.lane.b32.xlu0 %v568, 127
    %v617 = vpop.permute.xlu0 %616
    %618 = vrot.lane.b32.xlu0 %v569, 127
    %v619 = vpop.permute.xlu0 %618
    %620 = vrot.lane.b32.xlu0 %v570, 127
    %v621 = vpop.permute.xlu0 %620
    %622 = vrot.lane.b32.xlu0 %v571, 127
    %v623 = vpop.permute.xlu0 %622
    %624 = vrot.lane.b32.xlu0 %v572, 127
    %v625 = vpop.permute.xlu0 %624
    %626 = vrot.lane.b32.xlu0 %v573, 127
    %v627 = vpop.permute.xlu0 %626
    %628 = vrot.lane.b32.xlu0 %v574, 127
    %v629 = vpop.permute.xlu0 %628
    %630 = vrot.lane.b32.xlu0 %v575, 127
    %v631 = vpop.permute.xlu0 %630
    %632 = vrot.lane.b32.xlu0 %v576, 127
    %v633 = vpop.permute.xlu0 %632
    %634 = vrot.lane.b32.xlu0 %v577, 127
    %v635 = vpop.permute.xlu0 %634
    %636 = vrot.lane.b32.xlu0 %v578, 127
    %v637 = vpop.permute.xlu0 %636
    %638 = vrot.lane.b32.xlu0 %v579, 127
    %v639 = vpop.permute.xlu0 %638
    %640 = vrot.lane.b32.xlu0 %v580, 127
    %v641 = vpop.permute.xlu0 %640
    %642 = vrot.lane.b32.xlu0 %v581, 127
    %v643 = vpop.permute.xlu0 %642
    %644 = vrot.lane.b32.xlu0 %v582, 127
    %v645 = vpop.permute.xlu0 %644
    %646 = vrot.lane.b32.xlu0 %v583, 127
    %v647 = vpop.permute.xlu0 %646
    %648 = vrot.lane.b32.xlu0 %v584, 127
    %v649 = vpop.permute.xlu0 %648
    %650 = vrot.lane.b32.xlu0 %v585, 127
    %v651 = vpop.permute.xlu0 %650
    %652 = vrot.lane.b32.xlu0 %v586, 127
    %v653 = vpop.permute.xlu0 %652
    %654 = vrot.lane.b32.xlu0 %v587, 127
    %v655 = vpop.permute.xlu0 %654
    %656 = vrot.lane.b32.xlu0 %v588, 127
    %v657 = vpop.permute.xlu0 %656
    %658 = vrot.lane.b32.xlu0 %v589, 127
    %v659 = vpop.permute.xlu0 %658
    %660 = vrot.lane.b32.xlu0 %v590, 127
    %v661 = vpop.permute.xlu0 %660
    %662 = vrot.lane.b32.xlu0 %v591, 127
    %v663 = vpop.permute.xlu0 %662
    %vm664 = vcmask 1039360
    %v665 = vsel %vm664, %v617, %v619
    %v666 = vsel %vm664, %v621, %v623
    %v667 = vsel %vm664, %v625, %v627
    %v668 = vsel %vm664, %v629, %v631
    %v669 = vsel %vm664, %v633, %v635
    %v670 = vsel %vm664, %v637, %v639
    %v671 = vsel %vm664, %v641, %v643
    %v672 = vsel %vm664, %v645, %v647
    %v673 = vsel %vm664, %v649, %v651
    %v674 = vsel %vm664, %v653, %v655
    %v675 = vsel %vm664, %v657, %v659
    %v676 = vsel %vm664, %v661, %v663
    %v689 = vadd.f32 %v568, %v665
    %v690 = vadd.f32 %v570, %v666
    %v691 = vadd.f32 %v572, %v667
    %v692 = vadd.f32 %v574, %v668
    %v693 = vadd.f32 %v576, %v669
    %v694 = vadd.f32 %v578, %v670
    %v695 = vadd.f32 %v580, %v671
    %v696 = vadd.f32 %v582, %v672
    %v697 = vadd.f32 %v584, %v673
    %v698 = vadd.f32 %v586, %v674
    %v699 = vadd.f32 %v588, %v675
    %v700 = vadd.f32 %v590, %v676
    %701 = vrot.lane.b32.xlu0 %v568, 126
    %v702 = vpop.permute.xlu0 %701
    %703 = vrot.lane.b32.xlu0 %v569, 126
    %v704 = vpop.permute.xlu0 %703
    %705 = vrot.lane.b32.xlu0 %v570, 126
    %v706 = vpop.permute.xlu0 %705
    %707 = vrot.lane.b32.xlu0 %v571, 126
    %v708 = vpop.permute.xlu0 %707
    %709 = vrot.lane.b32.xlu0 %v572, 126
    %v710 = vpop.permute.xlu0 %709
    %711 = vrot.lane.b32.xlu0 %v573, 126
    %v712 = vpop.permute.xlu0 %711
    %713 = vrot.lane.b32.xlu0 %v574, 126
    %v714 = vpop.permute.xlu0 %713
    %715 = vrot.lane.b32.xlu0 %v575, 126
    %v716 = vpop.permute.xlu0 %715
    %717 = vrot.lane.b32.xlu0 %v576, 126
    %v718 = vpop.permute.xlu0 %717
    %719 = vrot.lane.b32.xlu0 %v577, 126
    %v720 = vpop.permute.xlu0 %719
    %721 = vrot.lane.b32.xlu0 %v578, 126
    %v722 = vpop.permute.xlu0 %721
    %723 = vrot.lane.b32.xlu0 %v579, 126
    %v724 = vpop.permute.xlu0 %723
    %725 = vrot.lane.b32.xlu0 %v580, 126
    %v726 = vpop.permute.xlu0 %725
    %727 = vrot.lane.b32.xlu0 %v581, 126
    %v728 = vpop.permute.xlu0 %727
    %729 = vrot.lane.b32.xlu0 %v582, 126
    %v730 = vpop.permute.xlu0 %729
    %731 = vrot.lane.b32.xlu0 %v583, 126
    %v732 = vpop.permute.xlu0 %731
    %733 = vrot.lane.b32.xlu0 %v584, 126
    %v734 = vpop.permute.xlu0 %733
    %735 = vrot.lane.b32.xlu0 %v585, 126
    %v736 = vpop.permute.xlu0 %735
    %737 = vrot.lane.b32.xlu0 %v586, 126
    %v738 = vpop.permute.xlu0 %737
    %739 = vrot.lane.b32.xlu0 %v587, 126
    %v740 = vpop.permute.xlu0 %739
    %741 = vrot.lane.b32.xlu0 %v588, 126
    %v742 = vpop.permute.xlu0 %741
    %743 = vrot.lane.b32.xlu0 %v589, 126
    %v744 = vpop.permute.xlu0 %743
    %745 = vrot.lane.b32.xlu0 %v590, 126
    %v746 = vpop.permute.xlu0 %745
    %747 = vrot.lane.b32.xlu0 %v591, 126
    %v748 = vpop.permute.xlu0 %747
    %vm749 = vcmask 1031168
    %v750 = vsel %vm749, %v702, %v704
    %v751 = vsel %vm749, %v706, %v708
    %v752 = vsel %vm749, %v710, %v712
    %v753 = vsel %vm749, %v714, %v716
    %v754 = vsel %vm749, %v718, %v720
    %v755 = vsel %vm749, %v722, %v724
    %v756 = vsel %vm749, %v726, %v728
    %v757 = vsel %vm749, %v730, %v732
    %v758 = vsel %vm749, %v734, %v736
    %v759 = vsel %vm749, %v738, %v740
    %v760 = vsel %vm749, %v742, %v744
    %v761 = vsel %vm749, %v746, %v748
    %v774 = vadd.f32 %v689, %v750
    %v775 = vadd.f32 %v690, %v751
    %v776 = vadd.f32 %v691, %v752
    %v777 = vadd.f32 %v692, %v753
    %v778 = vadd.f32 %v693, %v754
    %v779 = vadd.f32 %v694, %v755
    %v780 = vadd.f32 %v695, %v756
    %v781 = vadd.f32 %v696, %v757
    %v782 = vadd.f32 %v697, %v758
    %v783 = vadd.f32 %v698, %v759
    %v784 = vadd.f32 %v699, %v760
    %v785 = vadd.f32 %v700, %v761
    %786 = vrot.lane.b32.xlu0 %v568, 125
    %v787 = vpop.permute.xlu0 %786
    %788 = vrot.lane.b32.xlu0 %v569, 125
    %v789 = vpop.permute.xlu0 %788
    %790 = vrot.lane.b32.xlu0 %v570, 125
    %v791 = vpop.permute.xlu0 %790
    %792 = vrot.lane.b32.xlu0 %v571, 125
    %v793 = vpop.permute.xlu0 %792
    %794 = vrot.lane.b32.xlu0 %v572, 125
    %v795 = vpop.permute.xlu0 %794
    %796 = vrot.lane.b32.xlu0 %v573, 125
    %v797 = vpop.permute.xlu0 %796
    %798 = vrot.lane.b32.xlu0 %v574, 125
    %v799 = vpop.permute.xlu0 %798
    %800 = vrot.lane.b32.xlu0 %v575, 125
    %v801 = vpop.permute.xlu0 %800
    %802 = vrot.lane.b32.xlu0 %v576, 125
    %v803 = vpop.permute.xlu0 %802
    %804 = vrot.lane.b32.xlu0 %v577, 125
    %v805 = vpop.permute.xlu0 %804
    %806 = vrot.lane.b32.xlu0 %v578, 125
    %v807 = vpop.permute.xlu0 %806
    %808 = vrot.lane.b32.xlu0 %v579, 125
    %v809 = vpop.permute.xlu0 %808
    %810 = vrot.lane.b32.xlu0 %v580, 125
    %v811 = vpop.permute.xlu0 %810
    %812 = vrot.lane.b32.xlu0 %v581, 125
    %v813 = vpop.permute.xlu0 %812
    %814 = vrot.lane.b32.xlu0 %v582, 125
    %v815 = vpop.permute.xlu0 %814
    %816 = vrot.lane.b32.xlu0 %v583, 125
    %v817 = vpop.permute.xlu0 %816
    %818 = vrot.lane.b32.xlu0 %v584, 125
    %v819 = vpop.permute.xlu0 %818
    %820 = vrot.lane.b32.xlu0 %v585, 125
    %v821 = vpop.permute.xlu0 %820
    %822 = vrot.lane.b32.xlu0 %v586, 125
    %v823 = vpop.permute.xlu0 %822
    %824 = vrot.lane.b32.xlu0 %v587, 125
    %v825 = vpop.permute.xlu0 %824
    %826 = vrot.lane.b32.xlu0 %v588, 125
    %v827 = vpop.permute.xlu0 %826
    %828 = vrot.lane.b32.xlu0 %v589, 125
    %v829 = vpop.permute.xlu0 %828
    %830 = vrot.lane.b32.xlu0 %v590, 125
    %v831 = vpop.permute.xlu0 %830
    %832 = vrot.lane.b32.xlu0 %v591, 125
    %v833 = vpop.permute.xlu0 %832
    %vm834 = vcmask 1022976
    %v835 = vsel %vm834, %v787, %v789
    %v836 = vsel %vm834, %v791, %v793
    %v837 = vsel %vm834, %v795, %v797
    %v838 = vsel %vm834, %v799, %v801
    %v839 = vsel %vm834, %v803, %v805
    %v840 = vsel %vm834, %v807, %v809
    %v841 = vsel %vm834, %v811, %v813
    %v842 = vsel %vm834, %v815, %v817
    %v843 = vsel %vm834, %v819, %v821
    %v844 = vsel %vm834, %v823, %v825
    %v845 = vsel %vm834, %v827, %v829
    %v846 = vsel %vm834, %v831, %v833
    %v859 = vadd.f32 %v774, %v835
    %v860 = vadd.f32 %v775, %v836
    %v861 = vadd.f32 %v776, %v837
    %v862 = vadd.f32 %v777, %v838
    %v863 = vadd.f32 %v778, %v839
    %v864 = vadd.f32 %v779, %v840
    %v865 = vadd.f32 %v780, %v841
    %v866 = vadd.f32 %v781, %v842
    %v867 = vadd.f32 %v782, %v843
    %v868 = vadd.f32 %v783, %v844
    %v869 = vadd.f32 %v784, %v845
    %v870 = vadd.f32 %v785, %v846
    %871 = vrot.lane.b32.xlu0 %v568, 124
    %v872 = vpop.permute.xlu0 %871
    %873 = vrot.lane.b32.xlu0 %v569, 124
    %v874 = vpop.permute.xlu0 %873
    %875 = vrot.lane.b32.xlu0 %v570, 124
    %v876 = vpop.permute.xlu0 %875
    %877 = vrot.lane.b32.xlu0 %v571, 124
    %v878 = vpop.permute.xlu0 %877
    %879 = vrot.lane.b32.xlu0 %v572, 124
    %v880 = vpop.permute.xlu0 %879
    %881 = vrot.lane.b32.xlu0 %v573, 124
    %v882 = vpop.permute.xlu0 %881
    %883 = vrot.lane.b32.xlu0 %v574, 124
    %v884 = vpop.permute.xlu0 %883
    %885 = vrot.lane.b32.xlu0 %v575, 124
    %v886 = vpop.permute.xlu0 %885
    %887 = vrot.lane.b32.xlu0 %v576, 124
    %v888 = vpop.permute.xlu0 %887
    %889 = vrot.lane.b32.xlu0 %v577, 124
    %v890 = vpop.permute.xlu0 %889
    %891 = vrot.lane.b32.xlu0 %v578, 124
    %v892 = vpop.permute.xlu0 %891
    %893 = vrot.lane.b32.xlu0 %v579, 124
    %v894 = vpop.permute.xlu0 %893
    %895 = vrot.lane.b32.xlu0 %v580, 124
    %v896 = vpop.permute.xlu0 %895
    %897 = vrot.lane.b32.xlu0 %v581, 124
    %v898 = vpop.permute.xlu0 %897
    %899 = vrot.lane.b32.xlu0 %v582, 124
    %v900 = vpop.permute.xlu0 %899
    %901 = vrot.lane.b32.xlu0 %v583, 124
    %v902 = vpop.permute.xlu0 %901
    %903 = vrot.lane.b32.xlu0 %v584, 124
    %v904 = vpop.permute.xlu0 %903
    %905 = vrot.lane.b32.xlu0 %v585, 124
    %v906 = vpop.permute.xlu0 %905
    %907 = vrot.lane.b32.xlu0 %v586, 124
    %v908 = vpop.permute.xlu0 %907
    %909 = vrot.lane.b32.xlu0 %v587, 124
    %v910 = vpop.permute.xlu0 %909
    %911 = vrot.lane.b32.xlu0 %v588, 124
    %v912 = vpop.permute.xlu0 %911
    %913 = vrot.lane.b32.xlu0 %v589, 124
    %v914 = vpop.permute.xlu0 %913
    %915 = vrot.lane.b32.xlu0 %v590, 124
    %v916 = vpop.permute.xlu0 %915
    %917 = vrot.lane.b32.xlu0 %v591, 124
    %v918 = vpop.permute.xlu0 %917
    %vm919 = vcmask 1014784
    %v920 = vsel %vm919, %v872, %v874
    %v921 = vsel %vm919, %v876, %v878
    %v922 = vsel %vm919, %v880, %v882
    %v923 = vsel %vm919, %v884, %v886
    %v924 = vsel %vm919, %v888, %v890
    %v925 = vsel %vm919, %v892, %v894
    %v926 = vsel %vm919, %v896, %v898
    %v927 = vsel %vm919, %v900, %v902
    %v928 = vsel %vm919, %v904, %v906
    %v929 = vsel %vm919, %v908, %v910
    %v930 = vsel %vm919, %v912, %v914
    %v931 = vsel %vm919, %v916, %v918
    %v944 = vadd.f32 %v859, %v920
    %v945 = vadd.f32 %v860, %v921
    %v946 = vadd.f32 %v861, %v922
    %v947 = vadd.f32 %v862, %v923
    %v948 = vadd.f32 %v863, %v924
    %v949 = vadd.f32 %v864, %v925
    %v950 = vadd.f32 %v865, %v926
    %v951 = vadd.f32 %v866, %v927
    %v952 = vadd.f32 %v867, %v928
    %v953 = vadd.f32 %v868, %v929
    %v954 = vadd.f32 %v869, %v930
    %v955 = vadd.f32 %v870, %v931
    %v956 = vmul.f32 %v90, %v90
    %v957 = vmul.f32 %v91, %v91
    %v958 = vmul.f32 %v92, %v92
    %v959 = vmul.f32 %v93, %v93
    %v960 = vmul.f32 %v94, %v94
    %v961 = vmul.f32 %v95, %v95
    %v962 = vmul.f32 %v96, %v96
    %v963 = vmul.f32 %v97, %v97
    %v964 = vmul.f32 %v98, %v98
    %v965 = vmul.f32 %v99, %v99
    %v966 = vmul.f32 %v100, %v100
    %v967 = vmul.f32 %v101, %v101
    %v968 = vmul.f32 %v102, %v102
    %v969 = vmul.f32 %v103, %v103
    %v970 = vmul.f32 %v104, %v104
    %v971 = vmul.f32 %v105, %v105
    %v972 = vmul.f32 %v106, %v106
    %v973 = vmul.f32 %v107, %v107
    %v974 = vmul.f32 %v108, %v108
    %v975 = vmul.f32 %v109, %v109
    %v976 = vmul.f32 %v110, %v110
    %v977 = vmul.f32 %v111, %v111
    %v978 = vmul.f32 %v112, %v112
    %v979 = vmul.f32 %v113, %v113
    %v980 = vmul.f32 %v114, %v114
    %v981 = vmul.f32 %v115, %v115
    %v982 = vmul.f32 %v116, %v116
    %v983 = vmul.f32 %v117, %v117
    %v984 = vmul.f32 %v118, %v118
    %v985 = vmul.f32 %v119, %v119
    %v1016 = vrot.slane %v956, 1
    %v1017 = vrot.slane %v958, 1
    %v1018 = vsel %vm180, %v1016, %v1017
    %v1019 = vrot.slane %v957, 1
    %v1020 = vrot.slane %v959, 1
    %v1021 = vsel %vm180, %v1019, %v1020
    %v1022 = vrot.slane %v960, 1
    %v1023 = vsel %vm180, %v1017, %v1022
    %v1024 = vrot.slane %v961, 1
    %v1025 = vsel %vm180, %v1020, %v1024
    %v1026 = vrot.slane %v962, 1
    %v1027 = vsel %vm180, %v1022, %v1026
    %v1028 = vrot.slane %v963, 1
    %v1029 = vsel %vm180, %v1024, %v1028
    %v1030 = vrot.slane %v964, 1
    %v1031 = vsel %vm180, %v1026, %v1030
    %v1032 = vrot.slane %v965, 1
    %v1033 = vsel %vm180, %v1028, %v1032
    %v1034 = vrot.slane %v966, 1
    %v1035 = vrot.slane %v968, 1
    %v1036 = vsel %vm180, %v1034, %v1035
    %v1037 = vrot.slane %v967, 1
    %v1038 = vrot.slane %v969, 1
    %v1039 = vsel %vm180, %v1037, %v1038
    %v1040 = vrot.slane %v970, 1
    %v1041 = vsel %vm180, %v1035, %v1040
    %v1042 = vrot.slane %v971, 1
    %v1043 = vsel %vm180, %v1038, %v1042
    %v1044 = vrot.slane %v972, 1
    %v1045 = vsel %vm180, %v1040, %v1044
    %v1046 = vrot.slane %v973, 1
    %v1047 = vsel %vm180, %v1042, %v1046
    %v1048 = vrot.slane %v974, 1
    %v1049 = vsel %vm180, %v1044, %v1048
    %v1050 = vrot.slane %v975, 1
    %v1051 = vsel %vm180, %v1046, %v1050
    %v1052 = vrot.slane %v976, 1
    %v1053 = vrot.slane %v978, 1
    %v1054 = vsel %vm180, %v1052, %v1053
    %v1055 = vrot.slane %v977, 1
    %v1056 = vrot.slane %v979, 1
    %v1057 = vsel %vm180, %v1055, %v1056
    %v1058 = vrot.slane %v980, 1
    %v1059 = vsel %vm180, %v1053, %v1058
    %v1060 = vrot.slane %v981, 1
    %v1061 = vsel %vm180, %v1056, %v1060
    %v1062 = vrot.slane %v982, 1
    %v1063 = vsel %vm180, %v1058, %v1062
    %v1064 = vrot.slane %v983, 1
    %v1065 = vsel %vm180, %v1060, %v1064
    %v1066 = vrot.slane %v984, 1
    %v1067 = vsel %vm180, %v1062, %v1066
    %v1068 = vrot.slane %v985, 1
    %v1069 = vsel %vm180, %v1064, %v1068
    %v1094 = vadd.f32 %v956, %v1018
    %v1095 = vadd.f32 %v957, %v1021
    %v1096 = vadd.f32 %v958, %v1023
    %v1097 = vadd.f32 %v959, %v1025
    %v1098 = vadd.f32 %v960, %v1027
    %v1099 = vadd.f32 %v961, %v1029
    %v1100 = vadd.f32 %v962, %v1031
    %v1101 = vadd.f32 %v963, %v1033
    %v1102 = vadd.f32 %v966, %v1036
    %v1103 = vadd.f32 %v967, %v1039
    %v1104 = vadd.f32 %v968, %v1041
    %v1105 = vadd.f32 %v969, %v1043
    %v1106 = vadd.f32 %v970, %v1045
    %v1107 = vadd.f32 %v971, %v1047
    %v1108 = vadd.f32 %v972, %v1049
    %v1109 = vadd.f32 %v973, %v1051
    %v1110 = vadd.f32 %v976, %v1054
    %v1111 = vadd.f32 %v977, %v1057
    %v1112 = vadd.f32 %v978, %v1059
    %v1113 = vadd.f32 %v979, %v1061
    %v1114 = vadd.f32 %v980, %v1063
    %v1115 = vadd.f32 %v981, %v1065
    %v1116 = vadd.f32 %v982, %v1067
    %v1117 = vadd.f32 %v983, %v1069
    %v1118 = vrot.slane %v956, 2
    %v1119 = vrot.slane %v958, 2
    %v1120 = vsel %vm283, %v1118, %v1119
    %v1121 = vrot.slane %v957, 2
    %v1122 = vrot.slane %v959, 2
    %v1123 = vsel %vm283, %v1121, %v1122
    %v1124 = vrot.slane %v960, 2
    %v1125 = vsel %vm283, %v1119, %v1124
    %v1126 = vrot.slane %v961, 2
    %v1127 = vsel %vm283, %v1122, %v1126
    %v1128 = vrot.slane %v962, 2
    %v1129 = vsel %vm283, %v1124, %v1128
    %v1130 = vrot.slane %v963, 2
    %v1131 = vsel %vm283, %v1126, %v1130
    %v1132 = vrot.slane %v964, 2
    %v1133 = vsel %vm283, %v1128, %v1132
    %v1134 = vrot.slane %v965, 2
    %v1135 = vsel %vm283, %v1130, %v1134
    %v1136 = vrot.slane %v966, 2
    %v1137 = vrot.slane %v968, 2
    %v1138 = vsel %vm283, %v1136, %v1137
    %v1139 = vrot.slane %v967, 2
    %v1140 = vrot.slane %v969, 2
    %v1141 = vsel %vm283, %v1139, %v1140
    %v1142 = vrot.slane %v970, 2
    %v1143 = vsel %vm283, %v1137, %v1142
    %v1144 = vrot.slane %v971, 2
    %v1145 = vsel %vm283, %v1140, %v1144
    %v1146 = vrot.slane %v972, 2
    %v1147 = vsel %vm283, %v1142, %v1146
    %v1148 = vrot.slane %v973, 2
    %v1149 = vsel %vm283, %v1144, %v1148
    %v1150 = vrot.slane %v974, 2
    %v1151 = vsel %vm283, %v1146, %v1150
    %v1152 = vrot.slane %v975, 2
    %v1153 = vsel %vm283, %v1148, %v1152
    %v1154 = vrot.slane %v976, 2
    %v1155 = vrot.slane %v978, 2
    %v1156 = vsel %vm283, %v1154, %v1155
    %v1157 = vrot.slane %v977, 2
    %v1158 = vrot.slane %v979, 2
    %v1159 = vsel %vm283, %v1157, %v1158
    %v1160 = vrot.slane %v980, 2
    %v1161 = vsel %vm283, %v1155, %v1160
    %v1162 = vrot.slane %v981, 2
    %v1163 = vsel %vm283, %v1158, %v1162
    %v1164 = vrot.slane %v982, 2
    %v1165 = vsel %vm283, %v1160, %v1164
    %v1166 = vrot.slane %v983, 2
    %v1167 = vsel %vm283, %v1162, %v1166
    %v1168 = vrot.slane %v984, 2
    %v1169 = vsel %vm283, %v1164, %v1168
    %v1170 = vrot.slane %v985, 2
    %v1171 = vsel %vm283, %v1166, %v1170
    %v1196 = vadd.f32 %v1094, %v1120
    %v1197 = vadd.f32 %v1095, %v1123
    %v1198 = vadd.f32 %v1096, %v1125
    %v1199 = vadd.f32 %v1097, %v1127
    %v1200 = vadd.f32 %v1098, %v1129
    %v1201 = vadd.f32 %v1099, %v1131
    %v1202 = vadd.f32 %v1100, %v1133
    %v1203 = vadd.f32 %v1101, %v1135
    %v1204 = vadd.f32 %v1102, %v1138
    %v1205 = vadd.f32 %v1103, %v1141
    %v1206 = vadd.f32 %v1104, %v1143
    %v1207 = vadd.f32 %v1105, %v1145
    %v1208 = vadd.f32 %v1106, %v1147
    %v1209 = vadd.f32 %v1107, %v1149
    %v1210 = vadd.f32 %v1108, %v1151
    %v1211 = vadd.f32 %v1109, %v1153
    %v1212 = vadd.f32 %v1110, %v1156
    %v1213 = vadd.f32 %v1111, %v1159
    %v1214 = vadd.f32 %v1112, %v1161
    %v1215 = vadd.f32 %v1113, %v1163
    %v1216 = vadd.f32 %v1114, %v1165
    %v1217 = vadd.f32 %v1115, %v1167
    %v1218 = vadd.f32 %v1116, %v1169
    %v1219 = vadd.f32 %v1117, %v1171
    %v1220 = vrot.slane %v956, 3
    %v1221 = vrot.slane %v958, 3
    %v1222 = vsel %vm386, %v1220, %v1221
    %v1223 = vrot.slane %v957, 3
    %v1224 = vrot.slane %v959, 3
    %v1225 = vsel %vm386, %v1223, %v1224
    %v1226 = vrot.slane %v960, 3
    %v1227 = vsel %vm386, %v1221, %v1226
    %v1228 = vrot.slane %v961, 3
    %v1229 = vsel %vm386, %v1224, %v1228
    %v1230 = vrot.slane %v962, 3
    %v1231 = vsel %vm386, %v1226, %v1230
    %v1232 = vrot.slane %v963, 3
    %v1233 = vsel %vm386, %v1228, %v1232
    %v1234 = vrot.slane %v964, 3
    %v1235 = vsel %vm386, %v1230, %v1234
    %v1236 = vrot.slane %v965, 3
    %v1237 = vsel %vm386, %v1232, %v1236
    %v1238 = vrot.slane %v966, 3
    %v1239 = vrot.slane %v968, 3
    %v1240 = vsel %vm386, %v1238, %v1239
    %v1241 = vrot.slane %v967, 3
    %v1242 = vrot.slane %v969, 3
    %v1243 = vsel %vm386, %v1241, %v1242
    %v1244 = vrot.slane %v970, 3
    %v1245 = vsel %vm386, %v1239, %v1244
    %v1246 = vrot.slane %v971, 3
    %v1247 = vsel %vm386, %v1242, %v1246
    %v1248 = vrot.slane %v972, 3
    %v1249 = vsel %vm386, %v1244, %v1248
    %v1250 = vrot.slane %v973, 3
    %v1251 = vsel %vm386, %v1246, %v1250
    %v1252 = vrot.slane %v974, 3
    %v1253 = vsel %vm386, %v1248, %v1252
    %v1254 = vrot.slane %v975, 3
    %v1255 = vsel %vm386, %v1250, %v1254
    %v1256 = vrot.slane %v976, 3
    %v1257 = vrot.slane %v978, 3
    %v1258 = vsel %vm386, %v1256, %v1257
    %v1259 = vrot.slane %v977, 3
    %v1260 = vrot.slane %v979, 3
    %v1261 = vsel %vm386, %v1259, %v1260
    %v1262 = vrot.slane %v980, 3
    %v1263 = vsel %vm386, %v1257, %v1262
    %v1264 = vrot.slane %v981, 3
    %v1265 = vsel %vm386, %v1260, %v1264
    %v1266 = vrot.slane %v982, 3
    %v1267 = vsel %vm386, %v1262, %v1266
    %v1268 = vrot.slane %v983, 3
    %v1269 = vsel %vm386, %v1264, %v1268
    %v1270 = vrot.slane %v984, 3
    %v1271 = vsel %vm386, %v1266, %v1270
    %v1272 = vrot.slane %v985, 3
    %v1273 = vsel %vm386, %v1268, %v1272
    %v1298 = vadd.f32 %v1196, %v1222
    %v1299 = vadd.f32 %v1197, %v1225
    %v1300 = vadd.f32 %v1198, %v1227
    %v1301 = vadd.f32 %v1199, %v1229
    %v1302 = vadd.f32 %v1200, %v1231
    %v1303 = vadd.f32 %v1201, %v1233
    %v1304 = vadd.f32 %v1202, %v1235
    %v1305 = vadd.f32 %v1203, %v1237
    %v1306 = vadd.f32 %v1204, %v1240
    %v1307 = vadd.f32 %v1205, %v1243
    %v1308 = vadd.f32 %v1206, %v1245
    %v1309 = vadd.f32 %v1207, %v1247
    %v1310 = vadd.f32 %v1208, %v1249
    %v1311 = vadd.f32 %v1209, %v1251
    %v1312 = vadd.f32 %v1210, %v1253
    %v1313 = vadd.f32 %v1211, %v1255
    %v1314 = vadd.f32 %v1212, %v1258
    %v1315 = vadd.f32 %v1213, %v1261
    %v1316 = vadd.f32 %v1214, %v1263
    %v1317 = vadd.f32 %v1215, %v1265
    %v1318 = vadd.f32 %v1216, %v1267
    %v1319 = vadd.f32 %v1217, %v1269
    %v1320 = vadd.f32 %v1218, %v1271
    %v1321 = vadd.f32 %v1219, %v1273
    %v1322 = vrot.slane %v956, 4
    %v1323 = vrot.slane %v958, 4
    %v1324 = vsel %vm489, %v1322, %v1323
    %v1325 = vrot.slane %v957, 4
    %v1326 = vrot.slane %v959, 4
    %v1327 = vsel %vm489, %v1325, %v1326
    %v1328 = vrot.slane %v960, 4
    %v1329 = vsel %vm489, %v1323, %v1328
    %v1330 = vrot.slane %v961, 4
    %v1331 = vsel %vm489, %v1326, %v1330
    %v1332 = vrot.slane %v962, 4
    %v1333 = vsel %vm489, %v1328, %v1332
    %v1334 = vrot.slane %v963, 4
    %v1335 = vsel %vm489, %v1330, %v1334
    %v1336 = vrot.slane %v964, 4
    %v1337 = vsel %vm489, %v1332, %v1336
    %v1338 = vrot.slane %v965, 4
    %v1339 = vsel %vm489, %v1334, %v1338
    %v1340 = vrot.slane %v966, 4
    %v1341 = vrot.slane %v968, 4
    %v1342 = vsel %vm489, %v1340, %v1341
    %v1343 = vrot.slane %v967, 4
    %v1344 = vrot.slane %v969, 4
    %v1345 = vsel %vm489, %v1343, %v1344
    %v1346 = vrot.slane %v970, 4
    %v1347 = vsel %vm489, %v1341, %v1346
    %v1348 = vrot.slane %v971, 4
    %v1349 = vsel %vm489, %v1344, %v1348
    %v1350 = vrot.slane %v972, 4
    %v1351 = vsel %vm489, %v1346, %v1350
    %v1352 = vrot.slane %v973, 4
    %v1353 = vsel %vm489, %v1348, %v1352
    %v1354 = vrot.slane %v974, 4
    %v1355 = vsel %vm489, %v1350, %v1354
    %v1356 = vrot.slane %v975, 4
    %v1357 = vsel %vm489, %v1352, %v1356
    %v1358 = vrot.slane %v976, 4
    %v1359 = vrot.slane %v978, 4
    %v1360 = vsel %vm489, %v1358, %v1359
    %v1361 = vrot.slane %v977, 4
    %v1362 = vrot.slane %v979, 4
    %v1363 = vsel %vm489, %v1361, %v1362
    %v1364 = vrot.slane %v980, 4
    %v1365 = vsel %vm489, %v1359, %v1364
    %v1366 = vrot.slane %v981, 4
    %v1367 = vsel %vm489, %v1362, %v1366
    %v1368 = vrot.slane %v982, 4
    %v1369 = vsel %vm489, %v1364, %v1368
    %v1370 = vrot.slane %v983, 4
    %v1371 = vsel %vm489, %v1366, %v1370
    %v1372 = vrot.slane %v984, 4
    %v1373 = vsel %vm489, %v1368, %v1372
    %v1374 = vrot.slane %v985, 4
    %v1375 = vsel %vm489, %v1370, %v1374
    %v1400 = vadd.f32 %v1298, %v1324
    %v1401 = vadd.f32 %v1299, %v1327
    %v1402 = vadd.f32 %v1300, %v1329
    %v1403 = vadd.f32 %v1301, %v1331
    %v1404 = vadd.f32 %v1302, %v1333
    %v1405 = vadd.f32 %v1303, %v1335
    %v1406 = vadd.f32 %v1304, %v1337
    %v1407 = vadd.f32 %v1305, %v1339
    %v1408 = vadd.f32 %v1306, %v1342
    %v1409 = vadd.f32 %v1307, %v1345
    %v1410 = vadd.f32 %v1308, %v1347
    %v1411 = vadd.f32 %v1309, %v1349
    %v1412 = vadd.f32 %v1310, %v1351
    %v1413 = vadd.f32 %v1311, %v1353
    %v1414 = vadd.f32 %v1312, %v1355
    %v1415 = vadd.f32 %v1313, %v1357
    %v1416 = vadd.f32 %v1314, %v1360
    %v1417 = vadd.f32 %v1315, %v1363
    %v1418 = vadd.f32 %v1316, %v1365
    %v1419 = vadd.f32 %v1317, %v1367
    %v1420 = vadd.f32 %v1318, %v1369
    %v1421 = vadd.f32 %v1319, %v1371
    %v1422 = vadd.f32 %v1320, %v1373
    %v1423 = vadd.f32 %v1321, %v1375
    %1448 = vrot.lane.b32.xlu0 %v1400, 127
    %v1449 = vpop.permute.xlu0 %1448
    %1450 = vrot.lane.b32.xlu0 %v1401, 127
    %v1451 = vpop.permute.xlu0 %1450
    %1452 = vrot.lane.b32.xlu0 %v1402, 127
    %v1453 = vpop.permute.xlu0 %1452
    %1454 = vrot.lane.b32.xlu0 %v1403, 127
    %v1455 = vpop.permute.xlu0 %1454
    %1456 = vrot.lane.b32.xlu0 %v1404, 127
    %v1457 = vpop.permute.xlu0 %1456
    %1458 = vrot.lane.b32.xlu0 %v1405, 127
    %v1459 = vpop.permute.xlu0 %1458
    %1460 = vrot.lane.b32.xlu0 %v1406, 127
    %v1461 = vpop.permute.xlu0 %1460
    %1462 = vrot.lane.b32.xlu0 %v1407, 127
    %v1463 = vpop.permute.xlu0 %1462
    %1464 = vrot.lane.b32.xlu0 %v1408, 127
    %v1465 = vpop.permute.xlu0 %1464
    %1466 = vrot.lane.b32.xlu0 %v1409, 127
    %v1467 = vpop.permute.xlu0 %1466
    %1468 = vrot.lane.b32.xlu0 %v1410, 127
    %v1469 = vpop.permute.xlu0 %1468
    %1470 = vrot.lane.b32.xlu0 %v1411, 127
    %v1471 = vpop.permute.xlu0 %1470
    %1472 = vrot.lane.b32.xlu0 %v1412, 127
    %v1473 = vpop.permute.xlu0 %1472
    %1474 = vrot.lane.b32.xlu0 %v1413, 127
    %v1475 = vpop.permute.xlu0 %1474
    %1476 = vrot.lane.b32.xlu0 %v1414, 127
    %v1477 = vpop.permute.xlu0 %1476
    %1478 = vrot.lane.b32.xlu0 %v1415, 127
    %v1479 = vpop.permute.xlu0 %1478
    %1480 = vrot.lane.b32.xlu0 %v1416, 127
    %v1481 = vpop.permute.xlu0 %1480
    %1482 = vrot.lane.b32.xlu0 %v1417, 127
    %v1483 = vpop.permute.xlu0 %1482
    %1484 = vrot.lane.b32.xlu0 %v1418, 127
    %v1485 = vpop.permute.xlu0 %1484
    %1486 = vrot.lane.b32.xlu0 %v1419, 127
    %v1487 = vpop.permute.xlu0 %1486
    %1488 = vrot.lane.b32.xlu0 %v1420, 127
    %v1489 = vpop.permute.xlu0 %1488
    %1490 = vrot.lane.b32.xlu0 %v1421, 127
    %v1491 = vpop.permute.xlu0 %1490
    %1492 = vrot.lane.b32.xlu0 %v1422, 127
    %v1493 = vpop.permute.xlu0 %1492
    %1494 = vrot.lane.b32.xlu0 %v1423, 127
    %v1495 = vpop.permute.xlu0 %1494
    %v1496 = vsel %vm664, %v1449, %v1451
    %v1497 = vsel %vm664, %v1453, %v1455
    %v1498 = vsel %vm664, %v1457, %v1459
    %v1499 = vsel %vm664, %v1461, %v1463
    %v1500 = vsel %vm664, %v1465, %v1467
    %v1501 = vsel %vm664, %v1469, %v1471
    %v1502 = vsel %vm664, %v1473, %v1475
    %v1503 = vsel %vm664, %v1477, %v1479
    %v1504 = vsel %vm664, %v1481, %v1483
    %v1505 = vsel %vm664, %v1485, %v1487
    %v1506 = vsel %vm664, %v1489, %v1491
    %v1507 = vsel %vm664, %v1493, %v1495
    %v1520 = vadd.f32 %v1400, %v1496
    %v1521 = vadd.f32 %v1402, %v1497
    %v1522 = vadd.f32 %v1404, %v1498
    %v1523 = vadd.f32 %v1406, %v1499
    %v1524 = vadd.f32 %v1408, %v1500
    %v1525 = vadd.f32 %v1410, %v1501
    %v1526 = vadd.f32 %v1412, %v1502
    %v1527 = vadd.f32 %v1414, %v1503
    %v1528 = vadd.f32 %v1416, %v1504
    %v1529 = vadd.f32 %v1418, %v1505
    %v1530 = vadd.f32 %v1420, %v1506
    %v1531 = vadd.f32 %v1422, %v1507
    %1532 = vrot.lane.b32.xlu0 %v1400, 126
    %v1533 = vpop.permute.xlu0 %1532
    %1534 = vrot.lane.b32.xlu0 %v1401, 126
    %v1535 = vpop.permute.xlu0 %1534
    %1536 = vrot.lane.b32.xlu0 %v1402, 126
    %v1537 = vpop.permute.xlu0 %1536
    %1538 = vrot.lane.b32.xlu0 %v1403, 126
    %v1539 = vpop.permute.xlu0 %1538
    %1540 = vrot.lane.b32.xlu0 %v1404, 126
    %v1541 = vpop.permute.xlu0 %1540
    %1542 = vrot.lane.b32.xlu0 %v1405, 126
    %v1543 = vpop.permute.xlu0 %1542
    %1544 = vrot.lane.b32.xlu0 %v1406, 126
    %v1545 = vpop.permute.xlu0 %1544
    %1546 = vrot.lane.b32.xlu0 %v1407, 126
    %v1547 = vpop.permute.xlu0 %1546
    %1548 = vrot.lane.b32.xlu0 %v1408, 126
    %v1549 = vpop.permute.xlu0 %1548
    %1550 = vrot.lane.b32.xlu0 %v1409, 126
    %v1551 = vpop.permute.xlu0 %1550
    %1552 = vrot.lane.b32.xlu0 %v1410, 126
    %v1553 = vpop.permute.xlu0 %1552
    %1554 = vrot.lane.b32.xlu0 %v1411, 126
    %v1555 = vpop.permute.xlu0 %1554
    %1556 = vrot.lane.b32.xlu0 %v1412, 126
    %v1557 = vpop.permute.xlu0 %1556
    %1558 = vrot.lane.b32.xlu0 %v1413, 126
    %v1559 = vpop.permute.xlu0 %1558
    %1560 = vrot.lane.b32.xlu0 %v1414, 126
    %v1561 = vpop.permute.xlu0 %1560
    %1562 = vrot.lane.b32.xlu0 %v1415, 126
    %v1563 = vpop.permute.xlu0 %1562
    %1564 = vrot.lane.b32.xlu0 %v1416, 126
    %v1565 = vpop.permute.xlu0 %1564
    %1566 = vrot.lane.b32.xlu0 %v1417, 126
    %v1567 = vpop.permute.xlu0 %1566
    %1568 = vrot.lane.b32.xlu0 %v1418, 126
    %v1569 = vpop.permute.xlu0 %1568
    %1570 = vrot.lane.b32.xlu0 %v1419, 126
    %v1571 = vpop.permute.xlu0 %1570
    %1572 = vrot.lane.b32.xlu0 %v1420, 126
    %v1573 = vpop.permute.xlu0 %1572
    %1574 = vrot.lane.b32.xlu0 %v1421, 126
    %v1575 = vpop.permute.xlu0 %1574
    %1576 = vrot.lane.b32.xlu0 %v1422, 126
    %v1577 = vpop.permute.xlu0 %1576
    %1578 = vrot.lane.b32.xlu0 %v1423, 126
    %v1579 = vpop.permute.xlu0 %1578
    %v1580 = vsel %vm749, %v1533, %v1535
    %v1581 = vsel %vm749, %v1537, %v1539
    %v1582 = vsel %vm749, %v1541, %v1543
    %v1583 = vsel %vm749, %v1545, %v1547
    %v1584 = vsel %vm749, %v1549, %v1551
    %v1585 = vsel %vm749, %v1553, %v1555
    %v1586 = vsel %vm749, %v1557, %v1559
    %v1587 = vsel %vm749, %v1561, %v1563
    %v1588 = vsel %vm749, %v1565, %v1567
    %v1589 = vsel %vm749, %v1569, %v1571
    %v1590 = vsel %vm749, %v1573, %v1575
    %v1591 = vsel %vm749, %v1577, %v1579
    %v1604 = vadd.f32 %v1520, %v1580
    %v1605 = vadd.f32 %v1521, %v1581
    %v1606 = vadd.f32 %v1522, %v1582
    %v1607 = vadd.f32 %v1523, %v1583
    %v1608 = vadd.f32 %v1524, %v1584
    %v1609 = vadd.f32 %v1525, %v1585
    %v1610 = vadd.f32 %v1526, %v1586
    %v1611 = vadd.f32 %v1527, %v1587
    %v1612 = vadd.f32 %v1528, %v1588
    %v1613 = vadd.f32 %v1529, %v1589
    %v1614 = vadd.f32 %v1530, %v1590
    %v1615 = vadd.f32 %v1531, %v1591
    %1616 = vrot.lane.b32.xlu0 %v1400, 125
    %v1617 = vpop.permute.xlu0 %1616
    %1618 = vrot.lane.b32.xlu0 %v1401, 125
    %v1619 = vpop.permute.xlu0 %1618
    %1620 = vrot.lane.b32.xlu0 %v1402, 125
    %v1621 = vpop.permute.xlu0 %1620
    %1622 = vrot.lane.b32.xlu0 %v1403, 125
    %v1623 = vpop.permute.xlu0 %1622
    %1624 = vrot.lane.b32.xlu0 %v1404, 125
    %v1625 = vpop.permute.xlu0 %1624
    %1626 = vrot.lane.b32.xlu0 %v1405, 125
    %v1627 = vpop.permute.xlu0 %1626
    %1628 = vrot.lane.b32.xlu0 %v1406, 125
    %v1629 = vpop.permute.xlu0 %1628
    %1630 = vrot.lane.b32.xlu0 %v1407, 125
    %v1631 = vpop.permute.xlu0 %1630
    %1632 = vrot.lane.b32.xlu0 %v1408, 125
    %v1633 = vpop.permute.xlu0 %1632
    %1634 = vrot.lane.b32.xlu0 %v1409, 125
    %v1635 = vpop.permute.xlu0 %1634
    %1636 = vrot.lane.b32.xlu0 %v1410, 125
    %v1637 = vpop.permute.xlu0 %1636
    %1638 = vrot.lane.b32.xlu0 %v1411, 125
    %v1639 = vpop.permute.xlu0 %1638
    %1640 = vrot.lane.b32.xlu0 %v1412, 125
    %v1641 = vpop.permute.xlu0 %1640
    %1642 = vrot.lane.b32.xlu0 %v1413, 125
    %v1643 = vpop.permute.xlu0 %1642
    %1644 = vrot.lane.b32.xlu0 %v1414, 125
    %v1645 = vpop.permute.xlu0 %1644
    %1646 = vrot.lane.b32.xlu0 %v1415, 125
    %v1647 = vpop.permute.xlu0 %1646
    %1648 = vrot.lane.b32.xlu0 %v1416, 125
    %v1649 = vpop.permute.xlu0 %1648
    %1650 = vrot.lane.b32.xlu0 %v1417, 125
    %v1651 = vpop.permute.xlu0 %1650
    %1652 = vrot.lane.b32.xlu0 %v1418, 125
    %v1653 = vpop.permute.xlu0 %1652
    %1654 = vrot.lane.b32.xlu0 %v1419, 125
    %v1655 = vpop.permute.xlu0 %1654
    %1656 = vrot.lane.b32.xlu0 %v1420, 125
    %v1657 = vpop.permute.xlu0 %1656
    %1658 = vrot.lane.b32.xlu0 %v1421, 125
    %v1659 = vpop.permute.xlu0 %1658
    %1660 = vrot.lane.b32.xlu0 %v1422, 125
    %v1661 = vpop.permute.xlu0 %1660
    %1662 = vrot.lane.b32.xlu0 %v1423, 125
    %v1663 = vpop.permute.xlu0 %1662
    %v1664 = vsel %vm834, %v1617, %v1619
    %v1665 = vsel %vm834, %v1621, %v1623
    %v1666 = vsel %vm834, %v1625, %v1627
    %v1667 = vsel %vm834, %v1629, %v1631
    %v1668 = vsel %vm834, %v1633, %v1635
    %v1669 = vsel %vm834, %v1637, %v1639
    %v1670 = vsel %vm834, %v1641, %v1643
    %v1671 = vsel %vm834, %v1645, %v1647
    %v1672 = vsel %vm834, %v1649, %v1651
    %v1673 = vsel %vm834, %v1653, %v1655
    %v1674 = vsel %vm834, %v1657, %v1659
    %v1675 = vsel %vm834, %v1661, %v1663
    %v1688 = vadd.f32 %v1604, %v1664
    %v1689 = vadd.f32 %v1605, %v1665
    %v1690 = vadd.f32 %v1606, %v1666
    %v1691 = vadd.f32 %v1607, %v1667
    %v1692 = vadd.f32 %v1608, %v1668
    %v1693 = vadd.f32 %v1609, %v1669
    %v1694 = vadd.f32 %v1610, %v1670
    %v1695 = vadd.f32 %v1611, %v1671
    %v1696 = vadd.f32 %v1612, %v1672
    %v1697 = vadd.f32 %v1613, %v1673
    %v1698 = vadd.f32 %v1614, %v1674
    %v1699 = vadd.f32 %v1615, %v1675
    %1700 = vrot.lane.b32.xlu0 %v1400, 124
    %v1701 = vpop.permute.xlu0 %1700
    %1702 = vrot.lane.b32.xlu0 %v1401, 124
    %v1703 = vpop.permute.xlu0 %1702
    %1704 = vrot.lane.b32.xlu0 %v1402, 124
    %v1705 = vpop.permute.xlu0 %1704
    %1706 = vrot.lane.b32.xlu0 %v1403, 124
    %v1707 = vpop.permute.xlu0 %1706
    %1708 = vrot.lane.b32.xlu0 %v1404, 124
    %v1709 = vpop.permute.xlu0 %1708
    %1710 = vrot.lane.b32.xlu0 %v1405, 124
    %v1711 = vpop.permute.xlu0 %1710
    %1712 = vrot.lane.b32.xlu0 %v1406, 124
    %v1713 = vpop.permute.xlu0 %1712
    %1714 = vrot.lane.b32.xlu0 %v1407, 124
    %v1715 = vpop.permute.xlu0 %1714
    %1716 = vrot.lane.b32.xlu0 %v1408, 124
    %v1717 = vpop.permute.xlu0 %1716
    %1718 = vrot.lane.b32.xlu0 %v1409, 124
    %v1719 = vpop.permute.xlu0 %1718
    %1720 = vrot.lane.b32.xlu0 %v1410, 124
    %v1721 = vpop.permute.xlu0 %1720
    %1722 = vrot.lane.b32.xlu0 %v1411, 124
    %v1723 = vpop.permute.xlu0 %1722
    %1724 = vrot.lane.b32.xlu0 %v1412, 124
    %v1725 = vpop.permute.xlu0 %1724
    %1726 = vrot.lane.b32.xlu0 %v1413, 124
    %v1727 = vpop.permute.xlu0 %1726
    %1728 = vrot.lane.b32.xlu0 %v1414, 124
    %v1729 = vpop.permute.xlu0 %1728
    %1730 = vrot.lane.b32.xlu0 %v1415, 124
    %v1731 = vpop.permute.xlu0 %1730
    %1732 = vrot.lane.b32.xlu0 %v1416, 124
    %v1733 = vpop.permute.xlu0 %1732
    %1734 = vrot.lane.b32.xlu0 %v1417, 124
    %v1735 = vpop.permute.xlu0 %1734
    %1736 = vrot.lane.b32.xlu0 %v1418, 124
    %v1737 = vpop.permute.xlu0 %1736
    %1738 = vrot.lane.b32.xlu0 %v1419, 124
    %v1739 = vpop.permute.xlu0 %1738
    %1740 = vrot.lane.b32.xlu0 %v1420, 124
    %v1741 = vpop.permute.xlu0 %1740
    %1742 = vrot.lane.b32.xlu0 %v1421, 124
    %v1743 = vpop.permute.xlu0 %1742
    %1744 = vrot.lane.b32.xlu0 %v1422, 124
    %v1745 = vpop.permute.xlu0 %1744
    %1746 = vrot.lane.b32.xlu0 %v1423, 124
    %v1747 = vpop.permute.xlu0 %1746
    %v1748 = vsel %vm919, %v1701, %v1703
    %v1749 = vsel %vm919, %v1705, %v1707
    %v1750 = vsel %vm919, %v1709, %v1711
    %v1751 = vsel %vm919, %v1713, %v1715
    %v1752 = vsel %vm919, %v1717, %v1719
    %v1753 = vsel %vm919, %v1721, %v1723
    %v1754 = vsel %vm919, %v1725, %v1727
    %v1755 = vsel %vm919, %v1729, %v1731
    %v1756 = vsel %vm919, %v1733, %v1735
    %v1757 = vsel %vm919, %v1737, %v1739
    %v1758 = vsel %vm919, %v1741, %v1743
    %v1759 = vsel %vm919, %v1745, %v1747
    %v1772 = vadd.f32 %v1688, %v1748
    %v1773 = vadd.f32 %v1689, %v1749
    %v1774 = vadd.f32 %v1690, %v1750
    %v1775 = vadd.f32 %v1691, %v1751
    %v1776 = vadd.f32 %v1692, %v1752
    %v1777 = vadd.f32 %v1693, %v1753
    %v1778 = vadd.f32 %v1694, %v1754
    %v1779 = vadd.f32 %v1695, %v1755
    %v1780 = vadd.f32 %v1696, %v1756
    %v1781 = vadd.f32 %v1697, %v1757
    %v1782 = vadd.f32 %v1698, %v1758
    %v1783 = vadd.f32 %v1699, %v1759
    %v1814 = vrot.slane %v120, 1
    %v1815 = vrot.slane %v122, 1
    %v1816 = vsel %vm180, %v1814, %v1815
    %v1817 = vrot.slane %v121, 1
    %v1818 = vrot.slane %v123, 1
    %v1819 = vsel %vm180, %v1817, %v1818
    %v1820 = vrot.slane %v124, 1
    %v1821 = vsel %vm180, %v1815, %v1820
    %v1822 = vrot.slane %v125, 1
    %v1823 = vsel %vm180, %v1818, %v1822
    %v1824 = vrot.slane %v126, 1
    %v1825 = vsel %vm180, %v1820, %v1824
    %v1826 = vrot.slane %v127, 1
    %v1827 = vsel %vm180, %v1822, %v1826
    %v1828 = vrot.slane %v128, 1
    %v1829 = vsel %vm180, %v1824, %v1828
    %v1830 = vrot.slane %v129, 1
    %v1831 = vsel %vm180, %v1826, %v1830
    %v1832 = vrot.slane %v130, 1
    %v1833 = vrot.slane %v132, 1
    %v1834 = vsel %vm180, %v1832, %v1833
    %v1835 = vrot.slane %v131, 1
    %v1836 = vrot.slane %v133, 1
    %v1837 = vsel %vm180, %v1835, %v1836
    %v1838 = vrot.slane %v134, 1
    %v1839 = vsel %vm180, %v1833, %v1838
    %v1840 = vrot.slane %v135, 1
    %v1841 = vsel %vm180, %v1836, %v1840
    %v1842 = vrot.slane %v136, 1
    %v1843 = vsel %vm180, %v1838, %v1842
    %v1844 = vrot.slane %v137, 1
    %v1845 = vsel %vm180, %v1840, %v1844
    %v1846 = vrot.slane %v138, 1
    %v1847 = vsel %vm180, %v1842, %v1846
    %v1848 = vrot.slane %v139, 1
    %v1849 = vsel %vm180, %v1844, %v1848
    %v1850 = vrot.slane %v140, 1
    %v1851 = vrot.slane %v142, 1
    %v1852 = vsel %vm180, %v1850, %v1851
    %v1853 = vrot.slane %v141, 1
    %v1854 = vrot.slane %v143, 1
    %v1855 = vsel %vm180, %v1853, %v1854
    %v1856 = vrot.slane %v144, 1
    %v1857 = vsel %vm180, %v1851, %v1856
    %v1858 = vrot.slane %v145, 1
    %v1859 = vsel %vm180, %v1854, %v1858
    %v1860 = vrot.slane %v146, 1
    %v1861 = vsel %vm180, %v1856, %v1860
    %v1862 = vrot.slane %v147, 1
    %v1863 = vsel %vm180, %v1858, %v1862
    %v1864 = vrot.slane %v148, 1
    %v1865 = vsel %vm180, %v1860, %v1864
    %v1866 = vrot.slane %v149, 1
    %v1867 = vsel %vm180, %v1862, %v1866
    %v1892 = vadd.f32 %v120, %v1816
    %v1893 = vadd.f32 %v121, %v1819
    %v1894 = vadd.f32 %v122, %v1821
    %v1895 = vadd.f32 %v123, %v1823
    %v1896 = vadd.f32 %v124, %v1825
    %v1897 = vadd.f32 %v125, %v1827
    %v1898 = vadd.f32 %v126, %v1829
    %v1899 = vadd.f32 %v127, %v1831
    %v1900 = vadd.f32 %v130, %v1834
    %v1901 = vadd.f32 %v131, %v1837
    %v1902 = vadd.f32 %v132, %v1839
    %v1903 = vadd.f32 %v133, %v1841
    %v1904 = vadd.f32 %v134, %v1843
    %v1905 = vadd.f32 %v135, %v1845
    %v1906 = vadd.f32 %v136, %v1847
    %v1907 = vadd.f32 %v137, %v1849
    %v1908 = vadd.f32 %v140, %v1852
    %v1909 = vadd.f32 %v141, %v1855
    %v1910 = vadd.f32 %v142, %v1857
    %v1911 = vadd.f32 %v143, %v1859
    %v1912 = vadd.f32 %v144, %v1861
    %v1913 = vadd.f32 %v145, %v1863
    %v1914 = vadd.f32 %v146, %v1865
    %v1915 = vadd.f32 %v147, %v1867
    %v1916 = vrot.slane %v120, 2
    %v1917 = vrot.slane %v122, 2
    %v1918 = vsel %vm283, %v1916, %v1917
    %v1919 = vrot.slane %v121, 2
    %v1920 = vrot.slane %v123, 2
    %v1921 = vsel %vm283, %v1919, %v1920
    %v1922 = vrot.slane %v124, 2
    %v1923 = vsel %vm283, %v1917, %v1922
    %v1924 = vrot.slane %v125, 2
    %v1925 = vsel %vm283, %v1920, %v1924
    %v1926 = vrot.slane %v126, 2
    %v1927 = vsel %vm283, %v1922, %v1926
    %v1928 = vrot.slane %v127, 2
    %v1929 = vsel %vm283, %v1924, %v1928
    %v1930 = vrot.slane %v128, 2
    %v1931 = vsel %vm283, %v1926, %v1930
    %v1932 = vrot.slane %v129, 2
    %v1933 = vsel %vm283, %v1928, %v1932
    %v1934 = vrot.slane %v130, 2
    %v1935 = vrot.slane %v132, 2
    %v1936 = vsel %vm283, %v1934, %v1935
    %v1937 = vrot.slane %v131, 2
    %v1938 = vrot.slane %v133, 2
    %v1939 = vsel %vm283, %v1937, %v1938
    %v1940 = vrot.slane %v134, 2
    %v1941 = vsel %vm283, %v1935, %v1940
    %v1942 = vrot.slane %v135, 2
    %v1943 = vsel %vm283, %v1938, %v1942
    %v1944 = vrot.slane %v136, 2
    %v1945 = vsel %vm283, %v1940, %v1944
    %v1946 = vrot.slane %v137, 2
    %v1947 = vsel %vm283, %v1942, %v1946
    %v1948 = vrot.slane %v138, 2
    %v1949 = vsel %vm283, %v1944, %v1948
    %v1950 = vrot.slane %v139, 2
    %v1951 = vsel %vm283, %v1946, %v1950
    %v1952 = vrot.slane %v140, 2
    %v1953 = vrot.slane %v142, 2
    %v1954 = vsel %vm283, %v1952, %v1953
    %v1955 = vrot.slane %v141, 2
    %v1956 = vrot.slane %v143, 2
    %v1957 = vsel %vm283, %v1955, %v1956
    %v1958 = vrot.slane %v144, 2
    %v1959 = vsel %vm283, %v1953, %v1958
    %v1960 = vrot.slane %v145, 2
    %v1961 = vsel %vm283, %v1956, %v1960
    %v1962 = vrot.slane %v146, 2
    %v1963 = vsel %vm283, %v1958, %v1962
    %v1964 = vrot.slane %v147, 2
    %v1965 = vsel %vm283, %v1960, %v1964
    %v1966 = vrot.slane %v148, 2
    %v1967 = vsel %vm283, %v1962, %v1966
    %v1968 = vrot.slane %v149, 2
    %v1969 = vsel %vm283, %v1964, %v1968
    %v1994 = vadd.f32 %v1892, %v1918
    %v1995 = vadd.f32 %v1893, %v1921
    %v1996 = vadd.f32 %v1894, %v1923
    %v1997 = vadd.f32 %v1895, %v1925
    %v1998 = vadd.f32 %v1896, %v1927
    %v1999 = vadd.f32 %v1897, %v1929
    %v2000 = vadd.f32 %v1898, %v1931
    %v2001 = vadd.f32 %v1899, %v1933
    %v2002 = vadd.f32 %v1900, %v1936
    %v2003 = vadd.f32 %v1901, %v1939
    %v2004 = vadd.f32 %v1902, %v1941
    %v2005 = vadd.f32 %v1903, %v1943
    %v2006 = vadd.f32 %v1904, %v1945
    %v2007 = vadd.f32 %v1905, %v1947
    %v2008 = vadd.f32 %v1906, %v1949
    %v2009 = vadd.f32 %v1907, %v1951
    %v2010 = vadd.f32 %v1908, %v1954
    %v2011 = vadd.f32 %v1909, %v1957
    %v2012 = vadd.f32 %v1910, %v1959
    %v2013 = vadd.f32 %v1911, %v1961
    %v2014 = vadd.f32 %v1912, %v1963
    %v2015 = vadd.f32 %v1913, %v1965
    %v2016 = vadd.f32 %v1914, %v1967
    %v2017 = vadd.f32 %v1915, %v1969
    %v2018 = vrot.slane %v120, 3
    %v2019 = vrot.slane %v122, 3
    %v2020 = vsel %vm386, %v2018, %v2019
    %v2021 = vrot.slane %v121, 3
    %v2022 = vrot.slane %v123, 3
    %v2023 = vsel %vm386, %v2021, %v2022
    %v2024 = vrot.slane %v124, 3
    %v2025 = vsel %vm386, %v2019, %v2024
    %v2026 = vrot.slane %v125, 3
    %v2027 = vsel %vm386, %v2022, %v2026
    %v2028 = vrot.slane %v126, 3
    %v2029 = vsel %vm386, %v2024, %v2028
    %v2030 = vrot.slane %v127, 3
    %v2031 = vsel %vm386, %v2026, %v2030
    %v2032 = vrot.slane %v128, 3
    %v2033 = vsel %vm386, %v2028, %v2032
    %v2034 = vrot.slane %v129, 3
    %v2035 = vsel %vm386, %v2030, %v2034
    %v2036 = vrot.slane %v130, 3
    %v2037 = vrot.slane %v132, 3
    %v2038 = vsel %vm386, %v2036, %v2037
    %v2039 = vrot.slane %v131, 3
    %v2040 = vrot.slane %v133, 3
    %v2041 = vsel %vm386, %v2039, %v2040
    %v2042 = vrot.slane %v134, 3
    %v2043 = vsel %vm386, %v2037, %v2042
    %v2044 = vrot.slane %v135, 3
    %v2045 = vsel %vm386, %v2040, %v2044
    %v2046 = vrot.slane %v136, 3
    %v2047 = vsel %vm386, %v2042, %v2046
    %v2048 = vrot.slane %v137, 3
    %v2049 = vsel %vm386, %v2044, %v2048
    %v2050 = vrot.slane %v138, 3
    %v2051 = vsel %vm386, %v2046, %v2050
    %v2052 = vrot.slane %v139, 3
    %v2053 = vsel %vm386, %v2048, %v2052
    %v2054 = vrot.slane %v140, 3
    %v2055 = vrot.slane %v142, 3
    %v2056 = vsel %vm386, %v2054, %v2055
    %v2057 = vrot.slane %v141, 3
    %v2058 = vrot.slane %v143, 3
    %v2059 = vsel %vm386, %v2057, %v2058
    %v2060 = vrot.slane %v144, 3
    %v2061 = vsel %vm386, %v2055, %v2060
    %v2062 = vrot.slane %v145, 3
    %v2063 = vsel %vm386, %v2058, %v2062
    %v2064 = vrot.slane %v146, 3
    %v2065 = vsel %vm386, %v2060, %v2064
    %v2066 = vrot.slane %v147, 3
    %v2067 = vsel %vm386, %v2062, %v2066
    %v2068 = vrot.slane %v148, 3
    %v2069 = vsel %vm386, %v2064, %v2068
    %v2070 = vrot.slane %v149, 3
    %v2071 = vsel %vm386, %v2066, %v2070
    %v2096 = vadd.f32 %v1994, %v2020
    %v2097 = vadd.f32 %v1995, %v2023
    %v2098 = vadd.f32 %v1996, %v2025
    %v2099 = vadd.f32 %v1997, %v2027
    %v2100 = vadd.f32 %v1998, %v2029
    %v2101 = vadd.f32 %v1999, %v2031
    %v2102 = vadd.f32 %v2000, %v2033
    %v2103 = vadd.f32 %v2001, %v2035
    %v2104 = vadd.f32 %v2002, %v2038
    %v2105 = vadd.f32 %v2003, %v2041
    %v2106 = vadd.f32 %v2004, %v2043
    %v2107 = vadd.f32 %v2005, %v2045
    %v2108 = vadd.f32 %v2006, %v2047
    %v2109 = vadd.f32 %v2007, %v2049
    %v2110 = vadd.f32 %v2008, %v2051
    %v2111 = vadd.f32 %v2009, %v2053
    %v2112 = vadd.f32 %v2010, %v2056
    %v2113 = vadd.f32 %v2011, %v2059
    %v2114 = vadd.f32 %v2012, %v2061
    %v2115 = vadd.f32 %v2013, %v2063
    %v2116 = vadd.f32 %v2014, %v2065
    %v2117 = vadd.f32 %v2015, %v2067
    %v2118 = vadd.f32 %v2016, %v2069
    %v2119 = vadd.f32 %v2017, %v2071
    %v2120 = vrot.slane %v120, 4
    %v2121 = vrot.slane %v122, 4
    %v2122 = vsel %vm489, %v2120, %v2121
    %v2123 = vrot.slane %v121, 4
    %v2124 = vrot.slane %v123, 4
    %v2125 = vsel %vm489, %v2123, %v2124
    %v2126 = vrot.slane %v124, 4
    %v2127 = vsel %vm489, %v2121, %v2126
    %v2128 = vrot.slane %v125, 4
    %v2129 = vsel %vm489, %v2124, %v2128
    %v2130 = vrot.slane %v126, 4
    %v2131 = vsel %vm489, %v2126, %v2130
    %v2132 = vrot.slane %v127, 4
    %v2133 = vsel %vm489, %v2128, %v2132
    %v2134 = vrot.slane %v128, 4
    %v2135 = vsel %vm489, %v2130, %v2134
    %v2136 = vrot.slane %v129, 4
    %v2137 = vsel %vm489, %v2132, %v2136
    %v2138 = vrot.slane %v130, 4
    %v2139 = vrot.slane %v132, 4
    %v2140 = vsel %vm489, %v2138, %v2139
    %v2141 = vrot.slane %v131, 4
    %v2142 = vrot.slane %v133, 4
    %v2143 = vsel %vm489, %v2141, %v2142
    %v2144 = vrot.slane %v134, 4
    %v2145 = vsel %vm489, %v2139, %v2144
    %v2146 = vrot.slane %v135, 4
    %v2147 = vsel %vm489, %v2142, %v2146
    %v2148 = vrot.slane %v136, 4
    %v2149 = vsel %vm489, %v2144, %v2148
    %v2150 = vrot.slane %v137, 4
    %v2151 = vsel %vm489, %v2146, %v2150
    %v2152 = vrot.slane %v138, 4
    %v2153 = vsel %vm489, %v2148, %v2152
    %v2154 = vrot.slane %v139, 4
    %v2155 = vsel %vm489, %v2150, %v2154
    %v2156 = vrot.slane %v140, 4
    %v2157 = vrot.slane %v142, 4
    %v2158 = vsel %vm489, %v2156, %v2157
    %v2159 = vrot.slane %v141, 4
    %v2160 = vrot.slane %v143, 4
    %v2161 = vsel %vm489, %v2159, %v2160
    %v2162 = vrot.slane %v144, 4
    %v2163 = vsel %vm489, %v2157, %v2162
    %v2164 = vrot.slane %v145, 4
    %v2165 = vsel %vm489, %v2160, %v2164
    %v2166 = vrot.slane %v146, 4
    %v2167 = vsel %vm489, %v2162, %v2166
    %v2168 = vrot.slane %v147, 4
    %v2169 = vsel %vm489, %v2164, %v2168
    %v2170 = vrot.slane %v148, 4
    %v2171 = vsel %vm489, %v2166, %v2170
    %v2172 = vrot.slane %v149, 4
    %v2173 = vsel %vm489, %v2168, %v2172
    %v2198 = vadd.f32 %v2096, %v2122
    %v2199 = vadd.f32 %v2097, %v2125
    %v2200 = vadd.f32 %v2098, %v2127
    %v2201 = vadd.f32 %v2099, %v2129
    %v2202 = vadd.f32 %v2100, %v2131
    %v2203 = vadd.f32 %v2101, %v2133
    %v2204 = vadd.f32 %v2102, %v2135
    %v2205 = vadd.f32 %v2103, %v2137
    %v2206 = vadd.f32 %v2104, %v2140
    %v2207 = vadd.f32 %v2105, %v2143
    %v2208 = vadd.f32 %v2106, %v2145
    %v2209 = vadd.f32 %v2107, %v2147
    %v2210 = vadd.f32 %v2108, %v2149
    %v2211 = vadd.f32 %v2109, %v2151
    %v2212 = vadd.f32 %v2110, %v2153
    %v2213 = vadd.f32 %v2111, %v2155
    %v2214 = vadd.f32 %v2112, %v2158
    %v2215 = vadd.f32 %v2113, %v2161
    %v2216 = vadd.f32 %v2114, %v2163
    %v2217 = vadd.f32 %v2115, %v2165
    %v2218 = vadd.f32 %v2116, %v2167
    %v2219 = vadd.f32 %v2117, %v2169
    %v2220 = vadd.f32 %v2118, %v2171
    %v2221 = vadd.f32 %v2119, %v2173
    %2246 = vrot.lane.b32.xlu0 %v2198, 127
    %v2247 = vpop.permute.xlu0 %2246
    %2248 = vrot.lane.b32.xlu0 %v2199, 127
    %v2249 = vpop.permute.xlu0 %2248
    %2250 = vrot.lane.b32.xlu0 %v2200, 127
    %v2251 = vpop.permute.xlu0 %2250
    %2252 = vrot.lane.b32.xlu0 %v2201, 127
    %v2253 = vpop.permute.xlu0 %2252
    %2254 = vrot.lane.b32.xlu0 %v2202, 127
    %v2255 = vpop.permute.xlu0 %2254
    %2256 = vrot.lane.b32.xlu0 %v2203, 127
    %v2257 = vpop.permute.xlu0 %2256
    %2258 = vrot.lane.b32.xlu0 %v2204, 127
    %v2259 = vpop.permute.xlu0 %2258
    %2260 = vrot.lane.b32.xlu0 %v2205, 127
    %v2261 = vpop.permute.xlu0 %2260
    %2262 = vrot.lane.b32.xlu0 %v2206, 127
    %v2263 = vpop.permute.xlu0 %2262
    %2264 = vrot.lane.b32.xlu0 %v2207, 127
    %v2265 = vpop.permute.xlu0 %2264
    %2266 = vrot.lane.b32.xlu0 %v2208, 127
    %v2267 = vpop.permute.xlu0 %2266
    %2268 = vrot.lane.b32.xlu0 %v2209, 127
    %v2269 = vpop.permute.xlu0 %2268
    %2270 = vrot.lane.b32.xlu0 %v2210, 127
    %v2271 = vpop.permute.xlu0 %2270
    %2272 = vrot.lane.b32.xlu0 %v2211, 127
    %v2273 = vpop.permute.xlu0 %2272
    %2274 = vrot.lane.b32.xlu0 %v2212, 127
    %v2275 = vpop.permute.xlu0 %2274
    %2276 = vrot.lane.b32.xlu0 %v2213, 127
    %v2277 = vpop.permute.xlu0 %2276
    %2278 = vrot.lane.b32.xlu0 %v2214, 127
    %v2279 = vpop.permute.xlu0 %2278
    %2280 = vrot.lane.b32.xlu0 %v2215, 127
    %v2281 = vpop.permute.xlu0 %2280
    %2282 = vrot.lane.b32.xlu0 %v2216, 127
    %v2283 = vpop.permute.xlu0 %2282
    %2284 = vrot.lane.b32.xlu0 %v2217, 127
    %v2285 = vpop.permute.xlu0 %2284
    %2286 = vrot.lane.b32.xlu0 %v2218, 127
    %v2287 = vpop.permute.xlu0 %2286
    %2288 = vrot.lane.b32.xlu0 %v2219, 127
    %v2289 = vpop.permute.xlu0 %2288
    %2290 = vrot.lane.b32.xlu0 %v2220, 127
    %v2291 = vpop.permute.xlu0 %2290
    %2292 = vrot.lane.b32.xlu0 %v2221, 127
    %v2293 = vpop.permute.xlu0 %2292
    %v2294 = vsel %vm664, %v2247, %v2249
    %v2295 = vsel %vm664, %v2251, %v2253
    %v2296 = vsel %vm664, %v2255, %v2257
    %v2297 = vsel %vm664, %v2259, %v2261
    %v2298 = vsel %vm664, %v2263, %v2265
    %v2299 = vsel %vm664, %v2267, %v2269
    %v2300 = vsel %vm664, %v2271, %v2273
    %v2301 = vsel %vm664, %v2275, %v2277
    %v2302 = vsel %vm664, %v2279, %v2281
    %v2303 = vsel %vm664, %v2283, %v2285
    %v2304 = vsel %vm664, %v2287, %v2289
    %v2305 = vsel %vm664, %v2291, %v2293
    %v2318 = vadd.f32 %v2198, %v2294
    %v2319 = vadd.f32 %v2200, %v2295
    %v2320 = vadd.f32 %v2202, %v2296
    %v2321 = vadd.f32 %v2204, %v2297
    %v2322 = vadd.f32 %v2206, %v2298
    %v2323 = vadd.f32 %v2208, %v2299
    %v2324 = vadd.f32 %v2210, %v2300
    %v2325 = vadd.f32 %v2212, %v2301
    %v2326 = vadd.f32 %v2214, %v2302
    %v2327 = vadd.f32 %v2216, %v2303
    %v2328 = vadd.f32 %v2218, %v2304
    %v2329 = vadd.f32 %v2220, %v2305
    %2330 = vrot.lane.b32.xlu0 %v2198, 126
    %v2331 = vpop.permute.xlu0 %2330
    %2332 = vrot.lane.b32.xlu0 %v2199, 126
    %v2333 = vpop.permute.xlu0 %2332
    %2334 = vrot.lane.b32.xlu0 %v2200, 126
    %v2335 = vpop.permute.xlu0 %2334
    %2336 = vrot.lane.b32.xlu0 %v2201, 126
    %v2337 = vpop.permute.xlu0 %2336
    %2338 = vrot.lane.b32.xlu0 %v2202, 126
    %v2339 = vpop.permute.xlu0 %2338
    %2340 = vrot.lane.b32.xlu0 %v2203, 126
    %v2341 = vpop.permute.xlu0 %2340
    %2342 = vrot.lane.b32.xlu0 %v2204, 126
    %v2343 = vpop.permute.xlu0 %2342
    %2344 = vrot.lane.b32.xlu0 %v2205, 126
    %v2345 = vpop.permute.xlu0 %2344
    %2346 = vrot.lane.b32.xlu0 %v2206, 126
    %v2347 = vpop.permute.xlu0 %2346
    %2348 = vrot.lane.b32.xlu0 %v2207, 126
    %v2349 = vpop.permute.xlu0 %2348
    %2350 = vrot.lane.b32.xlu0 %v2208, 126
    %v2351 = vpop.permute.xlu0 %2350
    %2352 = vrot.lane.b32.xlu0 %v2209, 126
    %v2353 = vpop.permute.xlu0 %2352
    %2354 = vrot.lane.b32.xlu0 %v2210, 126
    %v2355 = vpop.permute.xlu0 %2354
    %2356 = vrot.lane.b32.xlu0 %v2211, 126
    %v2357 = vpop.permute.xlu0 %2356
    %2358 = vrot.lane.b32.xlu0 %v2212, 126
    %v2359 = vpop.permute.xlu0 %2358
    %2360 = vrot.lane.b32.xlu0 %v2213, 126
    %v2361 = vpop.permute.xlu0 %2360
    %2362 = vrot.lane.b32.xlu0 %v2214, 126
    %v2363 = vpop.permute.xlu0 %2362
    %2364 = vrot.lane.b32.xlu0 %v2215, 126
    %v2365 = vpop.permute.xlu0 %2364
    %2366 = vrot.lane.b32.xlu0 %v2216, 126
    %v2367 = vpop.permute.xlu0 %2366
    %2368 = vrot.lane.b32.xlu0 %v2217, 126
    %v2369 = vpop.permute.xlu0 %2368
    %2370 = vrot.lane.b32.xlu0 %v2218, 126
    %v2371 = vpop.permute.xlu0 %2370
    %2372 = vrot.lane.b32.xlu0 %v2219, 126
    %v2373 = vpop.permute.xlu0 %2372
    %2374 = vrot.lane.b32.xlu0 %v2220, 126
    %v2375 = vpop.permute.xlu0 %2374
    %2376 = vrot.lane.b32.xlu0 %v2221, 126
    %v2377 = vpop.permute.xlu0 %2376
    %v2378 = vsel %vm749, %v2331, %v2333
    %v2379 = vsel %vm749, %v2335, %v2337
    %v2380 = vsel %vm749, %v2339, %v2341
    %v2381 = vsel %vm749, %v2343, %v2345
    %v2382 = vsel %vm749, %v2347, %v2349
    %v2383 = vsel %vm749, %v2351, %v2353
    %v2384 = vsel %vm749, %v2355, %v2357
    %v2385 = vsel %vm749, %v2359, %v2361
    %v2386 = vsel %vm749, %v2363, %v2365
    %v2387 = vsel %vm749, %v2367, %v2369
    %v2388 = vsel %vm749, %v2371, %v2373
    %v2389 = vsel %vm749, %v2375, %v2377
    %v2402 = vadd.f32 %v2318, %v2378
    %v2403 = vadd.f32 %v2319, %v2379
    %v2404 = vadd.f32 %v2320, %v2380
    %v2405 = vadd.f32 %v2321, %v2381
    %v2406 = vadd.f32 %v2322, %v2382
    %v2407 = vadd.f32 %v2323, %v2383
    %v2408 = vadd.f32 %v2324, %v2384
    %v2409 = vadd.f32 %v2325, %v2385
    %v2410 = vadd.f32 %v2326, %v2386
    %v2411 = vadd.f32 %v2327, %v2387
    %v2412 = vadd.f32 %v2328, %v2388
    %v2413 = vadd.f32 %v2329, %v2389
    %2414 = vrot.lane.b32.xlu0 %v2198, 125
    %v2415 = vpop.permute.xlu0 %2414
    %2416 = vrot.lane.b32.xlu0 %v2199, 125
    %v2417 = vpop.permute.xlu0 %2416
    %2418 = vrot.lane.b32.xlu0 %v2200, 125
    %v2419 = vpop.permute.xlu0 %2418
    %2420 = vrot.lane.b32.xlu0 %v2201, 125
    %v2421 = vpop.permute.xlu0 %2420
    %2422 = vrot.lane.b32.xlu0 %v2202, 125
    %v2423 = vpop.permute.xlu0 %2422
    %2424 = vrot.lane.b32.xlu0 %v2203, 125
    %v2425 = vpop.permute.xlu0 %2424
    %2426 = vrot.lane.b32.xlu0 %v2204, 125
    %v2427 = vpop.permute.xlu0 %2426
    %2428 = vrot.lane.b32.xlu0 %v2205, 125
    %v2429 = vpop.permute.xlu0 %2428
    %2430 = vrot.lane.b32.xlu0 %v2206, 125
    %v2431 = vpop.permute.xlu0 %2430
    %2432 = vrot.lane.b32.xlu0 %v2207, 125
    %v2433 = vpop.permute.xlu0 %2432
    %2434 = vrot.lane.b32.xlu0 %v2208, 125
    %v2435 = vpop.permute.xlu0 %2434
    %2436 = vrot.lane.b32.xlu0 %v2209, 125
    %v2437 = vpop.permute.xlu0 %2436
    %2438 = vrot.lane.b32.xlu0 %v2210, 125
    %v2439 = vpop.permute.xlu0 %2438
    %2440 = vrot.lane.b32.xlu0 %v2211, 125
    %v2441 = vpop.permute.xlu0 %2440
    %2442 = vrot.lane.b32.xlu0 %v2212, 125
    %v2443 = vpop.permute.xlu0 %2442
    %2444 = vrot.lane.b32.xlu0 %v2213, 125
    %v2445 = vpop.permute.xlu0 %2444
    %2446 = vrot.lane.b32.xlu0 %v2214, 125
    %v2447 = vpop.permute.xlu0 %2446
    %2448 = vrot.lane.b32.xlu0 %v2215, 125
    %v2449 = vpop.permute.xlu0 %2448
    %2450 = vrot.lane.b32.xlu0 %v2216, 125
    %v2451 = vpop.permute.xlu0 %2450
    %2452 = vrot.lane.b32.xlu0 %v2217, 125
    %v2453 = vpop.permute.xlu0 %2452
    %2454 = vrot.lane.b32.xlu0 %v2218, 125
    %v2455 = vpop.permute.xlu0 %2454
    %2456 = vrot.lane.b32.xlu0 %v2219, 125
    %v2457 = vpop.permute.xlu0 %2456
    %2458 = vrot.lane.b32.xlu0 %v2220, 125
    %v2459 = vpop.permute.xlu0 %2458
    %2460 = vrot.lane.b32.xlu0 %v2221, 125
    %v2461 = vpop.permute.xlu0 %2460
    %v2462 = vsel %vm834, %v2415, %v2417
    %v2463 = vsel %vm834, %v2419, %v2421
    %v2464 = vsel %vm834, %v2423, %v2425
    %v2465 = vsel %vm834, %v2427, %v2429
    %v2466 = vsel %vm834, %v2431, %v2433
    %v2467 = vsel %vm834, %v2435, %v2437
    %v2468 = vsel %vm834, %v2439, %v2441
    %v2469 = vsel %vm834, %v2443, %v2445
    %v2470 = vsel %vm834, %v2447, %v2449
    %v2471 = vsel %vm834, %v2451, %v2453
    %v2472 = vsel %vm834, %v2455, %v2457
    %v2473 = vsel %vm834, %v2459, %v2461
    %v2486 = vadd.f32 %v2402, %v2462
    %v2487 = vadd.f32 %v2403, %v2463
    %v2488 = vadd.f32 %v2404, %v2464
    %v2489 = vadd.f32 %v2405, %v2465
    %v2490 = vadd.f32 %v2406, %v2466
    %v2491 = vadd.f32 %v2407, %v2467
    %v2492 = vadd.f32 %v2408, %v2468
    %v2493 = vadd.f32 %v2409, %v2469
    %v2494 = vadd.f32 %v2410, %v2470
    %v2495 = vadd.f32 %v2411, %v2471
    %v2496 = vadd.f32 %v2412, %v2472
    %v2497 = vadd.f32 %v2413, %v2473
    %2498 = vrot.lane.b32.xlu0 %v2198, 124
    %v2499 = vpop.permute.xlu0 %2498
    %2500 = vrot.lane.b32.xlu0 %v2199, 124
    %v2501 = vpop.permute.xlu0 %2500
    %2502 = vrot.lane.b32.xlu0 %v2200, 124
    %v2503 = vpop.permute.xlu0 %2502
    %2504 = vrot.lane.b32.xlu0 %v2201, 124
    %v2505 = vpop.permute.xlu0 %2504
    %2506 = vrot.lane.b32.xlu0 %v2202, 124
    %v2507 = vpop.permute.xlu0 %2506
    %2508 = vrot.lane.b32.xlu0 %v2203, 124
    %v2509 = vpop.permute.xlu0 %2508
    %2510 = vrot.lane.b32.xlu0 %v2204, 124
    %v2511 = vpop.permute.xlu0 %2510
    %2512 = vrot.lane.b32.xlu0 %v2205, 124
    %v2513 = vpop.permute.xlu0 %2512
    %2514 = vrot.lane.b32.xlu0 %v2206, 124
    %v2515 = vpop.permute.xlu0 %2514
    %2516 = vrot.lane.b32.xlu0 %v2207, 124
    %v2517 = vpop.permute.xlu0 %2516
    %2518 = vrot.lane.b32.xlu0 %v2208, 124
    %v2519 = vpop.permute.xlu0 %2518
    %2520 = vrot.lane.b32.xlu0 %v2209, 124
    %v2521 = vpop.permute.xlu0 %2520
    %2522 = vrot.lane.b32.xlu0 %v2210, 124
    %v2523 = vpop.permute.xlu0 %2522
    %2524 = vrot.lane.b32.xlu0 %v2211, 124
    %v2525 = vpop.permute.xlu0 %2524
    %2526 = vrot.lane.b32.xlu0 %v2212, 124
    %v2527 = vpop.permute.xlu0 %2526
    %2528 = vrot.lane.b32.xlu0 %v2213, 124
    %v2529 = vpop.permute.xlu0 %2528
    %2530 = vrot.lane.b32.xlu0 %v2214, 124
    %v2531 = vpop.permute.xlu0 %2530
    %2532 = vrot.lane.b32.xlu0 %v2215, 124
    %v2533 = vpop.permute.xlu0 %2532
    %2534 = vrot.lane.b32.xlu0 %v2216, 124
    %v2535 = vpop.permute.xlu0 %2534
    %2536 = vrot.lane.b32.xlu0 %v2217, 124
    %v2537 = vpop.permute.xlu0 %2536
    %2538 = vrot.lane.b32.xlu0 %v2218, 124
    %v2539 = vpop.permute.xlu0 %2538
    %2540 = vrot.lane.b32.xlu0 %v2219, 124
    %v2541 = vpop.permute.xlu0 %2540
    %2542 = vrot.lane.b32.xlu0 %v2220, 124
    %v2543 = vpop.permute.xlu0 %2542
    %2544 = vrot.lane.b32.xlu0 %v2221, 124
    %v2545 = vpop.permute.xlu0 %2544
    %v2546 = vsel %vm919, %v2499, %v2501
    %v2547 = vsel %vm919, %v2503, %v2505
    %v2548 = vsel %vm919, %v2507, %v2509
    %v2549 = vsel %vm919, %v2511, %v2513
    %v2550 = vsel %vm919, %v2515, %v2517
    %v2551 = vsel %vm919, %v2519, %v2521
    %v2552 = vsel %vm919, %v2523, %v2525
    %v2553 = vsel %vm919, %v2527, %v2529
    %v2554 = vsel %vm919, %v2531, %v2533
    %v2555 = vsel %vm919, %v2535, %v2537
    %v2556 = vsel %vm919, %v2539, %v2541
    %v2557 = vsel %vm919, %v2543, %v2545
    %v2570 = vadd.f32 %v2486, %v2546
    %v2571 = vadd.f32 %v2487, %v2547
    %v2572 = vadd.f32 %v2488, %v2548
    %v2573 = vadd.f32 %v2489, %v2549
    %v2574 = vadd.f32 %v2490, %v2550
    %v2575 = vadd.f32 %v2491, %v2551
    %v2576 = vadd.f32 %v2492, %v2552
    %v2577 = vadd.f32 %v2493, %v2553
    %v2578 = vadd.f32 %v2494, %v2554
    %v2579 = vadd.f32 %v2495, %v2555
    %v2580 = vadd.f32 %v2496, %v2556
    %v2581 = vadd.f32 %v2497, %v2557
    %v2582 = vmul.f32 %v120, %v120
    %v2583 = vmul.f32 %v121, %v121
    %v2584 = vmul.f32 %v122, %v122
    %v2585 = vmul.f32 %v123, %v123
    %v2586 = vmul.f32 %v124, %v124
    %v2587 = vmul.f32 %v125, %v125
    %v2588 = vmul.f32 %v126, %v126
    %v2589 = vmul.f32 %v127, %v127
    %v2590 = vmul.f32 %v128, %v128
    %v2591 = vmul.f32 %v129, %v129
    %v2592 = vmul.f32 %v130, %v130
    %v2593 = vmul.f32 %v131, %v131
    %v2594 = vmul.f32 %v132, %v132
    %v2595 = vmul.f32 %v133, %v133
    %v2596 = vmul.f32 %v134, %v134
    %v2597 = vmul.f32 %v135, %v135
    %v2598 = vmul.f32 %v136, %v136
    %v2599 = vmul.f32 %v137, %v137
    %v2600 = vmul.f32 %v138, %v138
    %v2601 = vmul.f32 %v139, %v139
    %v2602 = vmul.f32 %v140, %v140
    %v2603 = vmul.f32 %v141, %v141
    %v2604 = vmul.f32 %v142, %v142
    %v2605 = vmul.f32 %v143, %v143
    %v2606 = vmul.f32 %v144, %v144
    %v2607 = vmul.f32 %v145, %v145
    %v2608 = vmul.f32 %v146, %v146
    %v2609 = vmul.f32 %v147, %v147
    %v2610 = vmul.f32 %v148, %v148
    %v2611 = vmul.f32 %v149, %v149
    %v2642 = vrot.slane %v2582, 1
    %v2643 = vrot.slane %v2584, 1
    %v2644 = vsel %vm180, %v2642, %v2643
    %v2645 = vrot.slane %v2583, 1
    %v2646 = vrot.slane %v2585, 1
    %v2647 = vsel %vm180, %v2645, %v2646
    %v2648 = vrot.slane %v2586, 1
    %v2649 = vsel %vm180, %v2643, %v2648
    %v2650 = vrot.slane %v2587, 1
    %v2651 = vsel %vm180, %v2646, %v2650
    %v2652 = vrot.slane %v2588, 1
    %v2653 = vsel %vm180, %v2648, %v2652
    %v2654 = vrot.slane %v2589, 1
    %v2655 = vsel %vm180, %v2650, %v2654
    %v2656 = vrot.slane %v2590, 1
    %v2657 = vsel %vm180, %v2652, %v2656
    %v2658 = vrot.slane %v2591, 1
    %v2659 = vsel %vm180, %v2654, %v2658
    %v2660 = vrot.slane %v2592, 1
    %v2661 = vrot.slane %v2594, 1
    %v2662 = vsel %vm180, %v2660, %v2661
    %v2663 = vrot.slane %v2593, 1
    %v2664 = vrot.slane %v2595, 1
    %v2665 = vsel %vm180, %v2663, %v2664
    %v2666 = vrot.slane %v2596, 1
    %v2667 = vsel %vm180, %v2661, %v2666
    %v2668 = vrot.slane %v2597, 1
    %v2669 = vsel %vm180, %v2664, %v2668
    %v2670 = vrot.slane %v2598, 1
    %v2671 = vsel %vm180, %v2666, %v2670
    %v2672 = vrot.slane %v2599, 1
    %v2673 = vsel %vm180, %v2668, %v2672
    %v2674 = vrot.slane %v2600, 1
    %v2675 = vsel %vm180, %v2670, %v2674
    %v2676 = vrot.slane %v2601, 1
    %v2677 = vsel %vm180, %v2672, %v2676
    %v2678 = vrot.slane %v2602, 1
    %v2679 = vrot.slane %v2604, 1
    %v2680 = vsel %vm180, %v2678, %v2679
    %v2681 = vrot.slane %v2603, 1
    %v2682 = vrot.slane %v2605, 1
    %v2683 = vsel %vm180, %v2681, %v2682
    %v2684 = vrot.slane %v2606, 1
    %v2685 = vsel %vm180, %v2679, %v2684
    %v2686 = vrot.slane %v2607, 1
    %v2687 = vsel %vm180, %v2682, %v2686
    %v2688 = vrot.slane %v2608, 1
    %v2689 = vsel %vm180, %v2684, %v2688
    %v2690 = vrot.slane %v2609, 1
    %v2691 = vsel %vm180, %v2686, %v2690
    %v2692 = vrot.slane %v2610, 1
    %v2693 = vsel %vm180, %v2688, %v2692
    %v2694 = vrot.slane %v2611, 1
    %v2695 = vsel %vm180, %v2690, %v2694
    %v2720 = vadd.f32 %v2582, %v2644
    %v2721 = vadd.f32 %v2583, %v2647
    %v2722 = vadd.f32 %v2584, %v2649
    %v2723 = vadd.f32 %v2585, %v2651
    %v2724 = vadd.f32 %v2586, %v2653
    %v2725 = vadd.f32 %v2587, %v2655
    %v2726 = vadd.f32 %v2588, %v2657
    %v2727 = vadd.f32 %v2589, %v2659
    %v2728 = vadd.f32 %v2592, %v2662
    %v2729 = vadd.f32 %v2593, %v2665
    %v2730 = vadd.f32 %v2594, %v2667
    %v2731 = vadd.f32 %v2595, %v2669
    %v2732 = vadd.f32 %v2596, %v2671
    %v2733 = vadd.f32 %v2597, %v2673
    %v2734 = vadd.f32 %v2598, %v2675
    %v2735 = vadd.f32 %v2599, %v2677
    %v2736 = vadd.f32 %v2602, %v2680
    %v2737 = vadd.f32 %v2603, %v2683
    %v2738 = vadd.f32 %v2604, %v2685
    %v2739 = vadd.f32 %v2605, %v2687
    %v2740 = vadd.f32 %v2606, %v2689
    %v2741 = vadd.f32 %v2607, %v2691
    %v2742 = vadd.f32 %v2608, %v2693
    %v2743 = vadd.f32 %v2609, %v2695
    %v2744 = vrot.slane %v2582, 2
    %v2745 = vrot.slane %v2584, 2
    %v2746 = vsel %vm283, %v2744, %v2745
    %v2747 = vrot.slane %v2583, 2
    %v2748 = vrot.slane %v2585, 2
    %v2749 = vsel %vm283, %v2747, %v2748
    %v2750 = vrot.slane %v2586, 2
    %v2751 = vsel %vm283, %v2745, %v2750
    %v2752 = vrot.slane %v2587, 2
    %v2753 = vsel %vm283, %v2748, %v2752
    %v2754 = vrot.slane %v2588, 2
    %v2755 = vsel %vm283, %v2750, %v2754
    %v2756 = vrot.slane %v2589, 2
    %v2757 = vsel %vm283, %v2752, %v2756
    %v2758 = vrot.slane %v2590, 2
    %v2759 = vsel %vm283, %v2754, %v2758
    %v2760 = vrot.slane %v2591, 2
    %v2761 = vsel %vm283, %v2756, %v2760
    %v2762 = vrot.slane %v2592, 2
    %v2763 = vrot.slane %v2594, 2
    %v2764 = vsel %vm283, %v2762, %v2763
    %v2765 = vrot.slane %v2593, 2
    %v2766 = vrot.slane %v2595, 2
    %v2767 = vsel %vm283, %v2765, %v2766
    %v2768 = vrot.slane %v2596, 2
    %v2769 = vsel %vm283, %v2763, %v2768
    %v2770 = vrot.slane %v2597, 2
    %v2771 = vsel %vm283, %v2766, %v2770
    %v2772 = vrot.slane %v2598, 2
    %v2773 = vsel %vm283, %v2768, %v2772
    %v2774 = vrot.slane %v2599, 2
    %v2775 = vsel %vm283, %v2770, %v2774
    %v2776 = vrot.slane %v2600, 2
    %v2777 = vsel %vm283, %v2772, %v2776
    %v2778 = vrot.slane %v2601, 2
    %v2779 = vsel %vm283, %v2774, %v2778
    %v2780 = vrot.slane %v2602, 2
    %v2781 = vrot.slane %v2604, 2
    %v2782 = vsel %vm283, %v2780, %v2781
    %v2783 = vrot.slane %v2603, 2
    %v2784 = vrot.slane %v2605, 2
    %v2785 = vsel %vm283, %v2783, %v2784
    %v2786 = vrot.slane %v2606, 2
    %v2787 = vsel %vm283, %v2781, %v2786
    %v2788 = vrot.slane %v2607, 2
    %v2789 = vsel %vm283, %v2784, %v2788
    %v2790 = vrot.slane %v2608, 2
    %v2791 = vsel %vm283, %v2786, %v2790
    %v2792 = vrot.slane %v2609, 2
    %v2793 = vsel %vm283, %v2788, %v2792
    %v2794 = vrot.slane %v2610, 2
    %v2795 = vsel %vm283, %v2790, %v2794
    %v2796 = vrot.slane %v2611, 2
    %v2797 = vsel %vm283, %v2792, %v2796
    %v2822 = vadd.f32 %v2720, %v2746
    %v2823 = vadd.f32 %v2721, %v2749
    %v2824 = vadd.f32 %v2722, %v2751
    %v2825 = vadd.f32 %v2723, %v2753
    %v2826 = vadd.f32 %v2724, %v2755
    %v2827 = vadd.f32 %v2725, %v2757
    %v2828 = vadd.f32 %v2726, %v2759
    %v2829 = vadd.f32 %v2727, %v2761
    %v2830 = vadd.f32 %v2728, %v2764
    %v2831 = vadd.f32 %v2729, %v2767
    %v2832 = vadd.f32 %v2730, %v2769
    %v2833 = vadd.f32 %v2731, %v2771
    %v2834 = vadd.f32 %v2732, %v2773
    %v2835 = vadd.f32 %v2733, %v2775
    %v2836 = vadd.f32 %v2734, %v2777
    %v2837 = vadd.f32 %v2735, %v2779
    %v2838 = vadd.f32 %v2736, %v2782
    %v2839 = vadd.f32 %v2737, %v2785
    %v2840 = vadd.f32 %v2738, %v2787
    %v2841 = vadd.f32 %v2739, %v2789
    %v2842 = vadd.f32 %v2740, %v2791
    %v2843 = vadd.f32 %v2741, %v2793
    %v2844 = vadd.f32 %v2742, %v2795
    %v2845 = vadd.f32 %v2743, %v2797
    %v2846 = vrot.slane %v2582, 3
    %v2847 = vrot.slane %v2584, 3
    %v2848 = vsel %vm386, %v2846, %v2847
    %v2849 = vrot.slane %v2583, 3
    %v2850 = vrot.slane %v2585, 3
    %v2851 = vsel %vm386, %v2849, %v2850
    %v2852 = vrot.slane %v2586, 3
    %v2853 = vsel %vm386, %v2847, %v2852
    %v2854 = vrot.slane %v2587, 3
    %v2855 = vsel %vm386, %v2850, %v2854
    %v2856 = vrot.slane %v2588, 3
    %v2857 = vsel %vm386, %v2852, %v2856
    %v2858 = vrot.slane %v2589, 3
    %v2859 = vsel %vm386, %v2854, %v2858
    %v2860 = vrot.slane %v2590, 3
    %v2861 = vsel %vm386, %v2856, %v2860
    %v2862 = vrot.slane %v2591, 3
    %v2863 = vsel %vm386, %v2858, %v2862
    %v2864 = vrot.slane %v2592, 3
    %v2865 = vrot.slane %v2594, 3
    %v2866 = vsel %vm386, %v2864, %v2865
    %v2867 = vrot.slane %v2593, 3
    %v2868 = vrot.slane %v2595, 3
    %v2869 = vsel %vm386, %v2867, %v2868
    %v2870 = vrot.slane %v2596, 3
    %v2871 = vsel %vm386, %v2865, %v2870
    %v2872 = vrot.slane %v2597, 3
    %v2873 = vsel %vm386, %v2868, %v2872
    %v2874 = vrot.slane %v2598, 3
    %v2875 = vsel %vm386, %v2870, %v2874
    %v2876 = vrot.slane %v2599, 3
    %v2877 = vsel %vm386, %v2872, %v2876
    %v2878 = vrot.slane %v2600, 3
    %v2879 = vsel %vm386, %v2874, %v2878
    %v2880 = vrot.slane %v2601, 3
    %v2881 = vsel %vm386, %v2876, %v2880
    %v2882 = vrot.slane %v2602, 3
    %v2883 = vrot.slane %v2604, 3
    %v2884 = vsel %vm386, %v2882, %v2883
    %v2885 = vrot.slane %v2603, 3
    %v2886 = vrot.slane %v2605, 3
    %v2887 = vsel %vm386, %v2885, %v2886
    %v2888 = vrot.slane %v2606, 3
    %v2889 = vsel %vm386, %v2883, %v2888
    %v2890 = vrot.slane %v2607, 3
    %v2891 = vsel %vm386, %v2886, %v2890
    %v2892 = vrot.slane %v2608, 3
    %v2893 = vsel %vm386, %v2888, %v2892
    %v2894 = vrot.slane %v2609, 3
    %v2895 = vsel %vm386, %v2890, %v2894
    %v2896 = vrot.slane %v2610, 3
    %v2897 = vsel %vm386, %v2892, %v2896
    %v2898 = vrot.slane %v2611, 3
    %v2899 = vsel %vm386, %v2894, %v2898
    %v2924 = vadd.f32 %v2822, %v2848
    %v2925 = vadd.f32 %v2823, %v2851
    %v2926 = vadd.f32 %v2824, %v2853
    %v2927 = vadd.f32 %v2825, %v2855
    %v2928 = vadd.f32 %v2826, %v2857
    %v2929 = vadd.f32 %v2827, %v2859
    %v2930 = vadd.f32 %v2828, %v2861
    %v2931 = vadd.f32 %v2829, %v2863
    %v2932 = vadd.f32 %v2830, %v2866
    %v2933 = vadd.f32 %v2831, %v2869
    %v2934 = vadd.f32 %v2832, %v2871
    %v2935 = vadd.f32 %v2833, %v2873
    %v2936 = vadd.f32 %v2834, %v2875
    %v2937 = vadd.f32 %v2835, %v2877
    %v2938 = vadd.f32 %v2836, %v2879
    %v2939 = vadd.f32 %v2837, %v2881
    %v2940 = vadd.f32 %v2838, %v2884
    %v2941 = vadd.f32 %v2839, %v2887
    %v2942 = vadd.f32 %v2840, %v2889
    %v2943 = vadd.f32 %v2841, %v2891
    %v2944 = vadd.f32 %v2842, %v2893
    %v2945 = vadd.f32 %v2843, %v2895
    %v2946 = vadd.f32 %v2844, %v2897
    %v2947 = vadd.f32 %v2845, %v2899
    %v2948 = vrot.slane %v2582, 4
    %v2949 = vrot.slane %v2584, 4
    %v2950 = vsel %vm489, %v2948, %v2949
    %v2951 = vrot.slane %v2583, 4
    %v2952 = vrot.slane %v2585, 4
    %v2953 = vsel %vm489, %v2951, %v2952
    %v2954 = vrot.slane %v2586, 4
    %v2955 = vsel %vm489, %v2949, %v2954
    %v2956 = vrot.slane %v2587, 4
    %v2957 = vsel %vm489, %v2952, %v2956
    %v2958 = vrot.slane %v2588, 4
    %v2959 = vsel %vm489, %v2954, %v2958
    %v2960 = vrot.slane %v2589, 4
    %v2961 = vsel %vm489, %v2956, %v2960
    %v2962 = vrot.slane %v2590, 4
    %v2963 = vsel %vm489, %v2958, %v2962
    %v2964 = vrot.slane %v2591, 4
    %v2965 = vsel %vm489, %v2960, %v2964
    %v2966 = vrot.slane %v2592, 4
    %v2967 = vrot.slane %v2594, 4
    %v2968 = vsel %vm489, %v2966, %v2967
    %v2969 = vrot.slane %v2593, 4
    %v2970 = vrot.slane %v2595, 4
    %v2971 = vsel %vm489, %v2969, %v2970
    %v2972 = vrot.slane %v2596, 4
    %v2973 = vsel %vm489, %v2967, %v2972
    %v2974 = vrot.slane %v2597, 4
    %v2975 = vsel %vm489, %v2970, %v2974
    %v2976 = vrot.slane %v2598, 4
    %v2977 = vsel %vm489, %v2972, %v2976
    %v2978 = vrot.slane %v2599, 4
    %v2979 = vsel %vm489, %v2974, %v2978
    %v2980 = vrot.slane %v2600, 4
    %v2981 = vsel %vm489, %v2976, %v2980
    %v2982 = vrot.slane %v2601, 4
    %v2983 = vsel %vm489, %v2978, %v2982
    %v2984 = vrot.slane %v2602, 4
    %v2985 = vrot.slane %v2604, 4
    %v2986 = vsel %vm489, %v2984, %v2985
    %v2987 = vrot.slane %v2603, 4
    %v2988 = vrot.slane %v2605, 4
    %v2989 = vsel %vm489, %v2987, %v2988
    %v2990 = vrot.slane %v2606, 4
    %v2991 = vsel %vm489, %v2985, %v2990
    %v2992 = vrot.slane %v2607, 4
    %v2993 = vsel %vm489, %v2988, %v2992
    %v2994 = vrot.slane %v2608, 4
    %v2995 = vsel %vm489, %v2990, %v2994
    %v2996 = vrot.slane %v2609, 4
    %v2997 = vsel %vm489, %v2992, %v2996
    %v2998 = vrot.slane %v2610, 4
    %v2999 = vsel %vm489, %v2994, %v2998
    %v3000 = vrot.slane %v2611, 4
    %v3001 = vsel %vm489, %v2996, %v3000
    %v3026 = vadd.f32 %v2924, %v2950
    %v3027 = vadd.f32 %v2925, %v2953
    %v3028 = vadd.f32 %v2926, %v2955
    %v3029 = vadd.f32 %v2927, %v2957
    %v3030 = vadd.f32 %v2928, %v2959
    %v3031 = vadd.f32 %v2929, %v2961
    %v3032 = vadd.f32 %v2930, %v2963
    %v3033 = vadd.f32 %v2931, %v2965
    %v3034 = vadd.f32 %v2932, %v2968
    %v3035 = vadd.f32 %v2933, %v2971
    %v3036 = vadd.f32 %v2934, %v2973
    %v3037 = vadd.f32 %v2935, %v2975
    %v3038 = vadd.f32 %v2936, %v2977
    %v3039 = vadd.f32 %v2937, %v2979
    %v3040 = vadd.f32 %v2938, %v2981
    %v3041 = vadd.f32 %v2939, %v2983
    %v3042 = vadd.f32 %v2940, %v2986
    %v3043 = vadd.f32 %v2941, %v2989
    %v3044 = vadd.f32 %v2942, %v2991
    %v3045 = vadd.f32 %v2943, %v2993
    %v3046 = vadd.f32 %v2944, %v2995
    %v3047 = vadd.f32 %v2945, %v2997
    %v3048 = vadd.f32 %v2946, %v2999
    %v3049 = vadd.f32 %v2947, %v3001
    %3074 = vrot.lane.b32.xlu0 %v3026, 127
    %v3075 = vpop.permute.xlu0 %3074
    %3076 = vrot.lane.b32.xlu0 %v3027, 127
    %v3077 = vpop.permute.xlu0 %3076
    %3078 = vrot.lane.b32.xlu0 %v3028, 127
    %v3079 = vpop.permute.xlu0 %3078
    %3080 = vrot.lane.b32.xlu0 %v3029, 127
    %v3081 = vpop.permute.xlu0 %3080
    %3082 = vrot.lane.b32.xlu0 %v3030, 127
    %v3083 = vpop.permute.xlu0 %3082
    %3084 = vrot.lane.b32.xlu0 %v3031, 127
    %v3085 = vpop.permute.xlu0 %3084
    %3086 = vrot.lane.b32.xlu0 %v3032, 127
    %v3087 = vpop.permute.xlu0 %3086
    %3088 = vrot.lane.b32.xlu0 %v3033, 127
    %v3089 = vpop.permute.xlu0 %3088
    %3090 = vrot.lane.b32.xlu0 %v3034, 127
    %v3091 = vpop.permute.xlu0 %3090
    %3092 = vrot.lane.b32.xlu0 %v3035, 127
    %v3093 = vpop.permute.xlu0 %3092
    %3094 = vrot.lane.b32.xlu0 %v3036, 127
    %v3095 = vpop.permute.xlu0 %3094
    %3096 = vrot.lane.b32.xlu0 %v3037, 127
    %v3097 = vpop.permute.xlu0 %3096
    %3098 = vrot.lane.b32.xlu0 %v3038, 127
    %v3099 = vpop.permute.xlu0 %3098
    %3100 = vrot.lane.b32.xlu0 %v3039, 127
    %v3101 = vpop.permute.xlu0 %3100
    %3102 = vrot.lane.b32.xlu0 %v3040, 127
    %v3103 = vpop.permute.xlu0 %3102
    %3104 = vrot.lane.b32.xlu0 %v3041, 127
    %v3105 = vpop.permute.xlu0 %3104
    %3106 = vrot.lane.b32.xlu0 %v3042, 127
    %v3107 = vpop.permute.xlu0 %3106
    %3108 = vrot.lane.b32.xlu0 %v3043, 127
    %v3109 = vpop.permute.xlu0 %3108
    %3110 = vrot.lane.b32.xlu0 %v3044, 127
    %v3111 = vpop.permute.xlu0 %3110
    %3112 = vrot.lane.b32.xlu0 %v3045, 127
    %v3113 = vpop.permute.xlu0 %3112
    %3114 = vrot.lane.b32.xlu0 %v3046, 127
    %v3115 = vpop.permute.xlu0 %3114
    %3116 = vrot.lane.b32.xlu0 %v3047, 127
    %v3117 = vpop.permute.xlu0 %3116
    %3118 = vrot.lane.b32.xlu0 %v3048, 127
    %v3119 = vpop.permute.xlu0 %3118
    %3120 = vrot.lane.b32.xlu0 %v3049, 127
    %v3121 = vpop.permute.xlu0 %3120
    %v3122 = vsel %vm664, %v3075, %v3077
    %v3123 = vsel %vm664, %v3079, %v3081
    %v3124 = vsel %vm664, %v3083, %v3085
    %v3125 = vsel %vm664, %v3087, %v3089
    %v3126 = vsel %vm664, %v3091, %v3093
    %v3127 = vsel %vm664, %v3095, %v3097
    %v3128 = vsel %vm664, %v3099, %v3101
    %v3129 = vsel %vm664, %v3103, %v3105
    %v3130 = vsel %vm664, %v3107, %v3109
    %v3131 = vsel %vm664, %v3111, %v3113
    %v3132 = vsel %vm664, %v3115, %v3117
    %v3133 = vsel %vm664, %v3119, %v3121
    %v3146 = vadd.f32 %v3026, %v3122
    %v3147 = vadd.f32 %v3028, %v3123
    %v3148 = vadd.f32 %v3030, %v3124
    %v3149 = vadd.f32 %v3032, %v3125
    %v3150 = vadd.f32 %v3034, %v3126
    %v3151 = vadd.f32 %v3036, %v3127
    %v3152 = vadd.f32 %v3038, %v3128
    %v3153 = vadd.f32 %v3040, %v3129
    %v3154 = vadd.f32 %v3042, %v3130
    %v3155 = vadd.f32 %v3044, %v3131
    %v3156 = vadd.f32 %v3046, %v3132
    %v3157 = vadd.f32 %v3048, %v3133
    %3158 = vrot.lane.b32.xlu0 %v3026, 126
    %v3159 = vpop.permute.xlu0 %3158
    %3160 = vrot.lane.b32.xlu0 %v3027, 126
    %v3161 = vpop.permute.xlu0 %3160
    %3162 = vrot.lane.b32.xlu0 %v3028, 126
    %v3163 = vpop.permute.xlu0 %3162
    %3164 = vrot.lane.b32.xlu0 %v3029, 126
    %v3165 = vpop.permute.xlu0 %3164
    %3166 = vrot.lane.b32.xlu0 %v3030, 126
    %v3167 = vpop.permute.xlu0 %3166
    %3168 = vrot.lane.b32.xlu0 %v3031, 126
    %v3169 = vpop.permute.xlu0 %3168
    %3170 = vrot.lane.b32.xlu0 %v3032, 126
    %v3171 = vpop.permute.xlu0 %3170
    %3172 = vrot.lane.b32.xlu0 %v3033, 126
    %v3173 = vpop.permute.xlu0 %3172
    %3174 = vrot.lane.b32.xlu0 %v3034, 126
    %v3175 = vpop.permute.xlu0 %3174
    %3176 = vrot.lane.b32.xlu0 %v3035, 126
    %v3177 = vpop.permute.xlu0 %3176
    %3178 = vrot.lane.b32.xlu0 %v3036, 126
    %v3179 = vpop.permute.xlu0 %3178
    %3180 = vrot.lane.b32.xlu0 %v3037, 126
    %v3181 = vpop.permute.xlu0 %3180
    %3182 = vrot.lane.b32.xlu0 %v3038, 126
    %v3183 = vpop.permute.xlu0 %3182
    %3184 = vrot.lane.b32.xlu0 %v3039, 126
    %v3185 = vpop.permute.xlu0 %3184
    %3186 = vrot.lane.b32.xlu0 %v3040, 126
    %v3187 = vpop.permute.xlu0 %3186
    %3188 = vrot.lane.b32.xlu0 %v3041, 126
    %v3189 = vpop.permute.xlu0 %3188
    %3190 = vrot.lane.b32.xlu0 %v3042, 126
    %v3191 = vpop.permute.xlu0 %3190
    %3192 = vrot.lane.b32.xlu0 %v3043, 126
    %v3193 = vpop.permute.xlu0 %3192
    %3194 = vrot.lane.b32.xlu0 %v3044, 126
    %v3195 = vpop.permute.xlu0 %3194
    %3196 = vrot.lane.b32.xlu0 %v3045, 126
    %v3197 = vpop.permute.xlu0 %3196
    %3198 = vrot.lane.b32.xlu0 %v3046, 126
    %v3199 = vpop.permute.xlu0 %3198
    %3200 = vrot.lane.b32.xlu0 %v3047, 126
    %v3201 = vpop.permute.xlu0 %3200
    %3202 = vrot.lane.b32.xlu0 %v3048, 126
    %v3203 = vpop.permute.xlu0 %3202
    %3204 = vrot.lane.b32.xlu0 %v3049, 126
    %v3205 = vpop.permute.xlu0 %3204
    %v3206 = vsel %vm749, %v3159, %v3161
    %v3207 = vsel %vm749, %v3163, %v3165
    %v3208 = vsel %vm749, %v3167, %v3169
    %v3209 = vsel %vm749, %v3171, %v3173
    %v3210 = vsel %vm749, %v3175, %v3177
    %v3211 = vsel %vm749, %v3179, %v3181
    %v3212 = vsel %vm749, %v3183, %v3185
    %v3213 = vsel %vm749, %v3187, %v3189
    %v3214 = vsel %vm749, %v3191, %v3193
    %v3215 = vsel %vm749, %v3195, %v3197
    %v3216 = vsel %vm749, %v3199, %v3201
    %v3217 = vsel %vm749, %v3203, %v3205
    %v3230 = vadd.f32 %v3146, %v3206
    %v3231 = vadd.f32 %v3147, %v3207
    %v3232 = vadd.f32 %v3148, %v3208
    %v3233 = vadd.f32 %v3149, %v3209
    %v3234 = vadd.f32 %v3150, %v3210
    %v3235 = vadd.f32 %v3151, %v3211
    %v3236 = vadd.f32 %v3152, %v3212
    %v3237 = vadd.f32 %v3153, %v3213
    %v3238 = vadd.f32 %v3154, %v3214
    %v3239 = vadd.f32 %v3155, %v3215
    %v3240 = vadd.f32 %v3156, %v3216
    %v3241 = vadd.f32 %v3157, %v3217
    %3242 = vrot.lane.b32.xlu0 %v3026, 125
    %v3243 = vpop.permute.xlu0 %3242
    %3244 = vrot.lane.b32.xlu0 %v3027, 125
    %v3245 = vpop.permute.xlu0 %3244
    %3246 = vrot.lane.b32.xlu0 %v3028, 125
    %v3247 = vpop.permute.xlu0 %3246
    %3248 = vrot.lane.b32.xlu0 %v3029, 125
    %v3249 = vpop.permute.xlu0 %3248
    %3250 = vrot.lane.b32.xlu0 %v3030, 125
    %v3251 = vpop.permute.xlu0 %3250
    %3252 = vrot.lane.b32.xlu0 %v3031, 125
    %v3253 = vpop.permute.xlu0 %3252
    %3254 = vrot.lane.b32.xlu0 %v3032, 125
    %v3255 = vpop.permute.xlu0 %3254
    %3256 = vrot.lane.b32.xlu0 %v3033, 125
    %v3257 = vpop.permute.xlu0 %3256
    %3258 = vrot.lane.b32.xlu0 %v3034, 125
    %v3259 = vpop.permute.xlu0 %3258
    %3260 = vrot.lane.b32.xlu0 %v3035, 125
    %v3261 = vpop.permute.xlu0 %3260
    %3262 = vrot.lane.b32.xlu0 %v3036, 125
    %v3263 = vpop.permute.xlu0 %3262
    %3264 = vrot.lane.b32.xlu0 %v3037, 125
    %v3265 = vpop.permute.xlu0 %3264
    %3266 = vrot.lane.b32.xlu0 %v3038, 125
    %v3267 = vpop.permute.xlu0 %3266
    %3268 = vrot.lane.b32.xlu0 %v3039, 125
    %v3269 = vpop.permute.xlu0 %3268
    %3270 = vrot.lane.b32.xlu0 %v3040, 125
    %v3271 = vpop.permute.xlu0 %3270
    %3272 = vrot.lane.b32.xlu0 %v3041, 125
    %v3273 = vpop.permute.xlu0 %3272
    %3274 = vrot.lane.b32.xlu0 %v3042, 125
    %v3275 = vpop.permute.xlu0 %3274
    %3276 = vrot.lane.b32.xlu0 %v3043, 125
    %v3277 = vpop.permute.xlu0 %3276
    %3278 = vrot.lane.b32.xlu0 %v3044, 125
    %v3279 = vpop.permute.xlu0 %3278
    %3280 = vrot.lane.b32.xlu0 %v3045, 125
    %v3281 = vpop.permute.xlu0 %3280
    %3282 = vrot.lane.b32.xlu0 %v3046, 125
    %v3283 = vpop.permute.xlu0 %3282
    %3284 = vrot.lane.b32.xlu0 %v3047, 125
    %v3285 = vpop.permute.xlu0 %3284
    %3286 = vrot.lane.b32.xlu0 %v3048, 125
    %v3287 = vpop.permute.xlu0 %3286
    %3288 = vrot.lane.b32.xlu0 %v3049, 125
    %v3289 = vpop.permute.xlu0 %3288
    %v3290 = vsel %vm834, %v3243, %v3245
    %v3291 = vsel %vm834, %v3247, %v3249
    %v3292 = vsel %vm834, %v3251, %v3253
    %v3293 = vsel %vm834, %v3255, %v3257
    %v3294 = vsel %vm834, %v3259, %v3261
    %v3295 = vsel %vm834, %v3263, %v3265
    %v3296 = vsel %vm834, %v3267, %v3269
    %v3297 = vsel %vm834, %v3271, %v3273
    %v3298 = vsel %vm834, %v3275, %v3277
    %v3299 = vsel %vm834, %v3279, %v3281
    %v3300 = vsel %vm834, %v3283, %v3285
    %v3301 = vsel %vm834, %v3287, %v3289
    %v3314 = vadd.f32 %v3230, %v3290
    %v3315 = vadd.f32 %v3231, %v3291
    %v3316 = vadd.f32 %v3232, %v3292
    %v3317 = vadd.f32 %v3233, %v3293
    %v3318 = vadd.f32 %v3234, %v3294
    %v3319 = vadd.f32 %v3235, %v3295
    %v3320 = vadd.f32 %v3236, %v3296
    %v3321 = vadd.f32 %v3237, %v3297
    %v3322 = vadd.f32 %v3238, %v3298
    %v3323 = vadd.f32 %v3239, %v3299
    %v3324 = vadd.f32 %v3240, %v3300
    %v3325 = vadd.f32 %v3241, %v3301
    %3326 = vrot.lane.b32.xlu0 %v3026, 124
    %v3327 = vpop.permute.xlu0 %3326
    %3328 = vrot.lane.b32.xlu0 %v3027, 124
    %v3329 = vpop.permute.xlu0 %3328
    %3330 = vrot.lane.b32.xlu0 %v3028, 124
    %v3331 = vpop.permute.xlu0 %3330
    %3332 = vrot.lane.b32.xlu0 %v3029, 124
    %v3333 = vpop.permute.xlu0 %3332
    %3334 = vrot.lane.b32.xlu0 %v3030, 124
    %v3335 = vpop.permute.xlu0 %3334
    %3336 = vrot.lane.b32.xlu0 %v3031, 124
    %v3337 = vpop.permute.xlu0 %3336
    %3338 = vrot.lane.b32.xlu0 %v3032, 124
    %v3339 = vpop.permute.xlu0 %3338
    %3340 = vrot.lane.b32.xlu0 %v3033, 124
    %v3341 = vpop.permute.xlu0 %3340
    %3342 = vrot.lane.b32.xlu0 %v3034, 124
    %v3343 = vpop.permute.xlu0 %3342
    %3344 = vrot.lane.b32.xlu0 %v3035, 124
    %v3345 = vpop.permute.xlu0 %3344
    %3346 = vrot.lane.b32.xlu0 %v3036, 124
    %v3347 = vpop.permute.xlu0 %3346
    %3348 = vrot.lane.b32.xlu0 %v3037, 124
    %v3349 = vpop.permute.xlu0 %3348
    %3350 = vrot.lane.b32.xlu0 %v3038, 124
    %v3351 = vpop.permute.xlu0 %3350
    %3352 = vrot.lane.b32.xlu0 %v3039, 124
    %v3353 = vpop.permute.xlu0 %3352
    %3354 = vrot.lane.b32.xlu0 %v3040, 124
    %v3355 = vpop.permute.xlu0 %3354
    %3356 = vrot.lane.b32.xlu0 %v3041, 124
    %v3357 = vpop.permute.xlu0 %3356
    %3358 = vrot.lane.b32.xlu0 %v3042, 124
    %v3359 = vpop.permute.xlu0 %3358
    %3360 = vrot.lane.b32.xlu0 %v3043, 124
    %v3361 = vpop.permute.xlu0 %3360
    %3362 = vrot.lane.b32.xlu0 %v3044, 124
    %v3363 = vpop.permute.xlu0 %3362
    %3364 = vrot.lane.b32.xlu0 %v3045, 124
    %v3365 = vpop.permute.xlu0 %3364
    %3366 = vrot.lane.b32.xlu0 %v3046, 124
    %v3367 = vpop.permute.xlu0 %3366
    %3368 = vrot.lane.b32.xlu0 %v3047, 124
    %v3369 = vpop.permute.xlu0 %3368
    %3370 = vrot.lane.b32.xlu0 %v3048, 124
    %v3371 = vpop.permute.xlu0 %3370
    %3372 = vrot.lane.b32.xlu0 %v3049, 124
    %v3373 = vpop.permute.xlu0 %3372
    %v3374 = vsel %vm919, %v3327, %v3329
    %v3375 = vsel %vm919, %v3331, %v3333
    %v3376 = vsel %vm919, %v3335, %v3337
    %v3377 = vsel %vm919, %v3339, %v3341
    %v3378 = vsel %vm919, %v3343, %v3345
    %v3379 = vsel %vm919, %v3347, %v3349
    %v3380 = vsel %vm919, %v3351, %v3353
    %v3381 = vsel %vm919, %v3355, %v3357
    %v3382 = vsel %vm919, %v3359, %v3361
    %v3383 = vsel %vm919, %v3363, %v3365
    %v3384 = vsel %vm919, %v3367, %v3369
    %v3385 = vsel %vm919, %v3371, %v3373
    %v3398 = vadd.f32 %v3314, %v3374
    %v3399 = vadd.f32 %v3315, %v3375
    %v3400 = vadd.f32 %v3316, %v3376
    %v3401 = vadd.f32 %v3317, %v3377
    %v3402 = vadd.f32 %v3318, %v3378
    %v3403 = vadd.f32 %v3319, %v3379
    %v3404 = vadd.f32 %v3320, %v3380
    %v3405 = vadd.f32 %v3321, %v3381
    %v3406 = vadd.f32 %v3322, %v3382
    %v3407 = vadd.f32 %v3323, %v3383
    %v3408 = vadd.f32 %v3324, %v3384
    %v3409 = vadd.f32 %v3325, %v3385
    %v3410 = vlaneseq
    %v3411 = vshrl.u32 %v3410, 7
    %v3412 = vadd.s32 %v3411, 8
    %v3413 = vadd.s32 %v3411, 16
    %v3414 = vadd.s32 %v3411, 24
    %v3415 = vlaneseq
    %v3416 = vand.u32 %v3415, 127
    %vm3417 = vcmp.lt.s32.totalorder %v3411, 2
    %v3418 = vsel %vm3417, %v3411, 2
    %vm3419 = vcmp.lt.s32.totalorder %v3412, 2
    %v3420 = vsel %vm3419, %v3412, 2
    %vm3421 = vcmp.lt.s32.totalorder %v3413, 2
    %v3422 = vsel %vm3421, %v3413, 2
    %vm3423 = vcmp.lt.s32.totalorder %v3414, 2
    %v3424 = vsel %vm3423, %v3414, 2
    %v3425 = vsub.s32 31, %v3411
    %v3426 = vsub.s32 31, %v3412
    %v3427 = vsub.s32 31, %v3413
    %v3428 = vsub.s32 31, %v3414
    %vm3429 = vcmp.lt.s32.totalorder %v3425, 2
    %v3430 = vsel %vm3429, %v3425, 2
    %vm3431 = vcmp.lt.s32.totalorder %v3426, 2
    %v3432 = vsel %vm3431, %v3426, 2
    %vm3433 = vcmp.lt.s32.totalorder %v3427, 2
    %v3434 = vsel %vm3433, %v3427, 2
    %vm3435 = vcmp.lt.s32.totalorder %v3428, 2
    %v3436 = vsel %vm3435, %v3428, 2
    %v3437 = vadd.s32 %v3418, %v3430
    %v3438 = vadd.s32 %v3420, %v3432
    %v3439 = vadd.s32 %v3422, %v3434
    %v3440 = vadd.s32 %v3424, %v3436
    %v3441 = vadd.s32 %v3437, 1
    %v3442 = vadd.s32 %v3438, 1
    %v3443 = vadd.s32 %v3439, 1
    %v3444 = vadd.s32 %v3440, 1
    %vm3445 = vcmp.lt.s32.totalorder %v3416, 2
    %v3446 = vsel %vm3445, %v3416, 2
    %v3447 = vsub.s32 127, %v3416
    %vm3448 = vcmp.lt.s32.totalorder %v3447, 2
    %v3449 = vsel %vm3448, %v3447, 2
    %v3450 = vadd.s32 %v3446, %v3449
    %v3451 = vadd.s32 %v3450, 1
    %v3452 = vmul.u32 %v3441, %v3451
    %v3453 = vmul.u32 %v3442, %v3451
    %v3454 = vmul.u32 %v3443, %v3451
    %v3455 = vmul.u32 %v3444, %v3451
    %v3456 = vcvt.s32.f32 %v3452
    %v3457 = vcvt.s32.f32 %v3453
    %v3458 = vcvt.s32.f32 %v3454
    %v3459 = vcvt.s32.f32 %v3455
    %v3460 = vrcp.pop %v3456
    %v3461 = vrcp.pop %v3457
    %v3462 = vrcp.pop %v3458
    %v3463 = vrcp.pop %v3459
    %v3464 = vsub.f32 %v3456, 1.0
    %v3465 = vsub.f32 %v3457, 1.0
    %v3466 = vsub.f32 %v3458, 1.0
    %v3467 = vsub.f32 %v3459, 1.0
    %v3468 = vrcp.pop %v3464
    %v3469 = vrcp.pop %v3465
    %v3470 = vrcp.pop %v3466
    %v3471 = vrcp.pop %v3467
    %v3472 = vmul.f32 %v944, %v3460
    %v3473 = vmul.f32 %v945, %v3461
    %v3474 = vmul.f32 %v946, %v3462
    %v3475 = vmul.f32 %v947, %v3463
    %v3476 = vmul.f32 %v948, %v3460
    %v3477 = vmul.f32 %v949, %v3461
    %v3478 = vmul.f32 %v950, %v3462
    %v3479 = vmul.f32 %v951, %v3463
    %v3480 = vmul.f32 %v952, %v3460
    %v3481 = vmul.f32 %v953, %v3461
    %v3482 = vmul.f32 %v954, %v3462
    %v3483 = vmul.f32 %v955, %v3463
    %v3484 = vmul.f32 %v2570, %v3460
    %v3485 = vmul.f32 %v2571, %v3461
    %v3486 = vmul.f32 %v2572, %v3462
    %v3487 = vmul.f32 %v2573, %v3463
    %v3488 = vmul.f32 %v2574, %v3460
    %v3489 = vmul.f32 %v2575, %v3461
    %v3490 = vmul.f32 %v2576, %v3462
    %v3491 = vmul.f32 %v2577, %v3463
    %v3492 = vmul.f32 %v2578, %v3460
    %v3493 = vmul.f32 %v2579, %v3461
    %v3494 = vmul.f32 %v2580, %v3462
    %v3495 = vmul.f32 %v2581, %v3463
    %v3496 = vmul.f32 %v3456, %v3472
    %v3497 = vmul.f32 %v3457, %v3473
    %v3498 = vmul.f32 %v3458, %v3474
    %v3499 = vmul.f32 %v3459, %v3475
    %v3500 = vmul.f32 %v3456, %v3476
    %v3501 = vmul.f32 %v3457, %v3477
    %v3502 = vmul.f32 %v3458, %v3478
    %v3503 = vmul.f32 %v3459, %v3479
    %v3504 = vmul.f32 %v3456, %v3480
    %v3505 = vmul.f32 %v3457, %v3481
    %v3506 = vmul.f32 %v3458, %v3482
    %v3507 = vmul.f32 %v3459, %v3483
    %v3508 = vmul.f32 %v3496, %v3472
    %v3509 = vmul.f32 %v3497, %v3473
    %v3510 = vmul.f32 %v3498, %v3474
    %v3511 = vmul.f32 %v3499, %v3475
    %v3512 = vmul.f32 %v3500, %v3476
    %v3513 = vmul.f32 %v3501, %v3477
    %v3514 = vmul.f32 %v3502, %v3478
    %v3515 = vmul.f32 %v3503, %v3479
    %v3516 = vmul.f32 %v3504, %v3480
    %v3517 = vmul.f32 %v3505, %v3481
    %v3518 = vmul.f32 %v3506, %v3482
    %v3519 = vmul.f32 %v3507, %v3483
    %v3520 = vsub.f32 %v1772, %v3508
    %v3521 = vsub.f32 %v1773, %v3509
    %v3522 = vsub.f32 %v1774, %v3510
    %v3523 = vsub.f32 %v1775, %v3511
    %v3524 = vsub.f32 %v1776, %v3512
    %v3525 = vsub.f32 %v1777, %v3513
    %v3526 = vsub.f32 %v1778, %v3514
    %v3527 = vsub.f32 %v1779, %v3515
    %v3528 = vsub.f32 %v1780, %v3516
    %v3529 = vsub.f32 %v1781, %v3517
    %v3530 = vsub.f32 %v1782, %v3518
    %v3531 = vsub.f32 %v1783, %v3519
    %v3532 = vmax.f32 %v3520, 0.0
    %v3533 = vmax.f32 %v3521, 0.0
    %v3534 = vmax.f32 %v3522, 0.0
    %v3535 = vmax.f32 %v3523, 0.0
    %v3536 = vmax.f32 %v3524, 0.0
    %v3537 = vmax.f32 %v3525, 0.0
    %v3538 = vmax.f32 %v3526, 0.0
    %v3539 = vmax.f32 %v3527, 0.0
    %v3540 = vmax.f32 %v3528, 0.0
    %v3541 = vmax.f32 %v3529, 0.0
    %v3542 = vmax.f32 %v3530, 0.0
    %v3543 = vmax.f32 %v3531, 0.0
    %v3544 = vmul.f32 %v3532, %v3468
    %v3545 = vmul.f32 %v3533, %v3469
    %v3546 = vmul.f32 %v3534, %v3470
    %v3547 = vmul.f32 %v3535, %v3471
    %v3548 = vmul.f32 %v3536, %v3468
    %v3549 = vmul.f32 %v3537, %v3469
    %v3550 = vmul.f32 %v3538, %v3470
    %v3551 = vmul.f32 %v3539, %v3471
    %v3552 = vmul.f32 %v3540, %v3468
    %v3553 = vmul.f32 %v3541, %v3469
    %v3554 = vmul.f32 %v3542, %v3470
    %v3555 = vmul.f32 %v3543, %v3471
    %v3556 = vmul.f32 %v3456, %v3484
    %v3557 = vmul.f32 %v3457, %v3485
    %v3558 = vmul.f32 %v3458, %v3486
    %v3559 = vmul.f32 %v3459, %v3487
    %v3560 = vmul.f32 %v3456, %v3488
    %v3561 = vmul.f32 %v3457, %v3489
    %v3562 = vmul.f32 %v3458, %v3490
    %v3563 = vmul.f32 %v3459, %v3491
    %v3564 = vmul.f32 %v3456, %v3492
    %v3565 = vmul.f32 %v3457, %v3493
    %v3566 = vmul.f32 %v3458, %v3494
    %v3567 = vmul.f32 %v3459, %v3495
    %v3568 = vmul.f32 %v3556, %v3484
    %v3569 = vmul.f32 %v3557, %v3485
    %v3570 = vmul.f32 %v3558, %v3486
    %v3571 = vmul.f32 %v3559, %v3487
    %v3572 = vmul.f32 %v3560, %v3488
    %v3573 = vmul.f32 %v3561, %v3489
    %v3574 = vmul.f32 %v3562, %v3490
    %v3575 = vmul.f32 %v3563, %v3491
    %v3576 = vmul.f32 %v3564, %v3492
    %v3577 = vmul.f32 %v3565, %v3493
    %v3578 = vmul.f32 %v3566, %v3494
    %v3579 = vmul.f32 %v3567, %v3495
    %v3580 = vsub.f32 %v3398, %v3568
    %v3581 = vsub.f32 %v3399, %v3569
    %v3582 = vsub.f32 %v3400, %v3570
    %v3583 = vsub.f32 %v3401, %v3571
    %v3584 = vsub.f32 %v3402, %v3572
    %v3585 = vsub.f32 %v3403, %v3573
    %v3586 = vsub.f32 %v3404, %v3574
    %v3587 = vsub.f32 %v3405, %v3575
    %v3588 = vsub.f32 %v3406, %v3576
    %v3589 = vsub.f32 %v3407, %v3577
    %v3590 = vsub.f32 %v3408, %v3578
    %v3591 = vsub.f32 %v3409, %v3579
    %v3592 = vmax.f32 %v3580, 0.0
    %v3593 = vmax.f32 %v3581, 0.0
    %v3594 = vmax.f32 %v3582, 0.0
    %v3595 = vmax.f32 %v3583, 0.0
    %v3596 = vmax.f32 %v3584, 0.0
    %v3597 = vmax.f32 %v3585, 0.0
    %v3598 = vmax.f32 %v3586, 0.0
    %v3599 = vmax.f32 %v3587, 0.0
    %v3600 = vmax.f32 %v3588, 0.0
    %v3601 = vmax.f32 %v3589, 0.0
    %v3602 = vmax.f32 %v3590, 0.0
    %v3603 = vmax.f32 %v3591, 0.0
    %v3604 = vmul.f32 %v3592, %v3468
    %v3605 = vmul.f32 %v3593, %v3469
    %v3606 = vmul.f32 %v3594, %v3470
    %v3607 = vmul.f32 %v3595, %v3471
    %v3608 = vmul.f32 %v3596, %v3468
    %v3609 = vmul.f32 %v3597, %v3469
    %v3610 = vmul.f32 %v3598, %v3470
    %v3611 = vmul.f32 %v3599, %v3471
    %v3612 = vmul.f32 %v3600, %v3468
    %v3613 = vmul.f32 %v3601, %v3469
    %v3614 = vmul.f32 %v3602, %v3470
    %v3615 = vmul.f32 %v3603, %v3471
    %v3616 = vrsqrt.pop %v3544
    %v3617 = vmul.f32 %v3616, %v3544
    %v3618 = vmul.f32 %v3617, %v3616
    %v3619 = vmul.f32 0.5, %v3618
    %v3620 = vsub.f32 1.5, %v3619
    %v3621 = vmul.f32 %v3616, %v3620
    %v3622 = vmul.f32 %v3544, %v3621
    %vm3623 = vcmp.eq.f32.partialorder %v3544, inf
    %v3624 = vsel %vm3623, %v3544, %v3622
    %vm3625 = vcmp.eq.f32.partialorder %v3544, 0.0
    %v3626 = vand.u32 %v3544, 2147483648
    %v3627 = vsel %vm3625, %v3626, %v3624
    %v3628 = vrsqrt.pop %v3545
    %v3629 = vmul.f32 %v3628, %v3545
    %v3630 = vmul.f32 %v3629, %v3628
    %v3631 = vmul.f32 0.5, %v3630
    %v3632 = vsub.f32 1.5, %v3631
    %v3633 = vmul.f32 %v3628, %v3632
    %v3634 = vmul.f32 %v3545, %v3633
    %vm3635 = vcmp.eq.f32.partialorder %v3545, inf
    %v3636 = vsel %vm3635, %v3545, %v3634
    %vm3637 = vcmp.eq.f32.partialorder %v3545, 0.0
    %v3638 = vand.u32 %v3545, 2147483648
    %v3639 = vsel %vm3637, %v3638, %v3636
    %v3640 = vrsqrt.pop %v3546
    %v3641 = vmul.f32 %v3640, %v3546
    %v3642 = vmul.f32 %v3641, %v3640
    %v3643 = vmul.f32 0.5, %v3642
    %v3644 = vsub.f32 1.5, %v3643
    %v3645 = vmul.f32 %v3640, %v3644
    %v3646 = vmul.f32 %v3546, %v3645
    %vm3647 = vcmp.eq.f32.partialorder %v3546, inf
    %v3648 = vsel %vm3647, %v3546, %v3646
    %vm3649 = vcmp.eq.f32.partialorder %v3546, 0.0
    %v3650 = vand.u32 %v3546, 2147483648
    %v3651 = vsel %vm3649, %v3650, %v3648
    %v3652 = vrsqrt.pop %v3547
    %v3653 = vmul.f32 %v3652, %v3547
    %v3654 = vmul.f32 %v3653, %v3652
    %v3655 = vmul.f32 0.5, %v3654
    %v3656 = vsub.f32 1.5, %v3655
    %v3657 = vmul.f32 %v3652, %v3656
    %v3658 = vmul.f32 %v3547, %v3657
    %vm3659 = vcmp.eq.f32.partialorder %v3547, inf
    %v3660 = vsel %vm3659, %v3547, %v3658
    %vm3661 = vcmp.eq.f32.partialorder %v3547, 0.0
    %v3662 = vand.u32 %v3547, 2147483648
    %v3663 = vsel %vm3661, %v3662, %v3660
    %v3664 = vrsqrt.pop %v3548
    %v3665 = vmul.f32 %v3664, %v3548
    %v3666 = vmul.f32 %v3665, %v3664
    %v3667 = vmul.f32 0.5, %v3666
    %v3668 = vsub.f32 1.5, %v3667
    %v3669 = vmul.f32 %v3664, %v3668
    %v3670 = vmul.f32 %v3548, %v3669
    %vm3671 = vcmp.eq.f32.partialorder %v3548, inf
    %v3672 = vsel %vm3671, %v3548, %v3670
    %vm3673 = vcmp.eq.f32.partialorder %v3548, 0.0
    %v3674 = vand.u32 %v3548, 2147483648
    %v3675 = vsel %vm3673, %v3674, %v3672
    %v3676 = vrsqrt.pop %v3549
    %v3677 = vmul.f32 %v3676, %v3549
    %v3678 = vmul.f32 %v3677, %v3676
    %v3679 = vmul.f32 0.5, %v3678
    %v3680 = vsub.f32 1.5, %v3679
    %v3681 = vmul.f32 %v3676, %v3680
    %v3682 = vmul.f32 %v3549, %v3681
    %vm3683 = vcmp.eq.f32.partialorder %v3549, inf
    %v3684 = vsel %vm3683, %v3549, %v3682
    %vm3685 = vcmp.eq.f32.partialorder %v3549, 0.0
    %v3686 = vand.u32 %v3549, 2147483648
    %v3687 = vsel %vm3685, %v3686, %v3684
    %v3688 = vrsqrt.pop %v3550
    %v3689 = vmul.f32 %v3688, %v3550
    %v3690 = vmul.f32 %v3689, %v3688
    %v3691 = vmul.f32 0.5, %v3690
    %v3692 = vsub.f32 1.5, %v3691
    %v3693 = vmul.f32 %v3688, %v3692
    %v3694 = vmul.f32 %v3550, %v3693
    %vm3695 = vcmp.eq.f32.partialorder %v3550, inf
    %v3696 = vsel %vm3695, %v3550, %v3694
    %vm3697 = vcmp.eq.f32.partialorder %v3550, 0.0
    %v3698 = vand.u32 %v3550, 2147483648
    %v3699 = vsel %vm3697, %v3698, %v3696
    %v3700 = vrsqrt.pop %v3551
    %v3701 = vmul.f32 %v3700, %v3551
    %v3702 = vmul.f32 %v3701, %v3700
    %v3703 = vmul.f32 0.5, %v3702
    %v3704 = vsub.f32 1.5, %v3703
    %v3705 = vmul.f32 %v3700, %v3704
    %v3706 = vmul.f32 %v3551, %v3705
    %vm3707 = vcmp.eq.f32.partialorder %v3551, inf
    %v3708 = vsel %vm3707, %v3551, %v3706
    %vm3709 = vcmp.eq.f32.partialorder %v3551, 0.0
    %v3710 = vand.u32 %v3551, 2147483648
    %v3711 = vsel %vm3709, %v3710, %v3708
    %v3712 = vrsqrt.pop %v3552
    %v3713 = vmul.f32 %v3712, %v3552
    %v3714 = vmul.f32 %v3713, %v3712
    %v3715 = vmul.f32 0.5, %v3714
    %v3716 = vsub.f32 1.5, %v3715
    %v3717 = vmul.f32 %v3712, %v3716
    %v3718 = vmul.f32 %v3552, %v3717
    %vm3719 = vcmp.eq.f32.partialorder %v3552, inf
    %v3720 = vsel %vm3719, %v3552, %v3718
    %vm3721 = vcmp.eq.f32.partialorder %v3552, 0.0
    %v3722 = vand.u32 %v3552, 2147483648
    %v3723 = vsel %vm3721, %v3722, %v3720
    %v3724 = vrsqrt.pop %v3553
    %v3725 = vmul.f32 %v3724, %v3553
    %v3726 = vmul.f32 %v3725, %v3724
    %v3727 = vmul.f32 0.5, %v3726
    %v3728 = vsub.f32 1.5, %v3727
    %v3729 = vmul.f32 %v3724, %v3728
    %v3730 = vmul.f32 %v3553, %v3729
    %vm3731 = vcmp.eq.f32.partialorder %v3553, inf
    %v3732 = vsel %vm3731, %v3553, %v3730
    %vm3733 = vcmp.eq.f32.partialorder %v3553, 0.0
    %v3734 = vand.u32 %v3553, 2147483648
    %v3735 = vsel %vm3733, %v3734, %v3732
    %v3736 = vrsqrt.pop %v3554
    %v3737 = vmul.f32 %v3736, %v3554
    %v3738 = vmul.f32 %v3737, %v3736
    %v3739 = vmul.f32 0.5, %v3738
    %v3740 = vsub.f32 1.5, %v3739
    %v3741 = vmul.f32 %v3736, %v3740
    %v3742 = vmul.f32 %v3554, %v3741
    %vm3743 = vcmp.eq.f32.partialorder %v3554, inf
    %v3744 = vsel %vm3743, %v3554, %v3742
    %vm3745 = vcmp.eq.f32.partialorder %v3554, 0.0
    %v3746 = vand.u32 %v3554, 2147483648
    %v3747 = vsel %vm3745, %v3746, %v3744
    %v3748 = vrsqrt.pop %v3555
    %v3749 = vmul.f32 %v3748, %v3555
    %v3750 = vmul.f32 %v3749, %v3748
    %v3751 = vmul.f32 0.5, %v3750
    %v3752 = vsub.f32 1.5, %v3751
    %v3753 = vmul.f32 %v3748, %v3752
    %v3754 = vmul.f32 %v3555, %v3753
    %vm3755 = vcmp.eq.f32.partialorder %v3555, inf
    %v3756 = vsel %vm3755, %v3555, %v3754
    %vm3757 = vcmp.eq.f32.partialorder %v3555, 0.0
    %v3758 = vand.u32 %v3555, 2147483648
    %v3759 = vsel %vm3757, %v3758, %v3756
    %v3760 = vrsqrt.pop %v3604
    %v3761 = vmul.f32 %v3760, %v3604
    %v3762 = vmul.f32 %v3761, %v3760
    %v3763 = vmul.f32 0.5, %v3762
    %v3764 = vsub.f32 1.5, %v3763
    %v3765 = vmul.f32 %v3760, %v3764
    %v3766 = vmul.f32 %v3604, %v3765
    %vm3767 = vcmp.eq.f32.partialorder %v3604, inf
    %v3768 = vsel %vm3767, %v3604, %v3766
    %vm3769 = vcmp.eq.f32.partialorder %v3604, 0.0
    %v3770 = vand.u32 %v3604, 2147483648
    %v3771 = vsel %vm3769, %v3770, %v3768
    %v3772 = vrsqrt.pop %v3605
    %v3773 = vmul.f32 %v3772, %v3605
    %v3774 = vmul.f32 %v3773, %v3772
    %v3775 = vmul.f32 0.5, %v3774
    %v3776 = vsub.f32 1.5, %v3775
    %v3777 = vmul.f32 %v3772, %v3776
    %v3778 = vmul.f32 %v3605, %v3777
    %vm3779 = vcmp.eq.f32.partialorder %v3605, inf
    %v3780 = vsel %vm3779, %v3605, %v3778
    %vm3781 = vcmp.eq.f32.partialorder %v3605, 0.0
    %v3782 = vand.u32 %v3605, 2147483648
    %v3783 = vsel %vm3781, %v3782, %v3780
    %v3784 = vrsqrt.pop %v3606
    %v3785 = vmul.f32 %v3784, %v3606
    %v3786 = vmul.f32 %v3785, %v3784
    %v3787 = vmul.f32 0.5, %v3786
    %v3788 = vsub.f32 1.5, %v3787
    %v3789 = vmul.f32 %v3784, %v3788
    %v3790 = vmul.f32 %v3606, %v3789
    %vm3791 = vcmp.eq.f32.partialorder %v3606, inf
    %v3792 = vsel %vm3791, %v3606, %v3790
    %vm3793 = vcmp.eq.f32.partialorder %v3606, 0.0
    %v3794 = vand.u32 %v3606, 2147483648
    %v3795 = vsel %vm3793, %v3794, %v3792
    %v3796 = vrsqrt.pop %v3607
    %v3797 = vmul.f32 %v3796, %v3607
    %v3798 = vmul.f32 %v3797, %v3796
    %v3799 = vmul.f32 0.5, %v3798
    %v3800 = vsub.f32 1.5, %v3799
    %v3801 = vmul.f32 %v3796, %v3800
    %v3802 = vmul.f32 %v3607, %v3801
    %vm3803 = vcmp.eq.f32.partialorder %v3607, inf
    %v3804 = vsel %vm3803, %v3607, %v3802
    %vm3805 = vcmp.eq.f32.partialorder %v3607, 0.0
    %v3806 = vand.u32 %v3607, 2147483648
    %v3807 = vsel %vm3805, %v3806, %v3804
    %v3808 = vrsqrt.pop %v3608
    %v3809 = vmul.f32 %v3808, %v3608
    %v3810 = vmul.f32 %v3809, %v3808
    %v3811 = vmul.f32 0.5, %v3810
    %v3812 = vsub.f32 1.5, %v3811
    %v3813 = vmul.f32 %v3808, %v3812
    %v3814 = vmul.f32 %v3608, %v3813
    %vm3815 = vcmp.eq.f32.partialorder %v3608, inf
    %v3816 = vsel %vm3815, %v3608, %v3814
    %vm3817 = vcmp.eq.f32.partialorder %v3608, 0.0
    %v3818 = vand.u32 %v3608, 2147483648
    %v3819 = vsel %vm3817, %v3818, %v3816
    %v3820 = vrsqrt.pop %v3609
    %v3821 = vmul.f32 %v3820, %v3609
    %v3822 = vmul.f32 %v3821, %v3820
    %v3823 = vmul.f32 0.5, %v3822
    %v3824 = vsub.f32 1.5, %v3823
    %v3825 = vmul.f32 %v3820, %v3824
    %v3826 = vmul.f32 %v3609, %v3825
    %vm3827 = vcmp.eq.f32.partialorder %v3609, inf
    %v3828 = vsel %vm3827, %v3609, %v3826
    %vm3829 = vcmp.eq.f32.partialorder %v3609, 0.0
    %v3830 = vand.u32 %v3609, 2147483648
    %v3831 = vsel %vm3829, %v3830, %v3828
    %v3832 = vrsqrt.pop %v3610
    %v3833 = vmul.f32 %v3832, %v3610
    %v3834 = vmul.f32 %v3833, %v3832
    %v3835 = vmul.f32 0.5, %v3834
    %v3836 = vsub.f32 1.5, %v3835
    %v3837 = vmul.f32 %v3832, %v3836
    %v3838 = vmul.f32 %v3610, %v3837
    %vm3839 = vcmp.eq.f32.partialorder %v3610, inf
    %v3840 = vsel %vm3839, %v3610, %v3838
    %vm3841 = vcmp.eq.f32.partialorder %v3610, 0.0
    %v3842 = vand.u32 %v3610, 2147483648
    %v3843 = vsel %vm3841, %v3842, %v3840
    %v3844 = vrsqrt.pop %v3611
    %v3845 = vmul.f32 %v3844, %v3611
    %v3846 = vmul.f32 %v3845, %v3844
    %v3847 = vmul.f32 0.5, %v3846
    %v3848 = vsub.f32 1.5, %v3847
    %v3849 = vmul.f32 %v3844, %v3848
    %v3850 = vmul.f32 %v3611, %v3849
    %vm3851 = vcmp.eq.f32.partialorder %v3611, inf
    %v3852 = vsel %vm3851, %v3611, %v3850
    %vm3853 = vcmp.eq.f32.partialorder %v3611, 0.0
    %v3854 = vand.u32 %v3611, 2147483648
    %v3855 = vsel %vm3853, %v3854, %v3852
    %v3856 = vrsqrt.pop %v3612
    %v3857 = vmul.f32 %v3856, %v3612
    %v3858 = vmul.f32 %v3857, %v3856
    %v3859 = vmul.f32 0.5, %v3858
    %v3860 = vsub.f32 1.5, %v3859
    %v3861 = vmul.f32 %v3856, %v3860
    %v3862 = vmul.f32 %v3612, %v3861
    %vm3863 = vcmp.eq.f32.partialorder %v3612, inf
    %v3864 = vsel %vm3863, %v3612, %v3862
    %vm3865 = vcmp.eq.f32.partialorder %v3612, 0.0
    %v3866 = vand.u32 %v3612, 2147483648
    %v3867 = vsel %vm3865, %v3866, %v3864
    %v3868 = vrsqrt.pop %v3613
    %v3869 = vmul.f32 %v3868, %v3613
    %v3870 = vmul.f32 %v3869, %v3868
    %v3871 = vmul.f32 0.5, %v3870
    %v3872 = vsub.f32 1.5, %v3871
    %v3873 = vmul.f32 %v3868, %v3872
    %v3874 = vmul.f32 %v3613, %v3873
    %vm3875 = vcmp.eq.f32.partialorder %v3613, inf
    %v3876 = vsel %vm3875, %v3613, %v3874
    %vm3877 = vcmp.eq.f32.partialorder %v3613, 0.0
    %v3878 = vand.u32 %v3613, 2147483648
    %v3879 = vsel %vm3877, %v3878, %v3876
    %v3880 = vrsqrt.pop %v3614
    %v3881 = vmul.f32 %v3880, %v3614
    %v3882 = vmul.f32 %v3881, %v3880
    %v3883 = vmul.f32 0.5, %v3882
    %v3884 = vsub.f32 1.5, %v3883
    %v3885 = vmul.f32 %v3880, %v3884
    %v3886 = vmul.f32 %v3614, %v3885
    %vm3887 = vcmp.eq.f32.partialorder %v3614, inf
    %v3888 = vsel %vm3887, %v3614, %v3886
    %vm3889 = vcmp.eq.f32.partialorder %v3614, 0.0
    %v3890 = vand.u32 %v3614, 2147483648
    %v3891 = vsel %vm3889, %v3890, %v3888
    %v3892 = vrsqrt.pop %v3615
    %v3893 = vmul.f32 %v3892, %v3615
    %v3894 = vmul.f32 %v3893, %v3892
    %v3895 = vmul.f32 0.5, %v3894
    %v3896 = vsub.f32 1.5, %v3895
    %v3897 = vmul.f32 %v3892, %v3896
    %v3898 = vmul.f32 %v3615, %v3897
    %vm3899 = vcmp.eq.f32.partialorder %v3615, inf
    %v3900 = vsel %vm3899, %v3615, %v3898
    %vm3901 = vcmp.eq.f32.partialorder %v3615, 0.0
    %v3902 = vand.u32 %v3615, 2147483648
    %v3903 = vsel %vm3901, %v3902, %v3900
    %v3904 = vadd.f32 %v3771, 0.0002
    %v3905 = vadd.f32 %v3783, 0.0002
    %v3906 = vadd.f32 %v3795, 0.0002
    %v3907 = vadd.f32 %v3807, 0.0002
    %v3908 = vadd.f32 %v3819, 0.0002
    %v3909 = vadd.f32 %v3831, 0.0002
    %v3910 = vadd.f32 %v3843, 0.0002
    %v3911 = vadd.f32 %v3855, 0.0002
    %v3912 = vadd.f32 %v3867, 0.0002
    %v3913 = vadd.f32 %v3879, 0.0002
    %v3914 = vadd.f32 %v3891, 0.0002
    %v3915 = vadd.f32 %v3903, 0.0002
    %v3916 = vrcp.pop %v3904
    %v3917 = vrcp.pop %v3905
    %v3918 = vrcp.pop %v3906
    %v3919 = vrcp.pop %v3907
    %v3920 = vrcp.pop %v3908
    %v3921 = vrcp.pop %v3909
    %v3922 = vrcp.pop %v3910
    %v3923 = vrcp.pop %v3911
    %v3924 = vrcp.pop %v3912
    %v3925 = vrcp.pop %v3913
    %v3926 = vrcp.pop %v3914
    %v3927 = vrcp.pop %v3915
    %v3928 = vmul.f32 %v3627, %v3916
    %v3929 = vmul.f32 %v3639, %v3917
    %v3930 = vmul.f32 %v3651, %v3918
    %v3931 = vmul.f32 %v3663, %v3919
    %v3932 = vmul.f32 %v3675, %v3920
    %v3933 = vmul.f32 %v3687, %v3921
    %v3934 = vmul.f32 %v3699, %v3922
    %v3935 = vmul.f32 %v3711, %v3923
    %v3936 = vmul.f32 %v3723, %v3924
    %v3937 = vmul.f32 %v3735, %v3925
    %v3938 = vmul.f32 %v3747, %v3926
    %v3939 = vmul.f32 %v3759, %v3927
    %v3940 = vmul.f32 %v3928, %v3484
    %v3941 = vmul.f32 %v3929, %v3485
    %v3942 = vmul.f32 %v3930, %v3486
    %v3943 = vmul.f32 %v3931, %v3487
    %v3944 = vmul.f32 %v3932, %v3488
    %v3945 = vmul.f32 %v3933, %v3489
    %v3946 = vmul.f32 %v3934, %v3490
    %v3947 = vmul.f32 %v3935, %v3491
    %v3948 = vmul.f32 %v3936, %v3492
    %v3949 = vmul.f32 %v3937, %v3493
    %v3950 = vmul.f32 %v3938, %v3494
    %v3951 = vmul.f32 %v3939, %v3495
    %v3952 = vsub.f32 %v3472, %v3940
    %v3953 = vsub.f32 %v3473, %v3941
    %v3954 = vsub.f32 %v3474, %v3942
    %v3955 = vsub.f32 %v3475, %v3943
    %v3956 = vsub.f32 %v3476, %v3944
    %v3957 = vsub.f32 %v3477, %v3945
    %v3958 = vsub.f32 %v3478, %v3946
    %v3959 = vsub.f32 %v3479, %v3947
    %v3960 = vsub.f32 %v3480, %v3948
    %v3961 = vsub.f32 %v3481, %v3949
    %v3962 = vsub.f32 %v3482, %v3950
    %v3963 = vsub.f32 %v3483, %v3951
    %3964 = vst [vmem:[#allocation11] sm:$0xff] %v3928
    %3965 = vst [vmem:[#allocation11 + $0x8] sm:$0xff] %v3929
    %3966 = vst [vmem:[#allocation11 + $0x10] sm:$0xff] %v3930
    %3967 = vst [vmem:[#allocation11 + $0x18] sm:$0xff] %v3931
    %3968 = vst [vmem:[#allocation11 + $0x20] sm:$0xff] %v3932
    %3969 = vst [vmem:[#allocation11 + $0x28] sm:$0xff] %v3933
    %3970 = vst [vmem:[#allocation11 + $0x30] sm:$0xff] %v3934
    %3971 = vst [vmem:[#allocation11 + $0x38] sm:$0xff] %v3935
    %3972 = vst [vmem:[#allocation11 + $0x40] sm:$0xff] %v3936
    %3973 = vst [vmem:[#allocation11 + $0x48] sm:$0xff] %v3937
    %3974 = vst [vmem:[#allocation11 + $0x50] sm:$0xff] %v3938
    %3975 = vst [vmem:[#allocation11 + $0x58] sm:$0xff] %v3939
    %3976 = vst [vmem:[#allocation12] sm:$0xff] %v3952
    %3977 = vst [vmem:[#allocation12 + $0x8] sm:$0xff] %v3953
    %3978 = vst [vmem:[#allocation12 + $0x10] sm:$0xff] %v3954
    %3979 = vst [vmem:[#allocation12 + $0x18] sm:$0xff] %v3955
    %3980 = vst [vmem:[#allocation12 + $0x20] sm:$0xff] %v3956
    %3981 = vst [vmem:[#allocation12 + $0x28] sm:$0xff] %v3957
    %3982 = vst [vmem:[#allocation12 + $0x30] sm:$0xff] %v3958
    %3983 = vst [vmem:[#allocation12 + $0x38] sm:$0xff] %v3959
    %3984 = vst [vmem:[#allocation12 + $0x40] sm:$0xff] %v3960
    %3985 = vst [vmem:[#allocation12 + $0x48] sm:$0xff] %v3961
    %3986 = vst [vmem:[#allocation12 + $0x50] sm:$0xff] %v3962
    %3987 = vst [vmem:[#allocation12 + $0x58] sm:$0xff] %v3963
    %v3988 = vld [vmem:[%s4] sm:$0x1]
    %v3989 = vsub.f32 1.0, %v3988
    %vm4002 = vcmask 1041408
    %v4003 = vrot.slane %v3928, 6
    %v4004 = vrot.slane %v3929, 6
    %v4005 = vsel %vm4002, %v4003, %v4004
    %v4006 = vrot.slane %v3930, 6
    %v4007 = vsel %vm4002, %v4004, %v4006
    %v4008 = vrot.slane %v3931, 6
    %v4009 = vsel %vm4002, %v4006, %v4008
    %v4010 = vrot.slane %v3932, 6
    %v4011 = vrot.slane %v3933, 6
    %v4012 = vsel %vm4002, %v4010, %v4011
    %v4013 = vrot.slane %v3934, 6
    %v4014 = vsel %vm4002, %v4011, %v4013
    %v4015 = vrot.slane %v3935, 6
    %v4016 = vsel %vm4002, %v4013, %v4015
    %v4017 = vrot.slane %v3936, 6
    %v4018 = vrot.slane %v3937, 6
    %v4019 = vsel %vm4002, %v4017, %v4018
    %v4020 = vrot.slane %v3938, 6
    %v4021 = vsel %vm4002, %v4018, %v4020
    %v4022 = vrot.slane %v3939, 6
    %v4023 = vsel %vm4002, %v4020, %v4022
    %4024 = vrot.lane.b32.xlu0 %v4003, 2
    %v4025 = vpop.permute.xlu0 %4024
    %4026 = vrot.lane.b32.xlu0 %v4005, 2
    %v4027 = vpop.permute.xlu0 %4026
    %4028 = vrot.lane.b32.xlu0 %v4007, 2
    %v4029 = vpop.permute.xlu0 %4028
    %4030 = vrot.lane.b32.xlu0 %v4009, 2
    %v4031 = vpop.permute.xlu0 %4030
    %4032 = vrot.lane.b32.xlu0 %v4008, 2
    %v4033 = vpop.permute.xlu0 %4032
    %4034 = vrot.lane.b32.xlu0 %v4010, 2
    %v4035 = vpop.permute.xlu0 %4034
    %4036 = vrot.lane.b32.xlu0 %v4012, 2
    %v4037 = vpop.permute.xlu0 %4036
    %4038 = vrot.lane.b32.xlu0 %v4014, 2
    %v4039 = vpop.permute.xlu0 %4038
    %4040 = vrot.lane.b32.xlu0 %v4016, 2
    %v4041 = vpop.permute.xlu0 %4040
    %4042 = vrot.lane.b32.xlu0 %v4015, 2
    %v4043 = vpop.permute.xlu0 %4042
    %4044 = vrot.lane.b32.xlu0 %v4017, 2
    %v4045 = vpop.permute.xlu0 %4044
    %4046 = vrot.lane.b32.xlu0 %v4019, 2
    %v4047 = vpop.permute.xlu0 %4046
    %4048 = vrot.lane.b32.xlu0 %v4021, 2
    %v4049 = vpop.permute.xlu0 %4048
    %4050 = vrot.lane.b32.xlu0 %v4023, 2
    %v4051 = vpop.permute.xlu0 %4050
    %4052 = vrot.lane.b32.xlu0 %v4022, 2
    %v4053 = vpop.permute.xlu0 %4052
    %v4069 = vmul.f32 %v120, %v4025
    %v4070 = vmul.f32 %v121, %v4025
    %v4071 = vmul.f32 %v122, %v4027
    %v4072 = vmul.f32 %v123, %v4027
    %v4073 = vmul.f32 %v124, %v4029
    %v4074 = vmul.f32 %v125, %v4029
    %v4075 = vmul.f32 %v126, %v4031
    %v4076 = vmul.f32 %v127, %v4031
    %v4077 = vmul.f32 %v128, %v4033
    %v4078 = vmul.f32 %v129, %v4033
    %v4079 = vmul.f32 %v130, %v4035
    %v4080 = vmul.f32 %v131, %v4035
    %v4081 = vmul.f32 %v132, %v4037
    %v4082 = vmul.f32 %v133, %v4037
    %v4083 = vmul.f32 %v134, %v4039
    %v4084 = vmul.f32 %v135, %v4039
    %v4085 = vmul.f32 %v136, %v4041
    %v4086 = vmul.f32 %v137, %v4041
    %v4087 = vmul.f32 %v138, %v4043
    %v4088 = vmul.f32 %v139, %v4043
    %v4089 = vmul.f32 %v140, %v4045
    %v4090 = vmul.f32 %v141, %v4045
    %v4091 = vmul.f32 %v142, %v4047
    %v4092 = vmul.f32 %v143, %v4047
    %v4093 = vmul.f32 %v144, %v4049
    %v4094 = vmul.f32 %v145, %v4049
    %v4095 = vmul.f32 %v146, %v4051
    %v4096 = vmul.f32 %v147, %v4051
    %v4097 = vmul.f32 %v148, %v4053
    %v4098 = vmul.f32 %v149, %v4053
    %v4111 = vrot.slane %v3952, 6
    %v4112 = vrot.slane %v3953, 6
    %v4113 = vsel %vm4002, %v4111, %v4112
    %v4114 = vrot.slane %v3954, 6
    %v4115 = vsel %vm4002, %v4112, %v4114
    %v4116 = vrot.slane %v3955, 6
    %v4117 = vsel %vm4002, %v4114, %v4116
    %v4118 = vrot.slane %v3956, 6
    %v4119 = vrot.slane %v3957, 6
    %v4120 = vsel %vm4002, %v4118, %v4119
    %v4121 = vrot.slane %v3958, 6
    %v4122 = vsel %vm4002, %v4119, %v4121
    %v4123 = vrot.slane %v3959, 6
    %v4124 = vsel %vm4002, %v4121, %v4123
    %v4125 = vrot.slane %v3960, 6
    %v4126 = vrot.slane %v3961, 6
    %v4127 = vsel %vm4002, %v4125, %v4126
    %v4128 = vrot.slane %v3962, 6
    %v4129 = vsel %vm4002, %v4126, %v4128
    %v4130 = vrot.slane %v3963, 6
    %v4131 = vsel %vm4002, %v4128, %v4130
    %4132 = vrot.lane.b32.xlu0 %v4111, 2
    %v4133 = vpop.permute.xlu0 %4132
    %4134 = vrot.lane.b32.xlu0 %v4113, 2
    %v4135 = vpop.permute.xlu0 %4134
    %4136 = vrot.lane.b32.xlu0 %v4115, 2
    %v4137 = vpop.permute.xlu0 %4136
    %4138 = vrot.lane.b32.xlu0 %v4117, 2
    %v4139 = vpop.permute.xlu0 %4138
    %4140 = vrot.lane.b32.xlu0 %v4116, 2
    %v4141 = vpop.permute.xlu0 %4140
    %4142 = vrot.lane.b32.xlu0 %v4118, 2
    %v4143 = vpop.permute.xlu0 %4142
    %4144 = vrot.lane.b32.xlu0 %v4120, 2
    %v4145 = vpop.permute.xlu0 %4144
    %4146 = vrot.lane.b32.xlu0 %v4122, 2
    %v4147 = vpop.permute.xlu0 %4146
    %4148 = vrot.lane.b32.xlu0 %v4124, 2
    %v4149 = vpop.permute.xlu0 %4148
    %4150 = vrot.lane.b32.xlu0 %v4123, 2
    %v4151 = vpop.permute.xlu0 %4150
    %4152 = vrot.lane.b32.xlu0 %v4125, 2
    %v4153 = vpop.permute.xlu0 %4152
    %4154 = vrot.lane.b32.xlu0 %v4127, 2
    %v4155 = vpop.permute.xlu0 %4154
    %4156 = vrot.lane.b32.xlu0 %v4129, 2
    %v4157 = vpop.permute.xlu0 %4156
    %4158 = vrot.lane.b32.xlu0 %v4131, 2
    %v4159 = vpop.permute.xlu0 %4158
    %4160 = vrot.lane.b32.xlu0 %v4130, 2
    %v4161 = vpop.permute.xlu0 %4160
    %v4177 = vadd.f32 %v4069, %v4133
    %v4178 = vadd.f32 %v4070, %v4133
    %v4179 = vadd.f32 %v4071, %v4135
    %v4180 = vadd.f32 %v4072, %v4135
    %v4181 = vadd.f32 %v4073, %v4137
    %v4182 = vadd.f32 %v4074, %v4137
    %v4183 = vadd.f32 %v4075, %v4139
    %v4184 = vadd.f32 %v4076, %v4139
    %v4185 = vadd.f32 %v4077, %v4141
    %v4186 = vadd.f32 %v4078, %v4141
    %v4187 = vadd.f32 %v4079, %v4143
    %v4188 = vadd.f32 %v4080, %v4143
    %v4189 = vadd.f32 %v4081, %v4145
    %v4190 = vadd.f32 %v4082, %v4145
    %v4191 = vadd.f32 %v4083, %v4147
    %v4192 = vadd.f32 %v4084, %v4147
    %v4193 = vadd.f32 %v4085, %v4149
    %v4194 = vadd.f32 %v4086, %v4149
    %v4195 = vadd.f32 %v4087, %v4151
    %v4196 = vadd.f32 %v4088, %v4151
    %v4197 = vadd.f32 %v4089, %v4153
    %v4198 = vadd.f32 %v4090, %v4153
    %v4199 = vadd.f32 %v4091, %v4155
    %v4200 = vadd.f32 %v4092, %v4155
    %v4201 = vadd.f32 %v4093, %v4157
    %v4202 = vadd.f32 %v4094, %v4157
    %v4203 = vadd.f32 %v4095, %v4159
    %v4204 = vadd.f32 %v4096, %v4159
    %v4205 = vadd.f32 %v4097, %v4161
    %v4206 = vadd.f32 %v4098, %v4161
    %v4207 = vsub.f32 %v4177, %v90
    %v4208 = vsub.f32 %v4178, %v91
    %v4209 = vsub.f32 %v4179, %v92
    %v4210 = vsub.f32 %v4180, %v93
    %v4211 = vsub.f32 %v4181, %v94
    %v4212 = vsub.f32 %v4182, %v95
    %v4213 = vsub.f32 %v4183, %v96
    %v4214 = vsub.f32 %v4184, %v97
    %v4215 = vsub.f32 %v4185, %v98
    %v4216 = vsub.f32 %v4186, %v99
    %v4217 = vsub.f32 %v4187, %v100
    %v4218 = vsub.f32 %v4188, %v101
    %v4219 = vsub.f32 %v4189, %v102
    %v4220 = vsub.f32 %v4190, %v103
    %v4221 = vsub.f32 %v4191, %v104
    %v4222 = vsub.f32 %v4192, %v105
    %v4223 = vsub.f32 %v4193, %v106
    %v4224 = vsub.f32 %v4194, %v107
    %v4225 = vsub.f32 %v4195, %v108
    %v4226 = vsub.f32 %v4196, %v109
    %v4227 = vsub.f32 %v4197, %v110
    %v4228 = vsub.f32 %v4198, %v111
    %v4229 = vsub.f32 %v4199, %v112
    %v4230 = vsub.f32 %v4200, %v113
    %v4231 = vsub.f32 %v4201, %v114
    %v4232 = vsub.f32 %v4202, %v115
    %v4233 = vsub.f32 %v4203, %v116
    %v4234 = vsub.f32 %v4204, %v117
    %v4235 = vsub.f32 %v4205, %v118
    %v4236 = vsub.f32 %v4206, %v119
    %v4238 = vperm.slane %v3989, 0
    %v4270 = vrot.slane %v4207, 2
    %v4271 = vrot.slane %v4209, 2
    %v4272 = vsel %vm283, %v4270, %v4271
    %v4273 = vrot.slane %v4208, 2
    %v4274 = vrot.slane %v4210, 2
    %v4275 = vsel %vm283, %v4273, %v4274
    %v4276 = vrot.slane %v4211, 2
    %v4277 = vsel %vm283, %v4271, %v4276
    %v4278 = vrot.slane %v4212, 2
    %v4279 = vsel %vm283, %v4274, %v4278
    %v4280 = vrot.slane %v4213, 2
    %v4281 = vsel %vm283, %v4276, %v4280
    %v4282 = vrot.slane %v4214, 2
    %v4283 = vsel %vm283, %v4278, %v4282
    %v4284 = vrot.slane %v4215, 2
    %v4285 = vsel %vm283, %v4280, %v4284
    %v4286 = vrot.slane %v4216, 2
    %v4287 = vsel %vm283, %v4282, %v4286
    %v4288 = vrot.slane %v4217, 2
    %v4289 = vrot.slane %v4219, 2
    %v4290 = vsel %vm283, %v4288, %v4289
    %v4291 = vrot.slane %v4218, 2
    %v4292 = vrot.slane %v4220, 2
    %v4293 = vsel %vm283, %v4291, %v4292
    %v4294 = vrot.slane %v4221, 2
    %v4295 = vsel %vm283, %v4289, %v4294
    %v4296 = vrot.slane %v4222, 2
    %v4297 = vsel %vm283, %v4292, %v4296
    %v4298 = vrot.slane %v4223, 2
    %v4299 = vsel %vm283, %v4294, %v4298
    %v4300 = vrot.slane %v4224, 2
    %v4301 = vsel %vm283, %v4296, %v4300
    %v4302 = vrot.slane %v4225, 2
    %v4303 = vsel %vm283, %v4298, %v4302
    %v4304 = vrot.slane %v4226, 2
    %v4305 = vsel %vm283, %v4300, %v4304
    %v4306 = vrot.slane %v4227, 2
    %v4307 = vrot.slane %v4229, 2
    %v4308 = vsel %vm283, %v4306, %v4307
    %v4309 = vrot.slane %v4228, 2
    %v4310 = vrot.slane %v4230, 2
    %v4311 = vsel %vm283, %v4309, %v4310
    %v4312 = vrot.slane %v4231, 2
    %v4313 = vsel %vm283, %v4307, %v4312
    %v4314 = vrot.slane %v4232, 2
    %v4315 = vsel %vm283, %v4310, %v4314
    %v4316 = vrot.slane %v4233, 2
    %v4317 = vsel %vm283, %v4312, %v4316
    %v4318 = vrot.slane %v4234, 2
    %v4319 = vsel %vm283, %v4314, %v4318
    %v4320 = vrot.slane %v4235, 2
    %v4321 = vsel %vm283, %v4316, %v4320
    %v4322 = vrot.slane %v4236, 2
    %v4323 = vsel %vm283, %v4318, %v4322
    %4324 = vrot.lane.b32.xlu0 %v4272, 126
    %v4325 = vpop.permute.xlu0 %4324
    %4326 = vrot.lane.b32.xlu0 %v4275, 126
    %v4327 = vpop.permute.xlu0 %4326
    %4328 = vrot.lane.b32.xlu0 %v4277, 126
    %v4329 = vpop.permute.xlu0 %4328
    %4330 = vrot.lane.b32.xlu0 %v4279, 126
    %v4331 = vpop.permute.xlu0 %4330
    %4332 = vrot.lane.b32.xlu0 %v4281, 126
    %v4333 = vpop.permute.xlu0 %4332
    %4334 = vrot.lane.b32.xlu0 %v4283, 126
    %v4335 = vpop.permute.xlu0 %4334
    %4336 = vrot.lane.b32.xlu0 %v4285, 126
    %v4337 = vpop.permute.xlu0 %4336
    %4338 = vrot.lane.b32.xlu0 %v4287, 126
    %v4339 = vpop.permute.xlu0 %4338
    %4340 = vrot.lane.b32.xlu0 %v4290, 126
    %v4341 = vpop.permute.xlu0 %4340
    %4342 = vrot.lane.b32.xlu0 %v4293, 126
    %v4343 = vpop.permute.xlu0 %4342
    %4344 = vrot.lane.b32.xlu0 %v4295, 126
    %v4345 = vpop.permute.xlu0 %4344
    %4346 = vrot.lane.b32.xlu0 %v4297, 126
    %v4347 = vpop.permute.xlu0 %4346
    %4348 = vrot.lane.b32.xlu0 %v4299, 126
    %v4349 = vpop.permute.xlu0 %4348
    %4350 = vrot.lane.b32.xlu0 %v4301, 126
    %v4351 = vpop.permute.xlu0 %4350
    %4352 = vrot.lane.b32.xlu0 %v4303, 126
    %v4353 = vpop.permute.xlu0 %4352
    %4354 = vrot.lane.b32.xlu0 %v4305, 126
    %v4355 = vpop.permute.xlu0 %4354
    %4356 = vrot.lane.b32.xlu0 %v4308, 126
    %v4357 = vpop.permute.xlu0 %4356
    %4358 = vrot.lane.b32.xlu0 %v4311, 126
    %v4359 = vpop.permute.xlu0 %4358
    %4360 = vrot.lane.b32.xlu0 %v4313, 126
    %v4361 = vpop.permute.xlu0 %4360
    %4362 = vrot.lane.b32.xlu0 %v4315, 126
    %v4363 = vpop.permute.xlu0 %4362
    %4364 = vrot.lane.b32.xlu0 %v4317, 126
    %v4365 = vpop.permute.xlu0 %4364
    %4366 = vrot.lane.b32.xlu0 %v4319, 126
    %v4367 = vpop.permute.xlu0 %4366
    %4368 = vrot.lane.b32.xlu0 %v4321, 126
    %v4369 = vpop.permute.xlu0 %4368
    %4370 = vrot.lane.b32.xlu0 %v4323, 126
    %v4371 = vpop.permute.xlu0 %4370
    %v4372 = vsel %vm749, %v4325, %v4327
    %v4373 = vsel %vm749, %v4329, %v4331
    %v4374 = vsel %vm749, %v4333, %v4335
    %v4375 = vsel %vm749, %v4337, %v4339
    %v4376 = vsel %vm749, %v4341, %v4343
    %v4377 = vsel %vm749, %v4345, %v4347
    %v4378 = vsel %vm749, %v4349, %v4351
    %v4379 = vsel %vm749, %v4353, %v4355
    %v4380 = vsel %vm749, %v4357, %v4359
    %v4381 = vsel %vm749, %v4361, %v4363
    %v4382 = vsel %vm749, %v4365, %v4367
    %v4383 = vsel %vm749, %v4369, %v4371
    %v4396 = vmul.f32 %v4238, %v4372
    %v4397 = vmul.f32 %v4238, %v4373
    %v4398 = vmul.f32 %v4238, %v4374
    %v4399 = vmul.f32 %v4238, %v4375
    %v4400 = vmul.f32 %v4238, %v4376
    %v4401 = vmul.f32 %v4238, %v4377
    %v4402 = vmul.f32 %v4238, %v4378
    %v4403 = vmul.f32 %v4238, %v4379
    %v4404 = vmul.f32 %v4238, %v4380
    %v4405 = vmul.f32 %v4238, %v4381
    %v4406 = vmul.f32 %v4238, %v4382
    %v4407 = vmul.f32 %v4238, %v4383
    %v4408 = vmul.f32 %v4396, %v4372
    %v4409 = vmul.f32 %v4397, %v4373
    %v4410 = vmul.f32 %v4398, %v4374
    %v4411 = vmul.f32 %v4399, %v4375
    %v4412 = vmul.f32 %v4400, %v4376
    %v4413 = vmul.f32 %v4401, %v4377
    %v4414 = vmul.f32 %v4402, %v4378
    %v4415 = vmul.f32 %v4403, %v4379
    %v4416 = vmul.f32 %v4404, %v4380
    %v4417 = vmul.f32 %v4405, %v4381
    %v4418 = vmul.f32 %v4406, %v4382
    %v4419 = vmul.f32 %v4407, %v4383
    %v4420 = vrot.slane %v3928, 1
    %v4421 = vrot.slane %v3929, 1
    %v4422 = vsel %vm180, %v4420, %v4421
    %v4423 = vrot.slane %v3930, 1
    %v4424 = vsel %vm180, %v4421, %v4423
    %v4425 = vrot.slane %v3931, 1
    %v4426 = vsel %vm180, %v4423, %v4425
    %v4427 = vrot.slane %v3932, 1
    %v4428 = vrot.slane %v3933, 1
    %v4429 = vsel %vm180, %v4427, %v4428
    %v4430 = vrot.slane %v3934, 1
    %v4431 = vsel %vm180, %v4428, %v4430
    %v4432 = vrot.slane %v3935, 1
    %v4433 = vsel %vm180, %v4430, %v4432
    %v4434 = vrot.slane %v3936, 1
    %v4435 = vrot.slane %v3937, 1
    %v4436 = vsel %vm180, %v4434, %v4435
    %v4437 = vrot.slane %v3938, 1
    %v4438 = vsel %vm180, %v4435, %v4437
    %v4439 = vrot.slane %v3939, 1
    %v4440 = vsel %vm180, %v4437, %v4439
    %v4456 = vsel %vm180, %v4425, %v4420
    %v4457 = vsel %vm180, %v4432, %v4427
    %v4458 = vsel %vm180, %v4439, %v4434
    %v4459 = vsub.f32 %v3928, %v4422
    %v4460 = vsub.f32 %v3929, %v4424
    %v4461 = vsub.f32 %v3930, %v4426
    %v4462 = vsub.f32 %v3931, %v4456
    %v4463 = vsub.f32 %v3932, %v4429
    %v4464 = vsub.f32 %v3933, %v4431
    %v4465 = vsub.f32 %v3934, %v4433
    %v4466 = vsub.f32 %v3935, %v4457
    %v4467 = vsub.f32 %v3936, %v4436
    %v4468 = vsub.f32 %v3937, %v4438
    %v4469 = vsub.f32 %v3938, %v4440
    %v4470 = vsub.f32 %v3939, %v4458
    %v4471 = vmul.f32 %v4459, %v4459
    %v4472 = vmul.f32 %v4460, %v4460
    %v4473 = vmul.f32 %v4461, %v4461
    %v4474 = vmul.f32 %v4462, %v4462
    %v4475 = vmul.f32 %v4463, %v4463
    %v4476 = vmul.f32 %v4464, %v4464
    %v4477 = vmul.f32 %v4465, %v4465
    %v4478 = vmul.f32 %v4466, %v4466
    %v4479 = vmul.f32 %v4467, %v4467
    %v4480 = vmul.f32 %v4468, %v4468
    %v4481 = vmul.f32 %v4469, %v4469
    %v4482 = vmul.f32 %v4470, %v4470
    %v4483 = vrot.slane %v3952, 1
    %v4484 = vrot.slane %v3953, 1
    %v4485 = vsel %vm180, %v4483, %v4484
    %v4486 = vrot.slane %v3954, 1
    %v4487 = vsel %vm180, %v4484, %v4486
    %v4488 = vrot.slane %v3955, 1
    %v4489 = vsel %vm180, %v4486, %v4488
    %v4490 = vrot.slane %v3956, 1
    %v4491 = vrot.slane %v3957, 1
    %v4492 = vsel %vm180, %v4490, %v4491
    %v4493 = vrot.slane %v3958, 1
    %v4494 = vsel %vm180, %v4491, %v4493
    %v4495 = vrot.slane %v3959, 1
    %v4496 = vsel %vm180, %v4493, %v4495
    %v4497 = vrot.slane %v3960, 1
    %v4498 = vrot.slane %v3961, 1
    %v4499 = vsel %vm180, %v4497, %v4498
    %v4500 = vrot.slane %v3962, 1
    %v4501 = vsel %vm180, %v4498, %v4500
    %v4502 = vrot.slane %v3963, 1
    %v4503 = vsel %vm180, %v4500, %v4502
    %v4519 = vsel %vm180, %v4488, %v4483
    %v4520 = vsel %vm180, %v4495, %v4490
    %v4521 = vsel %vm180, %v4502, %v4497
    %v4522 = vsub.f32 %v3952, %v4485
    %v4523 = vsub.f32 %v3953, %v4487
    %v4524 = vsub.f32 %v3954, %v4489
    %v4525 = vsub.f32 %v3955, %v4519
    %v4526 = vsub.f32 %v3956, %v4492
    %v4527 = vsub.f32 %v3957, %v4494
    %v4528 = vsub.f32 %v3958, %v4496
    %v4529 = vsub.f32 %v3959, %v4520
    %v4530 = vsub.f32 %v3960, %v4499
    %v4531 = vsub.f32 %v3961, %v4501
    %v4532 = vsub.f32 %v3962, %v4503
    %v4533 = vsub.f32 %v3963, %v4521
    %v4534 = vmul.f32 %v4522, %v4522
    %v4535 = vmul.f32 %v4523, %v4523
    %v4536 = vmul.f32 %v4524, %v4524
    %v4537 = vmul.f32 %v4525, %v4525
    %v4538 = vmul.f32 %v4526, %v4526
    %v4539 = vmul.f32 %v4527, %v4527
    %v4540 = vmul.f32 %v4528, %v4528
    %v4541 = vmul.f32 %v4529, %v4529
    %v4542 = vmul.f32 %v4530, %v4530
    %v4543 = vmul.f32 %v4531, %v4531
    %v4544 = vmul.f32 %v4532, %v4532
    %v4545 = vmul.f32 %v4533, %v4533
    %v4546 = vadd.f32 %v4471, %v4534
    %v4547 = vadd.f32 %v4472, %v4535
    %v4548 = vadd.f32 %v4473, %v4536
    %v4549 = vadd.f32 %v4474, %v4537
    %v4550 = vadd.f32 %v4475, %v4538
    %v4551 = vadd.f32 %v4476, %v4539
    %v4552 = vadd.f32 %v4477, %v4540
    %v4553 = vadd.f32 %v4478, %v4541
    %v4554 = vadd.f32 %v4479, %v4542
    %v4555 = vadd.f32 %v4480, %v4543
    %v4556 = vadd.f32 %v4481, %v4544
    %v4557 = vadd.f32 %v4482, %v4545
    %v4560 = vsel %vm180, %v2033, %v2018
    %v4561 = vsel %vm180, %v2035, %v2021
    %v4564 = vrot.slane %v2020, 6
    %v4565 = vrot.slane %v2023, 6
    %v4566 = vrot.slane %v2025, 6
    %v4567 = vsel %vm4002, %v4564, %v4566
    %v4568 = vrot.slane %v2027, 6
    %v4569 = vsel %vm4002, %v4565, %v4568
    %v4570 = vrot.slane %v2029, 6
    %v4571 = vsel %vm4002, %v4566, %v4570
    %v4572 = vrot.slane %v2031, 6
    %v4573 = vsel %vm4002, %v4568, %v4572
    %v4574 = vrot.slane %v4560, 6
    %v4575 = vsel %vm4002, %v4570, %v4574
    %v4576 = vrot.slane %v4561, 6
    %v4577 = vsel %vm4002, %v4572, %v4576
    %v4588 = vsub.f32 %v120, %v4564
    %v4589 = vsub.f32 %v121, %v4565
    %v4590 = vsub.f32 %v122, %v4567
    %v4591 = vsub.f32 %v123, %v4569
    %v4592 = vsub.f32 %v124, %v4571
    %v4593 = vsub.f32 %v125, %v4573
    %v4594 = vsub.f32 %v126, %v4575
    %v4595 = vsub.f32 %v127, %v4577
    %v4596 = vsub.f32 %v128, %v4574
    %v4597 = vsub.f32 %v129, %v4576
    %v4598 = vand.u32 2147483647, %v4588
    %v4599 = vand.u32 2147483647, %v4589
    %v4600 = vand.u32 2147483647, %v4590
    %v4601 = vand.u32 2147483647, %v4591
    %v4602 = vand.u32 2147483647, %v4592
    %v4603 = vand.u32 2147483647, %v4593
    %v4604 = vand.u32 2147483647, %v4594
    %v4605 = vand.u32 2147483647, %v4595
    %v4606 = vand.u32 2147483647, %v4596
    %v4607 = vand.u32 2147483647, %v4597
    %v4608 = vadd.f32 %v4598, 1e-30
    %v4609 = vadd.f32 %v4599, 1e-30
    %v4610 = vadd.f32 %v4600, 1e-30
    %v4611 = vadd.f32 %v4601, 1e-30
    %v4612 = vadd.f32 %v4602, 1e-30
    %v4613 = vadd.f32 %v4603, 1e-30
    %v4614 = vadd.f32 %v4604, 1e-30
    %v4615 = vadd.f32 %v4605, 1e-30
    %v4616 = vadd.f32 %v4606, 1e-30
    %v4617 = vadd.f32 %v4607, 1e-30
    %v4618 = vlog2.pop %v4608
    %v4619 = vmul.f32 %v4618, 0.6931472
    %v4620 = vlog2.pop %v4609
    %v4621 = vmul.f32 %v4620, 0.6931472
    %v4622 = vlog2.pop %v4610
    %v4623 = vmul.f32 %v4622, 0.6931472
    %v4624 = vlog2.pop %v4611
    %v4625 = vmul.f32 %v4624, 0.6931472
    %v4626 = vlog2.pop %v4612
    %v4627 = vmul.f32 %v4626, 0.6931472
    %v4628 = vlog2.pop %v4613
    %v4629 = vmul.f32 %v4628, 0.6931472
    %v4630 = vlog2.pop %v4614
    %v4631 = vmul.f32 %v4630, 0.6931472
    %v4632 = vlog2.pop %v4615
    %v4633 = vmul.f32 %v4632, 0.6931472
    %v4634 = vlog2.pop %v4616
    %v4635 = vmul.f32 %v4634, 0.6931472
    %v4636 = vlog2.pop %v4617
    %v4637 = vmul.f32 %v4636, 0.6931472
    %v4638 = vmul.f32 %v4619, 1.2
    %v4639 = vmul.f32 %v4621, 1.2
    %v4640 = vmul.f32 %v4623, 1.2
    %v4641 = vmul.f32 %v4625, 1.2
    %v4642 = vmul.f32 %v4627, 1.2
    %v4643 = vmul.f32 %v4629, 1.2
    %v4644 = vmul.f32 %v4631, 1.2
    %v4645 = vmul.f32 %v4633, 1.2
    %v4646 = vmul.f32 %v4635, 1.2
    %v4647 = vmul.f32 %v4637, 1.2
    %v4648 = vmul.f32 %v4638, 1.442695
    %v4649 = vpow.pop %v4648
    %v4650 = vmul.f32 %v4639, 1.442695
    %v4651 = vpow.pop %v4650
    %v4652 = vmul.f32 %v4640, 1.442695
    %v4653 = vpow.pop %v4652
    %v4654 = vmul.f32 %v4641, 1.442695
    %v4655 = vpow.pop %v4654
    %v4656 = vmul.f32 %v4642, 1.442695
    %v4657 = vpow.pop %v4656
    %v4658 = vmul.f32 %v4643, 1.442695
    %v4659 = vpow.pop %v4658
    %v4660 = vmul.f32 %v4644, 1.442695
    %v4661 = vpow.pop %v4660
    %v4662 = vmul.f32 %v4645, 1.442695
    %v4663 = vpow.pop %v4662
    %v4664 = vmul.f32 %v4646, 1.442695
    %v4665 = vpow.pop %v4664
    %v4666 = vmul.f32 %v4647, 1.442695
    %v4667 = vpow.pop %v4666
    %v4668 = vadd.f32 %v4649, 0.0001
    %v4669 = vadd.f32 %v4651, 0.0001
    %v4670 = vadd.f32 %v4653, 0.0001
    %v4671 = vadd.f32 %v4655, 0.0001
    %v4672 = vadd.f32 %v4657, 0.0001
    %v4673 = vadd.f32 %v4659, 0.0001
    %v4674 = vadd.f32 %v4661, 0.0001
    %v4675 = vadd.f32 %v4663, 0.0001
    %v4676 = vadd.f32 %v4665, 0.0001
    %v4677 = vadd.f32 %v4667, 0.0001
    %v4678 = vrcp.pop %v4668
    %v4679 = vrcp.pop %v4669
    %v4680 = vrcp.pop %v4670
    %v4681 = vrcp.pop %v4671
    %v4682 = vrcp.pop %v4672
    %v4683 = vrcp.pop %v4673
    %v4684 = vrcp.pop %v4674
    %v4685 = vrcp.pop %v4675
    %v4686 = vrcp.pop %v4676
    %v4687 = vrcp.pop %v4677
    %v4698 = vrot.slane %v4678, 2
    %v4699 = vrot.slane %v4680, 2
    %v4700 = vsel %vm283, %v4698, %v4699
    %v4701 = vrot.slane %v4679, 2
    %v4702 = vrot.slane %v4681, 2
    %v4703 = vsel %vm283, %v4701, %v4702
    %v4704 = vrot.slane %v4682, 2
    %v4705 = vsel %vm283, %v4699, %v4704
    %v4706 = vrot.slane %v4683, 2
    %v4707 = vsel %vm283, %v4702, %v4706
    %v4708 = vrot.slane %v4684, 2
    %v4709 = vsel %vm283, %v4704, %v4708
    %v4710 = vrot.slane %v4685, 2
    %v4711 = vsel %vm283, %v4706, %v4710
    %v4712 = vrot.slane %v4686, 2
    %v4713 = vsel %vm283, %v4708, %v4712
    %v4714 = vrot.slane %v4687, 2
    %v4715 = vsel %vm283, %v4710, %v4714
    %4716 = vrot.lane.b32.xlu0 %v4700, 126
    %v4717 = vpop.permute.xlu0 %4716
    %4718 = vrot.lane.b32.xlu0 %v4703, 126
    %v4719 = vpop.permute.xlu0 %4718
    %4720 = vrot.lane.b32.xlu0 %v4705, 126
    %v4721 = vpop.permute.xlu0 %4720
    %4722 = vrot.lane.b32.xlu0 %v4707, 126
    %v4723 = vpop.permute.xlu0 %4722
    %4724 = vrot.lane.b32.xlu0 %v4709, 126
    %v4725 = vpop.permute.xlu0 %4724
    %4726 = vrot.lane.b32.xlu0 %v4711, 126
    %v4727 = vpop.permute.xlu0 %4726
    %4728 = vrot.lane.b32.xlu0 %v4713, 126
    %v4729 = vpop.permute.xlu0 %4728
    %4730 = vrot.lane.b32.xlu0 %v4715, 126
    %v4731 = vpop.permute.xlu0 %4730
    %v4732 = vsel %vm749, %v4717, %v4719
    %v4733 = vsel %vm749, %v4721, %v4723
    %v4734 = vsel %vm749, %v4725, %v4727
    %v4735 = vsel %vm749, %v4729, %v4731
    %v4740 = vmul.f32 %v4546, %v4732
    %v4741 = vmul.f32 %v4547, %v4733
    %v4742 = vmul.f32 %v4548, %v4734
    %v4743 = vmul.f32 %v4549, %v4735
    %v4744 = vmul.f32 %v4550, %v4732
    %v4745 = vmul.f32 %v4551, %v4733
    %v4746 = vmul.f32 %v4552, %v4734
    %v4747 = vmul.f32 %v4553, %v4735
    %v4748 = vmul.f32 %v4554, %v4732
    %v4749 = vmul.f32 %v4555, %v4733
    %v4750 = vmul.f32 %v4556, %v4734
    %v4751 = vmul.f32 %v4557, %v4735
    %4752 = vrot.lane.b32.xlu0 %v3928, 127
    %v4753 = vpop.permute.xlu0 %4752
    %4754 = vrot.lane.b32.xlu0 %v3929, 127
    %v4755 = vpop.permute.xlu0 %4754
    %4756 = vrot.lane.b32.xlu0 %v3930, 127
    %v4757 = vpop.permute.xlu0 %4756
    %4758 = vrot.lane.b32.xlu0 %v3931, 127
    %v4759 = vpop.permute.xlu0 %4758
    %4760 = vrot.lane.b32.xlu0 %v3932, 127
    %v4761 = vpop.permute.xlu0 %4760
    %4762 = vrot.lane.b32.xlu0 %v3933, 127
    %v4763 = vpop.permute.xlu0 %4762
    %4764 = vrot.lane.b32.xlu0 %v3934, 127
    %v4765 = vpop.permute.xlu0 %4764
    %4766 = vrot.lane.b32.xlu0 %v3935, 127
    %v4767 = vpop.permute.xlu0 %4766
    %4768 = vrot.lane.b32.xlu0 %v3936, 127
    %v4769 = vpop.permute.xlu0 %4768
    %4770 = vrot.lane.b32.xlu0 %v3937, 127
    %v4771 = vpop.permute.xlu0 %4770
    %4772 = vrot.lane.b32.xlu0 %v3938, 127
    %v4773 = vpop.permute.xlu0 %4772
    %4774 = vrot.lane.b32.xlu0 %v3939, 127
    %v4775 = vpop.permute.xlu0 %4774
    %v4788 = vsub.f32 %v3928, %v4753
    %v4789 = vsub.f32 %v3929, %v4755
    %v4790 = vsub.f32 %v3930, %v4757
    %v4791 = vsub.f32 %v3931, %v4759
    %v4792 = vsub.f32 %v3932, %v4761
    %v4793 = vsub.f32 %v3933, %v4763
    %v4794 = vsub.f32 %v3934, %v4765
    %v4795 = vsub.f32 %v3935, %v4767
    %v4796 = vsub.f32 %v3936, %v4769
    %v4797 = vsub.f32 %v3937, %v4771
    %v4798 = vsub.f32 %v3938, %v4773
    %v4799 = vsub.f32 %v3939, %v4775
    %v4800 = vmul.f32 %v4788, %v4788
    %v4801 = vmul.f32 %v4789, %v4789
    %v4802 = vmul.f32 %v4790, %v4790
    %v4803 = vmul.f32 %v4791, %v4791
    %v4804 = vmul.f32 %v4792, %v4792
    %v4805 = vmul.f32 %v4793, %v4793
    %v4806 = vmul.f32 %v4794, %v4794
    %v4807 = vmul.f32 %v4795, %v4795
    %v4808 = vmul.f32 %v4796, %v4796
    %v4809 = vmul.f32 %v4797, %v4797
    %v4810 = vmul.f32 %v4798, %v4798
    %v4811 = vmul.f32 %v4799, %v4799
    %4812 = vrot.lane.b32.xlu0 %v3952, 127
    %v4813 = vpop.permute.xlu0 %4812
    %4814 = vrot.lane.b32.xlu0 %v3953, 127
    %v4815 = vpop.permute.xlu0 %4814
    %4816 = vrot.lane.b32.xlu0 %v3954, 127
    %v4817 = vpop.permute.xlu0 %4816
    %4818 = vrot.lane.b32.xlu0 %v3955, 127
    %v4819 = vpop.permute.xlu0 %4818
    %4820 = vrot.lane.b32.xlu0 %v3956, 127
    %v4821 = vpop.permute.xlu0 %4820
    %4822 = vrot.lane.b32.xlu0 %v3957, 127
    %v4823 = vpop.permute.xlu0 %4822
    %4824 = vrot.lane.b32.xlu0 %v3958, 127
    %v4825 = vpop.permute.xlu0 %4824
    %4826 = vrot.lane.b32.xlu0 %v3959, 127
    %v4827 = vpop.permute.xlu0 %4826
    %4828 = vrot.lane.b32.xlu0 %v3960, 127
    %v4829 = vpop.permute.xlu0 %4828
    %4830 = vrot.lane.b32.xlu0 %v3961, 127
    %v4831 = vpop.permute.xlu0 %4830
    %4832 = vrot.lane.b32.xlu0 %v3962, 127
    %v4833 = vpop.permute.xlu0 %4832
    %4834 = vrot.lane.b32.xlu0 %v3963, 127
    %v4835 = vpop.permute.xlu0 %4834
    %v4848 = vsub.f32 %v3952, %v4813
    %v4849 = vsub.f32 %v3953, %v4815
    %v4850 = vsub.f32 %v3954, %v4817
    %v4851 = vsub.f32 %v3955, %v4819
    %v4852 = vsub.f32 %v3956, %v4821
    %v4853 = vsub.f32 %v3957, %v4823
    %v4854 = vsub.f32 %v3958, %v4825
    %v4855 = vsub.f32 %v3959, %v4827
    %v4856 = vsub.f32 %v3960, %v4829
    %v4857 = vsub.f32 %v3961, %v4831
    %v4858 = vsub.f32 %v3962, %v4833
    %v4859 = vsub.f32 %v3963, %v4835
    %v4860 = vmul.f32 %v4848, %v4848
    %v4861 = vmul.f32 %v4849, %v4849
    %v4862 = vmul.f32 %v4850, %v4850
    %v4863 = vmul.f32 %v4851, %v4851
    %v4864 = vmul.f32 %v4852, %v4852
    %v4865 = vmul.f32 %v4853, %v4853
    %v4866 = vmul.f32 %v4854, %v4854
    %v4867 = vmul.f32 %v4855, %v4855
    %v4868 = vmul.f32 %v4856, %v4856
    %v4869 = vmul.f32 %v4857, %v4857
    %v4870 = vmul.f32 %v4858, %v4858
    %v4871 = vmul.f32 %v4859, %v4859
    %v4872 = vadd.f32 %v4800, %v4860
    %v4873 = vadd.f32 %v4801, %v4861
    %v4874 = vadd.f32 %v4802, %v4862
    %v4875 = vadd.f32 %v4803, %v4863
    %v4876 = vadd.f32 %v4804, %v4864
    %v4877 = vadd.f32 %v4805, %v4865
    %v4878 = vadd.f32 %v4806, %v4866
    %v4879 = vadd.f32 %v4807, %v4867
    %v4880 = vadd.f32 %v4808, %v4868
    %v4881 = vadd.f32 %v4809, %v4869
    %v4882 = vadd.f32 %v4810, %v4870
    %v4883 = vadd.f32 %v4811, %v4871
    %4884 = vrot.lane.b32.xlu0 %v120, 125
    %v4885 = vpop.permute.xlu0 %4884
    %4886 = vrot.lane.b32.xlu0 %v121, 125
    %v4887 = vpop.permute.xlu0 %4886
    %4888 = vrot.lane.b32.xlu0 %v122, 125
    %v4889 = vpop.permute.xlu0 %4888
    %4890 = vrot.lane.b32.xlu0 %v123, 125
    %v4891 = vpop.permute.xlu0 %4890
    %4892 = vrot.lane.b32.xlu0 %v124, 125
    %v4893 = vpop.permute.xlu0 %4892
    %4894 = vrot.lane.b32.xlu0 %v125, 125
    %v4895 = vpop.permute.xlu0 %4894
    %4896 = vrot.lane.b32.xlu0 %v126, 125
    %v4897 = vpop.permute.xlu0 %4896
    %4898 = vrot.lane.b32.xlu0 %v127, 125
    %v4899 = vpop.permute.xlu0 %4898
    %4900 = vrot.lane.b32.xlu0 %v128, 125
    %v4901 = vpop.permute.xlu0 %4900
    %4902 = vrot.lane.b32.xlu0 %v129, 125
    %v4903 = vpop.permute.xlu0 %4902
    %v4904 = vsel %vm834, %v4885, %v4887
    %v4905 = vsel %vm834, %v4889, %v4891
    %v4906 = vsel %vm834, %v4893, %v4895
    %v4907 = vsel %vm834, %v4897, %v4899
    %v4908 = vsel %vm834, %v4901, %v4903
    %v4919 = vsel %vm664, %v4904, %v4885
    %v4920 = vsel %vm664, %v4905, %v4889
    %v4921 = vsel %vm664, %v4906, %v4893
    %v4922 = vsel %vm664, %v4907, %v4897
    %v4923 = vsel %vm664, %v4908, %v4901
    %4929 = vrot.lane.b32.xlu0 %v4919, 2
    %v4930 = vpop.permute.xlu0 %4929
    %4931 = vrot.lane.b32.xlu0 %v4920, 2
    %v4932 = vpop.permute.xlu0 %4931
    %4933 = vrot.lane.b32.xlu0 %v4921, 2
    %v4934 = vpop.permute.xlu0 %4933
    %4935 = vrot.lane.b32.xlu0 %v4922, 2
    %v4936 = vpop.permute.xlu0 %4935
    %4937 = vrot.lane.b32.xlu0 %v4923, 2
    %v4938 = vpop.permute.xlu0 %4937
    %v4944 = vsub.f32 %v120, %v4930
    %v4945 = vsub.f32 %v121, %v4930
    %v4946 = vsub.f32 %v122, %v4932
    %v4947 = vsub.f32 %v123, %v4932
    %v4948 = vsub.f32 %v124, %v4934
    %v4949 = vsub.f32 %v125, %v4934
    %v4950 = vsub.f32 %v126, %v4936
    %v4951 = vsub.f32 %v127, %v4936
    %v4952 = vsub.f32 %v128, %v4938
    %v4953 = vsub.f32 %v129, %v4938
    %v4954 = vand.u32 2147483647, %v4944
    %v4955 = vand.u32 2147483647, %v4945
    %v4956 = vand.u32 2147483647, %v4946
    %v4957 = vand.u32 2147483647, %v4947
    %v4958 = vand.u32 2147483647, %v4948
    %v4959 = vand.u32 2147483647, %v4949
    %v4960 = vand.u32 2147483647, %v4950
    %v4961 = vand.u32 2147483647, %v4951
    %v4962 = vand.u32 2147483647, %v4952
    %v4963 = vand.u32 2147483647, %v4953
    %v4964 = vadd.f32 %v4954, 1e-30
    %v4965 = vadd.f32 %v4955, 1e-30
    %v4966 = vadd.f32 %v4956, 1e-30
    %v4967 = vadd.f32 %v4957, 1e-30
    %v4968 = vadd.f32 %v4958, 1e-30
    %v4969 = vadd.f32 %v4959, 1e-30
    %v4970 = vadd.f32 %v4960, 1e-30
    %v4971 = vadd.f32 %v4961, 1e-30
    %v4972 = vadd.f32 %v4962, 1e-30
    %v4973 = vadd.f32 %v4963, 1e-30
    %v4974 = vlog2.pop %v4964
    %v4975 = vmul.f32 %v4974, 0.6931472
    %v4976 = vlog2.pop %v4965
    %v4977 = vmul.f32 %v4976, 0.6931472
    %v4978 = vlog2.pop %v4966
    %v4979 = vmul.f32 %v4978, 0.6931472
    %v4980 = vlog2.pop %v4967
    %v4981 = vmul.f32 %v4980, 0.6931472
    %v4982 = vlog2.pop %v4968
    %v4983 = vmul.f32 %v4982, 0.6931472
    %v4984 = vlog2.pop %v4969
    %v4985 = vmul.f32 %v4984, 0.6931472
    %v4986 = vlog2.pop %v4970
    %v4987 = vmul.f32 %v4986, 0.6931472
    %v4988 = vlog2.pop %v4971
    %v4989 = vmul.f32 %v4988, 0.6931472
    %v4990 = vlog2.pop %v4972
    %v4991 = vmul.f32 %v4990, 0.6931472
    %v4992 = vlog2.pop %v4973
    %v4993 = vmul.f32 %v4992, 0.6931472
    %v4994 = vmul.f32 %v4975, 1.2
    %v4995 = vmul.f32 %v4977, 1.2
    %v4996 = vmul.f32 %v4979, 1.2
    %v4997 = vmul.f32 %v4981, 1.2
    %v4998 = vmul.f32 %v4983, 1.2
    %v4999 = vmul.f32 %v4985, 1.2
    %v5000 = vmul.f32 %v4987, 1.2
    %v5001 = vmul.f32 %v4989, 1.2
    %v5002 = vmul.f32 %v4991, 1.2
    %v5003 = vmul.f32 %v4993, 1.2
    %v5004 = vmul.f32 %v4994, 1.442695
    %v5005 = vpow.pop %v5004
    %v5006 = vmul.f32 %v4995, 1.442695
    %v5007 = vpow.pop %v5006
    %v5008 = vmul.f32 %v4996, 1.442695
    %v5009 = vpow.pop %v5008
    %v5010 = vmul.f32 %v4997, 1.442695
    %v5011 = vpow.pop %v5010
    %v5012 = vmul.f32 %v4998, 1.442695
    %v5013 = vpow.pop %v5012
    %v5014 = vmul.f32 %v4999, 1.442695
    %v5015 = vpow.pop %v5014
    %v5016 = vmul.f32 %v5000, 1.442695
    %v5017 = vpow.pop %v5016
    %v5018 = vmul.f32 %v5001, 1.442695
    %v5019 = vpow.pop %v5018
    %v5020 = vmul.f32 %v5002, 1.442695
    %v5021 = vpow.pop %v5020
    %v5022 = vmul.f32 %v5003, 1.442695
    %v5023 = vpow.pop %v5022
    %v5024 = vadd.f32 %v5005, 0.0001
    %v5025 = vadd.f32 %v5007, 0.0001
    %v5026 = vadd.f32 %v5009, 0.0001
    %v5027 = vadd.f32 %v5011, 0.0001
    %v5028 = vadd.f32 %v5013, 0.0001
    %v5029 = vadd.f32 %v5015, 0.0001
    %v5030 = vadd.f32 %v5017, 0.0001
    %v5031 = vadd.f32 %v5019, 0.0001
    %v5032 = vadd.f32 %v5021, 0.0001
    %v5033 = vadd.f32 %v5023, 0.0001
    %v5034 = vrcp.pop %v5024
    %v5035 = vrcp.pop %v5025
    %v5036 = vrcp.pop %v5026
    %v5037 = vrcp.pop %v5027
    %v5038 = vrcp.pop %v5028
    %v5039 = vrcp.pop %v5029
    %v5040 = vrcp.pop %v5030
    %v5041 = vrcp.pop %v5031
    %v5042 = vrcp.pop %v5032
    %v5043 = vrcp.pop %v5033
    %v5054 = vrot.slane %v5034, 2
    %v5055 = vrot.slane %v5036, 2
    %v5056 = vsel %vm283, %v5054, %v5055
    %v5057 = vrot.slane %v5035, 2
    %v5058 = vrot.slane %v5037, 2
    %v5059 = vsel %vm283, %v5057, %v5058
    %v5060 = vrot.slane %v5038, 2
    %v5061 = vsel %vm283, %v5055, %v5060
    %v5062 = vrot.slane %v5039, 2
    %v5063 = vsel %vm283, %v5058, %v5062
    %v5064 = vrot.slane %v5040, 2
    %v5065 = vsel %vm283, %v5060, %v5064
    %v5066 = vrot.slane %v5041, 2
    %v5067 = vsel %vm283, %v5062, %v5066
    %v5068 = vrot.slane %v5042, 2
    %v5069 = vsel %vm283, %v5064, %v5068
    %v5070 = vrot.slane %v5043, 2
    %v5071 = vsel %vm283, %v5066, %v5070
    %5072 = vrot.lane.b32.xlu0 %v5056, 126
    %v5073 = vpop.permute.xlu0 %5072
    %5074 = vrot.lane.b32.xlu0 %v5059, 126
    %v5075 = vpop.permute.xlu0 %5074
    %5076 = vrot.lane.b32.xlu0 %v5061, 126
    %v5077 = vpop.permute.xlu0 %5076
    %5078 = vrot.lane.b32.xlu0 %v5063, 126
    %v5079 = vpop.permute.xlu0 %5078
    %5080 = vrot.lane.b32.xlu0 %v5065, 126
    %v5081 = vpop.permute.xlu0 %5080
    %5082 = vrot.lane.b32.xlu0 %v5067, 126
    %v5083 = vpop.permute.xlu0 %5082
    %5084 = vrot.lane.b32.xlu0 %v5069, 126
    %v5085 = vpop.permute.xlu0 %5084
    %5086 = vrot.lane.b32.xlu0 %v5071, 126
    %v5087 = vpop.permute.xlu0 %5086
    %v5088 = vsel %vm749, %v5073, %v5075
    %v5089 = vsel %vm749, %v5077, %v5079
    %v5090 = vsel %vm749, %v5081, %v5083
    %v5091 = vsel %vm749, %v5085, %v5087
    %v5096 = vmul.f32 %v4872, %v5088
    %v5097 = vmul.f32 %v4873, %v5089
    %v5098 = vmul.f32 %v4874, %v5090
    %v5099 = vmul.f32 %v4875, %v5091
    %v5100 = vmul.f32 %v4876, %v5088
    %v5101 = vmul.f32 %v4877, %v5089
    %v5102 = vmul.f32 %v4878, %v5090
    %v5103 = vmul.f32 %v4879, %v5091
    %v5104 = vmul.f32 %v4880, %v5088
    %v5105 = vmul.f32 %v4881, %v5089
    %v5106 = vmul.f32 %v4882, %v5090
    %v5107 = vmul.f32 %v4883, %v5091
    %v5108 = vadd.f32 %v4740, %v5096
    %v5109 = vadd.f32 %v4741, %v5097
    %v5110 = vadd.f32 %v4742, %v5098
    %v5111 = vadd.f32 %v4743, %v5099
    %v5112 = vadd.f32 %v4744, %v5100
    %v5113 = vadd.f32 %v4745, %v5101
    %v5114 = vadd.f32 %v4746, %v5102
    %v5115 = vadd.f32 %v4747, %v5103
    %v5116 = vadd.f32 %v4748, %v5104
    %v5117 = vadd.f32 %v4749, %v5105
    %v5118 = vadd.f32 %v4750, %v5106
    %v5119 = vadd.f32 %v4751, %v5107
    %v5120 = vstv %s87
    %v5121 = vmul.f32 %v5120, %v4408
    %v5122 = vmul.f32 %v5120, %v4409
    %v5123 = vmul.f32 %v5120, %v4410
    %v5124 = vmul.f32 %v5120, %v4411
    %v5125 = vmul.f32 %v5120, %v4412
    %v5126 = vmul.f32 %v5120, %v4413
    %v5127 = vmul.f32 %v5120, %v4414
    %v5128 = vmul.f32 %v5120, %v4415
    %v5129 = vmul.f32 %v5120, %v4416
    %v5130 = vmul.f32 %v5120, %v4417
    %v5131 = vmul.f32 %v5120, %v4418
    %v5132 = vmul.f32 %v5120, %v4419
    %s5133 = smul.f32 %s88, 2.0
    %v5134 = vstv %s5133
    %v5135 = vmul.f32 %v5134, %v5108
    %v5136 = vmul.f32 %v5134, %v5109
    %v5137 = vmul.f32 %v5134, %v5110
    %v5138 = vmul.f32 %v5134, %v5111
    %v5139 = vmul.f32 %v5134, %v5112
    %v5140 = vmul.f32 %v5134, %v5113
    %v5141 = vmul.f32 %v5134, %v5114
    %v5142 = vmul.f32 %v5134, %v5115
    %v5143 = vmul.f32 %v5134, %v5116
    %v5144 = vmul.f32 %v5134, %v5117
    %v5145 = vmul.f32 %v5134, %v5118
    %v5146 = vmul.f32 %v5134, %v5119
    %v5147 = vadd.f32 %v5121, %v5135
    %v5148 = vadd.f32 %v5122, %v5136
    %v5149 = vadd.f32 %v5123, %v5137
    %v5150 = vadd.f32 %v5124, %v5138
    %v5151 = vadd.f32 %v5125, %v5139
    %v5152 = vadd.f32 %v5126, %v5140
    %v5153 = vadd.f32 %v5127, %v5141
    %v5154 = vadd.f32 %v5128, %v5142
    %v5155 = vadd.f32 %v5129, %v5143
    %v5156 = vadd.f32 %v5130, %v5144
    %v5157 = vadd.f32 %v5131, %v5145
    %v5158 = vadd.f32 %v5132, %v5146
    %v5159 = vadd.f32 %v5147, %v5148
    %v5160 = vadd.f32 %v5159, %v5149
    %v5161 = vadd.f32 %v5160, %v5150
    %v5162 = vadd.f32 %v5161, %v5151
    %v5163 = vadd.f32 %v5162, %v5152
    %v5164 = vadd.f32 %v5163, %v5153
    %v5165 = vadd.f32 %v5164, %v5154
    %v5166 = vadd.f32 %v5165, %v5155
    %v5167 = vadd.f32 %v5166, %v5156
    %v5168 = vadd.f32 %v5167, %v5157
    %v5169 = vadd.f32 %v5168, %v5158
    %5170 = vadd.xlane.f32.xlu0 %v5169
    %v5171 = vpop.xlane.xlu0 %5170
    %v5172 = vrot.slane %v5171, 4
    %v5173 = vadd.f32 %v5171, %v5172
    %v5174 = vrot.slane %v5173, 2
    %v5175 = vadd.f32 %v5173, %v5174
    %v5176 = vrot.slane %v5175, 1
    %v5177 = vadd.f32 %v5175, %v5176
    %s5178 = vtos %v5177
    %s5179 = smul.f32 %s5178, 8.138021e-05
    %s5180 = scalar_lea.smem [#allocation15], 0
    %5181 = sst [smem:[%s5180]] %s5179
    %v5182 = vld [vmem:[#allocation10] sm:$0xff]
    %v5183 = vld [vmem:[#allocation10 + $0x8] sm:$0xff]
    %v5184 = vld [vmem:[#allocation10 + $0x10] sm:$0xff]
    %v5185 = vld [vmem:[#allocation10 + $0x18] sm:$0xff]
    %v5186 = vld [vmem:[#allocation10 + $0x20] sm:$0xff]
    %v5187 = vld [vmem:[#allocation10 + $0x28] sm:$0xff]
    %v5188 = vld [vmem:[#allocation10 + $0x30] sm:$0xff]
    %v5189 = vld [vmem:[#allocation10 + $0x38] sm:$0xff]
    %v5190 = vld [vmem:[#allocation10 + $0x40] sm:$0xff]
    %v5191 = vld [vmem:[#allocation10 + $0x48] sm:$0xff]
    %v5192 = vld [vmem:[#allocation10 + $0x50] sm:$0xff]
    %v5193 = vld [vmem:[#allocation10 + $0x58] sm:$0xff]
    %s5194 = ssub.f32 1.0, %s89
    %v5195 = vstv %s89
    %v5196 = vmul.f32 %v5195, %v3928
    %v5197 = vmul.f32 %v5195, %v3929
    %v5198 = vmul.f32 %v5195, %v3930
    %v5199 = vmul.f32 %v5195, %v3931
    %v5200 = vmul.f32 %v5195, %v3932
    %v5201 = vmul.f32 %v5195, %v3933
    %v5202 = vmul.f32 %v5195, %v3934
    %v5203 = vmul.f32 %v5195, %v3935
    %v5204 = vmul.f32 %v5195, %v3936
    %v5205 = vmul.f32 %v5195, %v3937
    %v5206 = vmul.f32 %v5195, %v3938
    %v5207 = vmul.f32 %v5195, %v3939
    %v5208 = vstv %s5194
    %v5209 = vadd.f32 %v5208, %v5196
    %v5210 = vadd.f32 %v5208, %v5197
    %v5211 = vadd.f32 %v5208, %v5198
    %v5212 = vadd.f32 %v5208, %v5199
    %v5213 = vadd.f32 %v5208, %v5200
    %v5214 = vadd.f32 %v5208, %v5201
    %v5215 = vadd.f32 %v5208, %v5202
    %v5216 = vadd.f32 %v5208, %v5203
    %v5217 = vadd.f32 %v5208, %v5204
    %v5218 = vadd.f32 %v5208, %v5205
    %v5219 = vadd.f32 %v5208, %v5206
    %v5220 = vadd.f32 %v5208, %v5207
    %v5221 = vmul.f32 %v5182, %v5209
    %v5222 = vmul.f32 %v5183, %v5210
    %v5223 = vmul.f32 %v5184, %v5211
    %v5224 = vmul.f32 %v5185, %v5212
    %v5225 = vmul.f32 %v5186, %v5213
    %v5226 = vmul.f32 %v5187, %v5214
    %v5227 = vmul.f32 %v5188, %v5215
    %v5228 = vmul.f32 %v5189, %v5216
    %v5229 = vmul.f32 %v5190, %v5217
    %v5230 = vmul.f32 %v5191, %v5218
    %v5231 = vmul.f32 %v5192, %v5219
    %v5232 = vmul.f32 %v5193, %v5220
    %v5233 = vmul.f32 %v5195, %v3952
    %v5234 = vmul.f32 %v5195, %v3953
    %v5235 = vmul.f32 %v5195, %v3954
    %v5236 = vmul.f32 %v5195, %v3955
    %v5237 = vmul.f32 %v5195, %v3956
    %v5238 = vmul.f32 %v5195, %v3957
    %v5239 = vmul.f32 %v5195, %v3958
    %v5240 = vmul.f32 %v5195, %v3959
    %v5241 = vmul.f32 %v5195, %v3960
    %v5242 = vmul.f32 %v5195, %v3961
    %v5243 = vmul.f32 %v5195, %v3962
    %v5244 = vmul.f32 %v5195, %v3963
    %v5245 = vadd.f32 %v5221, %v5233
    %v5246 = vadd.f32 %v5222, %v5234
    %v5247 = vadd.f32 %v5223, %v5235
    %v5248 = vadd.f32 %v5224, %v5236
    %v5249 = vadd.f32 %v5225, %v5237
    %v5250 = vadd.f32 %v5226, %v5238
    %v5251 = vadd.f32 %v5227, %v5239
    %v5252 = vadd.f32 %v5228, %v5240
    %v5253 = vadd.f32 %v5229, %v5241
    %v5254 = vadd.f32 %v5230, %v5242
    %v5255 = vadd.f32 %v5231, %v5243
    %v5256 = vadd.f32 %v5232, %v5244
    %v5257 = vmul.f32 %v5245, 255.0
    %v5258 = vmul.f32 %v5246, 255.0
    %v5259 = vmul.f32 %v5247, 255.0
    %v5260 = vmul.f32 %v5248, 255.0
    %v5261 = vmul.f32 %v5249, 255.0
    %v5262 = vmul.f32 %v5250, 255.0
    %v5263 = vmul.f32 %v5251, 255.0
    %v5264 = vmul.f32 %v5252, 255.0
    %v5265 = vmul.f32 %v5253, 255.0
    %v5266 = vmul.f32 %v5254, 255.0
    %v5267 = vmul.f32 %v5255, 255.0
    %v5268 = vmul.f32 %v5256, 255.0
    %v5269 = vmax.f32 %v5257, 0.0
    %v5270 = vmax.f32 %v5258, 0.0
    %v5271 = vmax.f32 %v5259, 0.0
    %v5272 = vmax.f32 %v5260, 0.0
    %v5273 = vmin.f32 %v5269, 255.0
    %v5274 = vmin.f32 %v5270, 255.0
    %v5275 = vmin.f32 %v5271, 255.0
    %v5276 = vmin.f32 %v5272, 255.0
    %5277 = vst [vmem:[#allocation14] sm:$0xff] %v5273
    %5278 = vst [vmem:[#allocation14 + $0x8] sm:$0xff] %v5274
    %5279 = vst [vmem:[#allocation14 + $0x10] sm:$0xff] %v5275
    %5280 = vst [vmem:[#allocation14 + $0x18] sm:$0xff] %v5276
    %v5281 = vmax.f32 %v5261, 42.0
    %v5282 = vmax.f32 %v5262, 42.0
    %v5283 = vmax.f32 %v5263, 42.0
    %v5284 = vmax.f32 %v5264, 42.0
    %v5285 = vmin.f32 %v5281, 226.0
    %v5286 = vmin.f32 %v5282, 226.0
    %v5287 = vmin.f32 %v5283, 226.0
    %v5288 = vmin.f32 %v5284, 226.0
    %s5289 = scalar_lea.vmem [#allocation14], 32
    %5290 = vst [vmem:[%s5289] sm:$0xff] %v5285
    %5291 = vst [vmem:[%s5289 + $0x8] sm:$0xff] %v5286
    %5292 = vst [vmem:[%s5289 + $0x10] sm:$0xff] %v5287
    %5293 = vst [vmem:[%s5289 + $0x18] sm:$0xff] %v5288
    %v5294 = vmax.f32 %v5265, 20.0
    %v5295 = vmax.f32 %v5266, 20.0
    %v5296 = vmax.f32 %v5267, 20.0
    %v5297 = vmax.f32 %v5268, 20.0
    %v5298 = vmin.f32 %v5294, 223.0
    %v5299 = vmin.f32 %v5295, 223.0
    %v5300 = vmin.f32 %v5296, 223.0
    %v5301 = vmin.f32 %v5297, 223.0
    %s5302 = scalar_lea.vmem [#allocation14], 64
    %5303 = vst [vmem:[%s5302] sm:$0xff] %v5298
    %5304 = vst [vmem:[%s5302 + $0x8] sm:$0xff] %v5299
    %5305 = vst [vmem:[%s5302 + $0x10] sm:$0xff] %v5300
    %5306 = vst [vmem:[%s5302 + $0x18] sm:$0xff] %v5301
    // Predicated region
    $region38: #{tpu_custom_call.1} parent=1 // pred_check
      _
    $region39: #{tpu_custom_call.1} parent=1 // pred_check_branch
      %5308 = sbr.rel (0) target = $region41
    $region40: #{tpu_custom_call.1} parent=1 // pred_region
      %5310 = vsyncadd [#allocation4], 0
      %s5311 = sshll.u32 [#allocation11], 4
      %s5312 = int_to_ptr.vmem [resolvable:$true] %s5311
      %s5313 = sshll.u32 %s5, 4
      %s5314 = int_to_ptr.hbm [resolvable:$true] %s5313
      %5319 = dma.vmem_to_hbm [thread:$0]  %s5312, 1536, %s5314, [#allocation4], 128, 128, 8
    $region41: #{tpu_custom_call.1} parent=1 // pred_fallthru
      _
    // Predicated region
    $region42: #{tpu_custom_call.1} parent=1 // pred_check
      _
    $region43: #{tpu_custom_call.1} parent=1 // pred_check_branch
      %5321 = sbr.rel (0) target = $region45
    $region44: #{tpu_custom_call.1} parent=1 // pred_region
      %5323 = vsyncadd [#allocation13], 0
      %s5324 = sshll.u32 [#allocation12], 4
      %s5325 = int_to_ptr.vmem [resolvable:$true] %s5324
      %s5326 = sshll.u32 %s6, 4
      %s5327 = int_to_ptr.hbm [resolvable:$true] %s5326
      %5332 = dma.vmem_to_hbm [thread:$0]  %s5325, 1536, %s5327, [#allocation13], 128, 128, 8
    $region45: #{tpu_custom_call.1} parent=1 // pred_fallthru
      _
    // Predicated region
    $region46: #{tpu_custom_call.1} parent=1 // pred_check
      _
    $region47: #{tpu_custom_call.1} parent=1 // pred_check_branch
      %5334 = sbr.rel (0) target = $region49
    $region48: #{tpu_custom_call.1} parent=1 // pred_region
      %5336 = vsyncadd [#allocation13], 0
      %s5337 = sshll.u32 [#allocation14], 4
      %s5338 = int_to_ptr.vmem [resolvable:$true] %s5337
      %s5339 = sshll.u32 %s7, 4
      %s5340 = int_to_ptr.hbm [resolvable:$true] %s5339
      %5345 = dma.vmem_to_hbm [thread:$0]  %s5338, 1536, %s5340, [#allocation13], 128, 128, 8
    $region49: #{tpu_custom_call.1} parent=1 // pred_fallthru
      _
    // Predicated region
    $region50: #{tpu_custom_call.1} parent=1 // pred_check
      _
    $region51: #{tpu_custom_call.1} parent=1 // pred_check_branch
      %5347 = sbr.rel (0) target = $region53
    $region52: #{tpu_custom_call.1} parent=1 // pred_region
      %5349 = vsyncadd [#allocation6], 0
      %s5351 = sshll.u32 %s8, 4
      %s5352 = int_to_ptr.hbm [resolvable:$true] %s5351
      %5354 = dma.smem_to_hbm [#allocation15], 16, %s5352, [#allocation6]
    $region53: #{tpu_custom_call.1} parent=1 // pred_fallthru
      _
    // Predicated region
    $region54: #{tpu_custom_call.1} parent=1 // pred_check
      _
    $region55: #{tpu_custom_call.1} parent=1 // pred_check_branch
      %5356 = sbr.rel (0) target = $region57
    $region56: #{tpu_custom_call.1} parent=1 // pred_region
      %5358 = dma.done [#allocation4], 1536
    $region57: #{tpu_custom_call.1} parent=1 // pred_fallthru
      _
    // Predicated region
    $region58: #{tpu_custom_call.1} parent=1 // pred_check
      _
    $region59: #{tpu_custom_call.1} parent=1 // pred_check_branch
      %5360 = sbr.rel (0) target = $region61
    $region60: #{tpu_custom_call.1} parent=1 // pred_region
      %5362 = dma.done [#allocation13], 1536
    $region61: #{tpu_custom_call.1} parent=1 // pred_fallthru
      _
    // Predicated region
    $region62: #{tpu_custom_call.1} parent=1 // pred_check
      _
    $region63: #{tpu_custom_call.1} parent=1 // pred_check_branch
      %5364 = sbr.rel (0) target = $region65
    $region64: #{tpu_custom_call.1} parent=1 // pred_region
      %5366 = dma.done [#allocation13], 1536
    $region65: #{tpu_custom_call.1} parent=1 // pred_fallthru
      _
    // Predicated region
    $region66: #{tpu_custom_call.1} parent=1 // pred_check
      _
    $region67: #{tpu_custom_call.1} parent=1 // pred_check_branch
      %5368 = sbr.rel (0) target = $region69
    $region68: #{tpu_custom_call.1} parent=1 // pred_region
      %5370 = dma.done [#allocation6], 16
    $region69: #{tpu_custom_call.1} parent=1 // pred_fallthru
      _
    %5371 = sfence
    %5372 = vsyncpa [#allocation3], 1
    %5373 = vsyncpa [#allocation9], 1
    %5374 = vsyncpa [#allocation4], 1
    %5375 = vsyncpa [#allocation13], 1
    %5376 = vsyncpa [#allocation5], 1
    %5377 = vsyncpa [#allocation6], 1

</llo_original>
